<compile_context>
chip_gen: v6e
topology: v6e:2x2x1
jax: 0.10.0
libtpu: 0.0.40
codegen_flags: <defaults>
</compile_context>

<pallas_src>
import math
from functools import partial

import jax
import jax.numpy as jnp
from jax.experimental import pallas as pl
from jax.experimental.pallas import tpu as pltpu


def _round_up(v, m):
    return (v + m - 1) // m * m


def _prev_divisor(b, d):
    d -= 1
    while d > 1 and b % d:
        d -= 1
    return max(d, 1)


_SQRT_2_OVER_PI = 0.7978845608028654


def _gelu(x):
    # tanh-approximation GELU: single EUP tanh, short VALU polynomial.
    return 0.5 * x * (1.0 + jnp.tanh(_SQRT_2_OVER_PI * (x + 0.044715 * x * x * x)))


def _vmem_capacity_bytes():
    try:
        fn = getattr(pltpu, "get_tpu_info", None)
        if fn is not None:
            info = fn()
            for name in ("vmem_capacity_bytes", "vmem_bytes", "vmem_size_bytes"):
                v = getattr(info, name, None)
                if v:
                    return int(v)
    except Exception:
        pass
    return 64 << 20  # conservative (v7x-sized) fallback


def mlp_kernel(H, W, c_real,
               x_ref, w1_ref, b1_ref, wdw_ref, bdw_ref, g_ref, bt_ref,
               w2_ref, b2_ref, o_ref, pad_ref):
    Bt, N, Cin = x_ref.shape
    Chidp = w1_ref.shape[1]
    Coutp = w2_ref.shape[1]
    Wp = pad_ref.shape[2]

    # ---- fc1 (bf16 MXU matmul, f32 accumulate) + GELU -----------------------
    x2 = x_ref[...].reshape(Bt * N, Cin)                       # already bf16
    h = jnp.dot(x2, w1_ref[...], preferred_element_type=jnp.float32)
    h = _gelu(h + b1_ref[...])                                 # (Bt*N, Chidp) f32

    # ---- depthwise 3x3 conv via a zero-bordered (H+2, Wp) bf16 scratch ------
    # Image row r, column c lives at pad_ref[:, r+1, c+1, :].  The zero border
    # (rows 0 / H+1, column 0, columns W+1..Wp-1) provides both the row and the
    # column out-of-bounds zeros, so the 9 taps need no masks at all.
    zdt = pad_ref.dtype
    pad_ref[:, 0:1, :, :] = jnp.zeros((Bt, 1, Wp, Chidp), zdt)
    pad_ref[:, H + 1:H + 2, :, :] = jnp.zeros((Bt, 1, Wp, Chidp), zdt)
    pad_ref[:, :, 0:1, :] = jnp.zeros((Bt, H + 2, 1, Chidp), zdt)
    pad_ref[:, :, W + 1:Wp, :] = jnp.zeros((Bt, H + 2, Wp - W - 1, Chidp), zdt)
    pad_ref[:, 1:1 + H, 1:1 + W, :] = h.reshape(Bt, H, W, Chidp).astype(zdt)

    acc = jnp.broadcast_to(bdw_ref[...].reshape(1, 1, 1, Chidp), (Bt, H, W, Chidp))
    for k in range(9):
        ky, kx = k // 3, k % 3
        tap = pad_ref[:, ky:ky + H, kx:kx + W, :].astype(jnp.float32)
        acc = acc + wdw_ref[k, :].reshape(1, 1, 1, Chidp) * tap

    # ---- LayerNorm over the *real* Chid channels + GELU ----------------------
    # acc's padded lanes are exactly zero (wdw / bdw pad lanes are zero), so a
    # plain lane-sum divided by c_real gives the real mean.  After centering,
    # the pad lanes would become -mu, so they are zeroed with one select (only
    # emitted when Chid is actually padded) before the variance sum.
    inv_c = 1.0 / c_real
    mu = jnp.sum(acc, axis=-1, keepdims=True) * inv_c
    xc = acc - mu
    if Chidp != c_real:
        lane = jax.lax.broadcasted_iota(jnp.int32, (1, 1, 1, Chidp), 3)
        xc = jnp.where(lane < c_real, xc, 0.0)
    var = jnp.sum(xc * xc, axis=-1, keepdims=True) * inv_c
    x1 = xc * jax.lax.rsqrt(var + 1e-5)
    x1 = _gelu(x1 * g_ref[...].reshape(1, 1, 1, Chidp)
               + bt_ref[...].reshape(1, 1, 1, Chidp))

    # ---- residual add (h read back from the scratch) + fc2 -------------------
    hres = pad_ref[:, 1:1 + H, 1:1 + W, :].astype(jnp.float32)
    y = (hres + x1).astype(w2_ref.dtype).reshape(Bt * N, Chidp)
    out = jnp.dot(y, w2_ref[...], preferred_element_type=jnp.float32) + b2_ref[...]
    o_ref[...] = out.reshape(Bt, N, Coutp).astype(o_ref.dtype)


def mlp_forward(x, params, H, W, *, block_b=None, matmul_dtype=jnp.bfloat16):
    B, N, Cin = x.shape
    assert N == H * W
    Chid = params["w1"].shape[1]
    Cout = params["w2"].shape[1]
    out_dtype = x.dtype

    Chidp = _round_up(Chid, 128)                    # lane-dense hidden channels
    # Only lane-pad the output when Cout is at least one full vreg of lanes;
    # otherwise keep the true width (full-dim block) and skip the slice pass.
    Coutp = _round_up(Cout, 128) if Cout >= 128 else Cout
    Wp = _round_up(W + 2, 8)                        # padded conv-row stride

    # ---- weight prep ---------------------------------------------------------
    # INVARIANT: all channel-padded lanes below are exactly zero.  The LayerNorm
    # mean and the conv accumulator rely on wdw/bdw pad lanes being zero; fc2
    # relies on w2's padded rows being zero.
    def pad_last(a, target, dtype=jnp.float32):
        a = a.reshape((-1, a.shape[-1])) if a.ndim == 1 else a
        p = target - a.shape[-1]
        if p:
            a = jnp.pad(a, [(0, 0)] * (a.ndim - 1) + [(0, p)])
        return a.astype(dtype)

    # In production these would be pre-padded / pre-cast once, not per call.
    w1 = pad_last(params["w1"], Chidp, matmul_dtype)            # (Cin, Chidp) bf16
    b1 = pad_last(params["b1"].reshape(1, Chid), Chidp)         # (1, Chidp) f32
    wdw = pad_last(params["wdw"], Chidp)                        # (9, Chidp)  f32
    bdw = pad_last(params["bdw"].reshape(1, Chid), Chidp)
    gamma = pad_last(params["gamma"].reshape(1, Chid), Chidp)
    beta = pad_last(params["beta"].reshape(1, Chid), Chidp)
    w2 = jnp.pad(params["w2"], ((0, Chidp - Chid), (0, Coutp - Cout))
                 ).astype(matmul_dtype)                          # (Chidp, Coutp) bf16
    b2 = pad_last(params["b2"].reshape(1, Cout), Coutp)          # (1, Coutp) f32

    x_in = x.astype(matmul_dtype)                                # bf16 input DMA

    # ---- block_b: target M=256 rows/MXU call, keep >=2 grid steps, fit VMEM --
    if block_b is None:
        block_b = min(B, max(1, pl.cdiv(256, N)))
        while B % block_b:
            block_b -= 1
        if B // block_b < 2 and block_b > 1:
            cand = _prev_divisor(B, block_b)
            if cand * N >= 128:
                block_b = cand
    else:
        assert B % block_b == 0

    def nbytes(shape, dt):
        return math.prod(shape) * jnp.dtype(dt).itemsize

    def est_bytes(bb):
        fixed = 2 * (nbytes((Cin, Chidp), matmul_dtype)
                     + nbytes((Chidp, Coutp), matmul_dtype)
                     + nbytes((9, Chidp), jnp.float32)
                     + 5 * nbytes((1, Chidp), jnp.float32)
                     + nbytes((1, Coutp), jnp.float32))
        per = (2 * nbytes((bb, N, Cin), matmul_dtype)            # x (double-buffered)
               + 2 * nbytes((bb, N, Coutp), out_dtype)           # out (double-buffered)
               + nbytes((bb, H + 2, Wp, Chidp), matmul_dtype)    # bf16 conv scratch
               + 4 * nbytes((bb, N, Chidp), jnp.float32))        # live f32 temps
        return fixed + per

    cap = _vmem_capacity_bytes()
    budget = int(cap * 0.85)
    while block_b > 1 and est_bytes(block_b) > budget:
        block_b = _prev_divisor(B, block_b)
    vmem_limit = int(min(max(2 * est_bytes(block_b), 32 << 20), int(cap * 0.9)))

    def const_spec(shape):
        nd = len(shape)
        return pl.BlockSpec(shape, lambda b, _nd=nd: (0,) * _nd)

    out = pl.pallas_call(
        partial(mlp_kernel, H, W, Chid),
        out_shape=jax.ShapeDtypeStruct((B, N, Coutp), out_dtype),
        grid=(B // block_b,),
        in_specs=[
            pl.BlockSpec((block_b, N, Cin), lambda b: (b, 0, 0)),   # x (bf16)
            const_spec((Cin, Chidp)),                               # fc1 weight
            const_spec((1, Chidp)),                                 # fc1 bias
            const_spec((9, Chidp)),                                 # dwconv weight (ky*3+kx, c)
            const_spec((1, Chidp)),                                 # dwconv bias
            const_spec((1, Chidp)),                                 # LN gamma
            const_spec((1, Chidp)),                                 # LN beta
            const_spec((Chidp, Coutp)),                             # fc2 weight
            const_spec((1, Coutp)),                                 # fc2 bias
        ],
        out_specs=pl.BlockSpec((block_b, N, Coutp), lambda b: (b, 0, 0)),
        scratch_shapes=[pltpu.VMEM((block_b, H + 2, Wp, Chidp), matmul_dtype)],
        compiler_params=pltpu.CompilerParams(
            dimension_semantics=("parallel",),
            vmem_limit_bytes=vmem_limit),
    )(x_in, w1, b1, wdw, bdw, gamma, beta, w2, b2)

    if Coutp != Cout:
        out = out[..., :Cout]
    return out


def mlp_reference(x, params, H, W):
    """Pure-JAX f32 reference (exact erf GELU) mirroring the PyTorch forward."""
    gelu = lambda v: jax.nn.gelu(v, approximate=False)
    h = gelu(x @ params["w1"] + params["b1"])                  # (B, N, C)
    B, N, C = h.shape
    hs = h.reshape(B, H, W, C)
    padded = jnp.pad(hs, ((0, 0), (1, 1), (1, 1), (0, 0)))
    acc = jnp.broadcast_to(params["bdw"].reshape(1, 1, 1, C), (B, H, W, C))
    for k in range(9):
        ky, kx = k // 3, k % 3
        acc = acc + padded[:, ky:ky + H, kx:kx + W, :] * params["wdw"][k]
    x1 = acc.reshape(B, N, C)
    mu = x1.mean(-1, keepdims=True)
    var = ((x1 - mu) ** 2).mean(-1, keepdims=True)
    x1 = (x1 - mu) * jax.lax.rsqrt(var + 1e-5) * params["gamma"] + params["beta"]
    x1 = gelu(x1)
    return (h + x1) @ params["w2"] + params["b2"]


if __name__ == "__main__":
    B, H, W = 4, 8, 8
    N = H * W
    Cin, Chid, Cout = 16, 32, 16   # out_features defaults to in_features

    key = jax.random.PRNGKey(0)
    ks = jax.random.split(key, 9)
    params = {
        "w1":    0.1 * jax.random.normal(ks[0], (Cin, Chid), jnp.float32),
        "b1":    0.1 * jax.random.normal(ks[1], (1, Chid), jnp.float32),
        # dwconv weight corresponds to torch (Chid,1,3,3) laid out as (ky*3+kx, c)
        "wdw":   0.1 * jax.random.normal(ks[2], (9, Chid), jnp.float32),
        "bdw":   0.1 * jax.random.normal(ks[3], (1, Chid), jnp.float32),
        "gamma": 1.0 + 0.1 * jax.random.normal(ks[4], (1, Chid), jnp.float32),
        "beta":  0.1 * jax.random.normal(ks[5], (1, Chid), jnp.float32),
        "w2":    0.1 * jax.random.normal(ks[6], (Chid, Cout), jnp.float32),
        "b2":    0.1 * jax.random.normal(ks[7], (1, Cout), jnp.float32),
    }
    x = jax.random.normal(ks[8], (B, N, Cin), jnp.float32)

    out = mlp_forward(x, params, H, W)
    jax.block_until_ready(out)
    assert out.shape == (B, N, Cout)

    ref = mlp_reference(x, params, H, W)
    # bf16 input/scratch/matmuls + tanh-approx GELU vs. exact-erf f32 reference.
    err = float(jnp.max(jnp.abs(out - ref)))
    assert err < 3e-2, f"max abs error {err}"
    print("KERNEL_OK")
</pallas_src>

<mosaic_0001>
module attributes {stable_mosaic.version = 11 : i64} {
  func.func @mlp_kernel(%arg0: i32, %arg1: memref<2x64x16xbf16, #tpu.memory_space<vmem>>, %arg2: memref<16x128xbf16, #tpu.memory_space<vmem>>, %arg3: memref<1x128xf32, #tpu.memory_space<vmem>>, %arg4: memref<9x128xf32, #tpu.memory_space<vmem>>, %arg5: memref<1x128xf32, #tpu.memory_space<vmem>>, %arg6: memref<1x128xf32, #tpu.memory_space<vmem>>, %arg7: memref<1x128xf32, #tpu.memory_space<vmem>>, %arg8: memref<128x16xbf16, #tpu.memory_space<vmem>>, %arg9: memref<1x16xf32, #tpu.memory_space<vmem>>, %arg10: memref<2x64x16xf32, #tpu.memory_space<vmem>>, %arg11: memref<2x10x16x128xbf16, #tpu.memory_space<vmem>>) attributes {dimension_semantics = [#tpu.dimension_semantics<parallel>], iteration_bounds = array<i64: 2>, scalar_prefetch = 0 : i64, scratch_operands = 1 : i64, tpu.core_type = #tpu.core_type<tc>, window_params = [{transform_indices = @transform_0, window_bounds = array<i64: 2, 64, 16>}, {pipeline_mode = #tpu.pipeline_mode<synchronous>, transform_indices = @transform_1, window_bounds = array<i64: 16, 128>}, {pipeline_mode = #tpu.pipeline_mode<synchronous>, transform_indices = @transform_2, window_bounds = array<i64: 1, 128>}, {pipeline_mode = #tpu.pipeline_mode<synchronous>, transform_indices = @transform_3, window_bounds = array<i64: 9, 128>}, {pipeline_mode = #tpu.pipeline_mode<synchronous>, transform_indices = @transform_4, window_bounds = array<i64: 1, 128>}, {pipeline_mode = #tpu.pipeline_mode<synchronous>, transform_indices = @transform_5, window_bounds = array<i64: 1, 128>}, {pipeline_mode = #tpu.pipeline_mode<synchronous>, transform_indices = @transform_6, window_bounds = array<i64: 1, 128>}, {pipeline_mode = #tpu.pipeline_mode<synchronous>, transform_indices = @transform_7, window_bounds = array<i64: 128, 16>}, {pipeline_mode = #tpu.pipeline_mode<synchronous>, transform_indices = @transform_8, window_bounds = array<i64: 1, 16>}, {transform_indices = @transform_9, window_bounds = array<i64: 2, 64, 16>}]} {
    %c0 = arith.constant 0 : index
    %c0_0 = arith.constant 0 : index
    %c0_1 = arith.constant 0 : index
    %0 = vector.load %arg1[%c0, %c0_0, %c0_1] : memref<2x64x16xbf16, #tpu.memory_space<vmem>>, vector<2x64x16xbf16>
    %1 = vector.shape_cast %0 : vector<2x64x16xbf16> to vector<128x16xbf16>
    %c0_2 = arith.constant 0 : index
    %c0_3 = arith.constant 0 : index
    %2 = vector.load %arg2[%c0_2, %c0_3] : memref<16x128xbf16, #tpu.memory_space<vmem>>, vector<16x128xbf16>
    %cst = arith.constant dense<0.000000e+00> : vector<128x128xf32>
    %3 = tpu.matmul %1, %2, %cst {dimension_numbers = #tpu.dot_dimension_numbers<[1], [0], [0], [1], [0, 0, 1, 1], [], []>} : vector<128x16xbf16>, vector<16x128xbf16>, vector<128x128xf32> -> vector<128x128xf32>
    %c0_4 = arith.constant 0 : index
    %c0_5 = arith.constant 0 : index
    %4 = vector.load %arg3[%c0_4, %c0_5] : memref<1x128xf32, #tpu.memory_space<vmem>>, vector<1x128xf32>
    %5 = vector.broadcast %4 : vector<1x128xf32> to vector<128x128xf32>
    %6 = arith.addf %3, %5 : vector<128x128xf32>
    %cst_6 = arith.constant 5.000000e-01 : f32
    %7 = vector.broadcast %cst_6 : f32 to vector<128x128xf32>
    %8 = arith.mulf %7, %6 : vector<128x128xf32>
    %cst_7 = arith.constant 4.471500e-02 : f32
    %9 = vector.broadcast %cst_7 : f32 to vector<128x128xf32>
    %10 = arith.mulf %9, %6 : vector<128x128xf32>
    %11 = arith.mulf %10, %6 : vector<128x128xf32>
    %12 = arith.mulf %11, %6 : vector<128x128xf32>
    %13 = arith.addf %6, %12 : vector<128x128xf32>
    %cst_8 = arith.constant 0.797884583 : f32
    %14 = vector.broadcast %cst_8 : f32 to vector<128x128xf32>
    %15 = arith.mulf %14, %13 : vector<128x128xf32>
    %16 = math.tanh %15 : vector<128x128xf32>
    %cst_9 = arith.constant 1.000000e+00 : f32
    %17 = vector.broadcast %cst_9 : f32 to vector<128x128xf32>
    %18 = arith.addf %17, %16 : vector<128x128xf32>
    %19 = arith.mulf %8, %18 : vector<128x128xf32>
    %cst_10 = arith.constant 0.000000e+00 : bf16
    %20 = vector.broadcast %cst_10 : bf16 to vector<2x1x16x128xbf16>
    %c0_11 = arith.constant 0 : index
    %c0_12 = arith.constant 0 : index
    %c0_13 = arith.constant 0 : index
    %c0_14 = arith.constant 0 : index
    %21 = vector.load %arg11[%c0_11, %c0_12, %c0_13, %c0_14] : memref<2x10x16x128xbf16, #tpu.memory_space<vmem>>, vector<2x1x16x128xbf16>
    tpu.vector_store %arg11[%c0_11, %c0_12, %c0_13, %c0_14], %20 {strides = array<i32>} : memref<2x10x16x128xbf16, #tpu.memory_space<vmem>>, vector<2x1x16x128xbf16>,
    %cst_15 = arith.constant 0.000000e+00 : bf16
    %22 = vector.broadcast %cst_15 : bf16 to vector<2x1x16x128xbf16>
    %c0_16 = arith.constant 0 : index
    %c9 = arith.constant 9 : index
    %c0_17 = arith.constant 0 : index
    %c0_18 = arith.constant 0 : index
    %23 = vector.load %arg11[%c0_16, %c9, %c0_17, %c0_18] : memref<2x10x16x128xbf16, #tpu.memory_space<vmem>>, vector<2x1x16x128xbf16>
    tpu.vector_store %arg11[%c0_16, %c9, %c0_17, %c0_18], %22 {strides = array<i32>} : memref<2x10x16x128xbf16, #tpu.memory_space<vmem>>, vector<2x1x16x128xbf16>,
    %cst_19 = arith.constant 0.000000e+00 : bf16
    %24 = vector.broadcast %cst_19 : bf16 to vector<2x10x1x128xbf16>
    %c0_20 = arith.constant 0 : index
    %c0_21 = arith.constant 0 : index
    %c0_22 = arith.constant 0 : index
    %c0_23 = arith.constant 0 : index
    %25 = vector.load %arg11[%c0_20, %c0_21, %c0_22, %c0_23] : memref<2x10x16x128xbf16, #tpu.memory_space<vmem>>, vector<2x10x1x128xbf16>
    tpu.vector_store %arg11[%c0_20, %c0_21, %c0_22, %c0_23], %24 {strides = array<i32>} : memref<2x10x16x128xbf16, #tpu.memory_space<vmem>>, vector<2x10x1x128xbf16>,
    %cst_24 = arith.constant 0.000000e+00 : bf16
    %26 = vector.broadcast %cst_24 : bf16 to vector<2x10x7x128xbf16>
    %c0_25 = arith.constant 0 : index
    %c0_26 = arith.constant 0 : index
    %c9_27 = arith.constant 9 : index
    %c0_28 = arith.constant 0 : index
    %27 = vector.load %arg11[%c0_25, %c0_26, %c9_27, %c0_28] : memref<2x10x16x128xbf16, #tpu.memory_space<vmem>>, vector<2x10x7x128xbf16>
    tpu.vector_store %arg11[%c0_25, %c0_26, %c9_27, %c0_28], %26 {strides = array<i32>} : memref<2x10x16x128xbf16, #tpu.memory_space<vmem>>, vector<2x10x7x128xbf16>,
    %28 = vector.shape_cast %19 : vector<128x128xf32> to vector<2x8x8x128xf32>
    %29 = arith.truncf %28 : vector<2x8x8x128xf32> to vector<2x8x8x128xbf16>
    %c0_29 = arith.constant 0 : index
    %c1 = arith.constant 1 : index
    %c1_30 = arith.constant 1 : index
    %c0_31 = arith.constant 0 : index
    %30 = vector.load %arg11[%c0_29, %c1, %c1_30, %c0_31] : memref<2x10x16x128xbf16, #tpu.memory_space<vmem>>, vector<2x8x8x128xbf16>
    tpu.vector_store %arg11[%c0_29, %c1, %c1_30, %c0_31], %29 {strides = array<i32>} : memref<2x10x16x128xbf16, #tpu.memory_space<vmem>>, vector<2x8x8x128xbf16>,
    %c0_32 = arith.constant 0 : index
    %c0_33 = arith.constant 0 : index
    %31 = vector.load %arg5[%c0_32, %c0_33] : memref<1x128xf32, #tpu.memory_space<vmem>>, vector<1x128xf32>
    %32 = vector.shape_cast %31 : vector<1x128xf32> to vector<1x1x1x128xf32>
    %33 = vector.shape_cast %32 : vector<1x1x1x128xf32> to vector<1x1x1x128xf32>
    %34 = vector.broadcast %33 : vector<1x1x1x128xf32> to vector<2x8x8x128xf32>
    %c0_34 = arith.constant 0 : index
    %c0_35 = arith.constant 0 : index
    %c0_36 = arith.constant 0 : index
    %c0_37 = arith.constant 0 : index
    %35 = vector.load %arg11[%c0_34, %c0_35, %c0_36, %c0_37] : memref<2x10x16x128xbf16, #tpu.memory_space<vmem>>, vector<2x8x8x128xbf16>
    %36 = arith.extf %35 : vector<2x8x8x128xbf16> to vector<2x8x8x128xf32>
    %c0_38 = arith.constant 0 : index
    %c0_39 = arith.constant 0 : index
    %37 = vector.load %arg4[%c0_38, %c0_39] : memref<9x128xf32, #tpu.memory_space<vmem>>, vector<1x128xf32>
    %38 = vector.shape_cast %37 : vector<1x128xf32> to vector<128xf32>
    %39 = vector.shape_cast %38 : vector<128xf32> to vector<1x1x1x128xf32>
    %40 = vector.broadcast %39 : vector<1x1x1x128xf32> to vector<2x8x8x128xf32>
    %41 = arith.mulf %40, %36 : vector<2x8x8x128xf32>
    %42 = arith.addf %34, %41 : vector<2x8x8x128xf32>
    %c0_40 = arith.constant 0 : index
    %c0_41 = arith.constant 0 : index
    %c1_42 = arith.constant 1 : index
    %c0_43 = arith.constant 0 : index
    %43 = vector.load %arg11[%c0_40, %c0_41, %c1_42, %c0_43] : memref<2x10x16x128xbf16, #tpu.memory_space<vmem>>, vector<2x8x8x128xbf16>
    %44 = arith.extf %43 : vector<2x8x8x128xbf16> to vector<2x8x8x128xf32>
    %c1_44 = arith.constant 1 : index
    %c0_45 = arith.constant 0 : index
    %45 = vector.load %arg4[%c1_44, %c0_45] : memref<9x128xf32, #tpu.memory_space<vmem>>, vector<1x128xf32>
    %46 = vector.shape_cast %45 : vector<1x128xf32> to vector<128xf32>
    %47 = vector.shape_cast %46 : vector<128xf32> to vector<1x1x1x128xf32>
    %48 = vector.broadcast %47 : vector<1x1x1x128xf32> to vector<2x8x8x128xf32>
    %49 = arith.mulf %48, %44 : vector<2x8x8x128xf32>
    %50 = arith.addf %42, %49 : vector<2x8x8x128xf32>
    %c0_46 = arith.constant 0 : index
    %c0_47 = arith.constant 0 : index
    %c2 = arith.constant 2 : index
    %c0_48 = arith.constant 0 : index
    %51 = vector.load %arg11[%c0_46, %c0_47, %c2, %c0_48] : memref<2x10x16x128xbf16, #tpu.memory_space<vmem>>, vector<2x8x8x128xbf16>
    %52 = arith.extf %51 : vector<2x8x8x128xbf16> to vector<2x8x8x128xf32>
    %c2_49 = arith.constant 2 : index
    %c0_50 = arith.constant 0 : index
    %53 = vector.load %arg4[%c2_49, %c0_50] : memref<9x128xf32, #tpu.memory_space<vmem>>, vector<1x128xf32>
    %54 = vector.shape_cast %53 : vector<1x128xf32> to vector<128xf32>
    %55 = vector.shape_cast %54 : vector<128xf32> to vector<1x1x1x128xf32>
    %56 = vector.broadcast %55 : vector<1x1x1x128xf32> to vector<2x8x8x128xf32>
    %57 = arith.mulf %56, %52 : vector<2x8x8x128xf32>
    %58 = arith.addf %50, %57 : vector<2x8x8x128xf32>
    %c0_51 = arith.constant 0 : index
    %c1_52 = arith.constant 1 : index
    %c0_53 = arith.constant 0 : index
    %c0_54 = arith.constant 0 : index
    %59 = vector.load %arg11[%c0_51, %c1_52, %c0_53, %c0_54] : memref<2x10x16x128xbf16, #tpu.memory_space<vmem>>, vector<2x8x8x128xbf16>
    %60 = arith.extf %59 : vector<2x8x8x128xbf16> to vector<2x8x8x128xf32>
    %c3 = arith.constant 3 : index
    %c0_55 = arith.constant 0 : index
    %61 = vector.load %arg4[%c3, %c0_55] : memref<9x128xf32, #tpu.memory_space<vmem>>, vector<1x128xf32>
    %62 = vector.shape_cast %61 : vector<1x128xf32> to vector<128xf32>
    %63 = vector.shape_cast %62 : vector<128xf32> to vector<1x1x1x128xf32>
    %64 = vector.broadcast %63 : vector<1x1x1x128xf32> to vector<2x8x8x128xf32>
    %65 = arith.mulf %64, %60 : vector<2x8x8x128xf32>
    %66 = arith.addf %58, %65 : vector<2x8x8x128xf32>
    %c0_56 = arith.constant 0 : index
    %c1_57 = arith.constant 1 : index
    %c1_58 = arith.constant 1 : index
    %c0_59 = arith.constant 0 : index
    %67 = vector.load %arg11[%c0_56, %c1_57, %c1_58, %c0_59] : memref<2x10x16x128xbf16, #tpu.memory_space<vmem>>, vector<2x8x8x128xbf16>
    %68 = arith.extf %67 : vector<2x8x8x128xbf16> to vector<2x8x8x128xf32>
    %c4 = arith.constant 4 : index
    %c0_60 = arith.constant 0 : index
    %69 = vector.load %arg4[%c4, %c0_60] : memref<9x128xf32, #tpu.memory_space<vmem>>, vector<1x128xf32>
    %70 = vector.shape_cast %69 : vector<1x128xf32> to vector<128xf32>
    %71 = vector.shape_cast %70 : vector<128xf32> to vector<1x1x1x128xf32>
    %72 = vector.broadcast %71 : vector<1x1x1x128xf32> to vector<2x8x8x128xf32>
    %73 = arith.mulf %72, %68 : vector<2x8x8x128xf32>
    %74 = arith.addf %66, %73 : vector<2x8x8x128xf32>
    %c0_61 = arith.constant 0 : index
    %c1_62 = arith.constant 1 : index
    %c2_63 = arith.constant 2 : index
    %c0_64 = arith.constant 0 : index
    %75 = vector.load %arg11[%c0_61, %c1_62, %c2_63, %c0_64] : memref<2x10x16x128xbf16, #tpu.memory_space<vmem>>, vector<2x8x8x128xbf16>
    %76 = arith.extf %75 : vector<2x8x8x128xbf16> to vector<2x8x8x128xf32>
    %c5 = arith.constant 5 : index
    %c0_65 = arith.constant 0 : index
    %77 = vector.load %arg4[%c5, %c0_65] : memref<9x128xf32, #tpu.memory_space<vmem>>, vector<1x128xf32>
    %78 = vector.shape_cast %77 : vector<1x128xf32> to vector<128xf32>
    %79 = vector.shape_cast %78 : vector<128xf32> to vector<1x1x1x128xf32>
    %80 = vector.broadcast %79 : vector<1x1x1x128xf32> to vector<2x8x8x128xf32>
    %81 = arith.mulf %80, %76 : vector<2x8x8x128xf32>
    %82 = arith.addf %74, %81 : vector<2x8x8x128xf32>
    %c0_66 = arith.constant 0 : index
    %c2_67 = arith.constant 2 : index
    %c0_68 = arith.constant 0 : index
    %c0_69 = arith.constant 0 : index
    %83 = vector.load %arg11[%c0_66, %c2_67, %c0_68, %c0_69] : memref<2x10x16x128xbf16, #tpu.memory_space<vmem>>, vector<2x8x8x128xbf16>
    %84 = arith.extf %83 : vector<2x8x8x128xbf16> to vector<2x8x8x128xf32>
    %c6 = arith.constant 6 : index
    %c0_70 = arith.constant 0 : index
    %85 = vector.load %arg4[%c6, %c0_70] : memref<9x128xf32, #tpu.memory_space<vmem>>, vector<1x128xf32>
    %86 = vector.shape_cast %85 : vector<1x128xf32> to vector<128xf32>
    %87 = vector.shape_cast %86 : vector<128xf32> to vector<1x1x1x128xf32>
    %88 = vector.broadcast %87 : vector<1x1x1x128xf32> to vector<2x8x8x128xf32>
    %89 = arith.mulf %88, %84 : vector<2x8x8x128xf32>
    %90 = arith.addf %82, %89 : vector<2x8x8x128xf32>
    %c0_71 = arith.constant 0 : index
    %c2_72 = arith.constant 2 : index
    %c1_73 = arith.constant 1 : index
    %c0_74 = arith.constant 0 : index
    %91 = vector.load %arg11[%c0_71, %c2_72, %c1_73, %c0_74] : memref<2x10x16x128xbf16, #tpu.memory_space<vmem>>, vector<2x8x8x128xbf16>
    %92 = arith.extf %91 : vector<2x8x8x128xbf16> to vector<2x8x8x128xf32>
    %c7 = arith.constant 7 : index
    %c0_75 = arith.constant 0 : index
    %93 = vector.load %arg4[%c7, %c0_75] : memref<9x128xf32, #tpu.memory_space<vmem>>, vector<1x128xf32>
    %94 = vector.shape_cast %93 : vector<1x128xf32> to vector<128xf32>
    %95 = vector.shape_cast %94 : vector<128xf32> to vector<1x1x1x128xf32>
    %96 = vector.broadcast %95 : vector<1x1x1x128xf32> to vector<2x8x8x128xf32>
    %97 = arith.mulf %96, %92 : vector<2x8x8x128xf32>
    %98 = arith.addf %90, %97 : vector<2x8x8x128xf32>
    %c0_76 = arith.constant 0 : index
    %c2_77 = arith.constant 2 : index
    %c2_78 = arith.constant 2 : index
    %c0_79 = arith.constant 0 : index
    %99 = vector.load %arg11[%c0_76, %c2_77, %c2_78, %c0_79] : memref<2x10x16x128xbf16, #tpu.memory_space<vmem>>, vector<2x8x8x128xbf16>
    %100 = arith.extf %99 : vector<2x8x8x128xbf16> to vector<2x8x8x128xf32>
    %c8 = arith.constant 8 : index
    %c0_80 = arith.constant 0 : index
    %101 = vector.load %arg4[%c8, %c0_80] : memref<9x128xf32, #tpu.memory_space<vmem>>, vector<1x128xf32>
    %102 = vector.shape_cast %101 : vector<1x128xf32> to vector<128xf32>
    %103 = vector.shape_cast %102 : vector<128xf32> to vector<1x1x1x128xf32>
    %104 = vector.broadcast %103 : vector<1x1x1x128xf32> to vector<2x8x8x128xf32>
    %105 = arith.mulf %104, %100 : vector<2x8x8x128xf32>
    %106 = arith.addf %98, %105 : vector<2x8x8x128xf32>
    %cst_81 = arith.constant dense<0.000000e+00> : vector<2x8x8xf32>
    %107 = vector.multi_reduction <add>, %106, %cst_81 [3] : vector<2x8x8x128xf32> to vector<2x8x8xf32>
    %108 = vector.shape_cast %107 : vector<2x8x8xf32> to vector<2x8x8x1xf32>
    %cst_82 = arith.constant 3.125000e-02 : f32
    %109 = vector.broadcast %cst_82 : f32 to vector<2x8x8x1xf32>
    %110 = arith.mulf %108, %109 : vector<2x8x8x1xf32>
    %111 = vector.broadcast %110 : vector<2x8x8x1xf32> to vector<2x8x8x128xf32>
    %112 = arith.subf %106, %111 : vector<2x8x8x128xf32>
    %113 = tpu.iota {dimensions = array<i32: 3>} : vector<1x1x1x128xi32>
    %c32_i32 = arith.constant 32 : i32
    %114 = vector.broadcast %c32_i32 : i32 to vector<1x1x1x128xi32>
    %115 = arith.cmpi slt, %113, %114 : vector<1x1x1x128xi32>
    %cst_83 = arith.constant 0.000000e+00 : f32
    %116 = vector.shape_cast %115 : vector<1x1x1x128xi1> to vector<1x1x1x128xi1>
    %117 = vector.broadcast %116 : vector<1x1x1x128xi1> to vector<2x8x8x128xi1>
    %118 = vector.broadcast %cst_83 : f32 to vector<2x8x8x128xf32>
    %119 = arith.select %117, %112, %118 : vector<2x8x8x128xi1>, vector<2x8x8x128xf32>
    %120 = arith.mulf %119, %119 : vector<2x8x8x128xf32>
    %cst_84 = arith.constant dense<0.000000e+00> : vector<2x8x8xf32>
    %121 = vector.multi_reduction <add>, %120, %cst_84 [3] : vector<2x8x8x128xf32> to vector<2x8x8xf32>
    %122 = vector.shape_cast %121 : vector<2x8x8xf32> to vector<2x8x8x1xf32>
    %cst_85 = arith.constant 3.125000e-02 : f32
    %123 = vector.broadcast %cst_85 : f32 to vector<2x8x8x1xf32>
    %124 = arith.mulf %122, %123 : vector<2x8x8x1xf32>
    %cst_86 = arith.constant 9.99999974E-6 : f32
    %125 = vector.broadcast %cst_86 : f32 to vector<2x8x8x1xf32>
    %126 = arith.addf %124, %125 : vector<2x8x8x1xf32>
    %127 = math.rsqrt %126 : vector<2x8x8x1xf32>
    %128 = vector.broadcast %127 : vector<2x8x8x1xf32> to vector<2x8x8x128xf32>
    %129 = arith.mulf %119, %128 : vector<2x8x8x128xf32>
    %c0_87 = arith.constant 0 : index
    %c0_88 = arith.constant 0 : index
    %130 = vector.load %arg6[%c0_87, %c0_88] : memref<1x128xf32, #tpu.memory_space<vmem>>, vector<1x128xf32>
    %131 = vector.shape_cast %130 : vector<1x128xf32> to vector<1x1x1x128xf32>
    %132 = vector.broadcast %131 : vector<1x1x1x128xf32> to vector<2x8x8x128xf32>
    %133 = arith.mulf %129, %132 : vector<2x8x8x128xf32>
    %c0_89 = arith.constant 0 : index
    %c0_90 = arith.constant 0 : index
    %134 = vector.load %arg7[%c0_89, %c0_90] : memref<1x128xf32, #tpu.memory_space<vmem>>, vector<1x128xf32>
    %135 = vector.shape_cast %134 : vector<1x128xf32> to vector<1x1x1x128xf32>
    %136 = vector.broadcast %135 : vector<1x1x1x128xf32> to vector<2x8x8x128xf32>
    %137 = arith.addf %133, %136 : vector<2x8x8x128xf32>
    %cst_91 = arith.constant 5.000000e-01 : f32
    %138 = vector.broadcast %cst_91 : f32 to vector<2x8x8x128xf32>
    %139 = arith.mulf %138, %137 : vector<2x8x8x128xf32>
    %cst_92 = arith.constant 4.471500e-02 : f32
    %140 = vector.broadcast %cst_92 : f32 to vector<2x8x8x128xf32>
    %141 = arith.mulf %140, %137 : vector<2x8x8x128xf32>
    %142 = arith.mulf %141, %137 : vector<2x8x8x128xf32>
    %143 = arith.mulf %142, %137 : vector<2x8x8x128xf32>
    %144 = arith.addf %137, %143 : vector<2x8x8x128xf32>
    %cst_93 = arith.constant 0.797884583 : f32
    %145 = vector.broadcast %cst_93 : f32 to vector<2x8x8x128xf32>
    %146 = arith.mulf %145, %144 : vector<2x8x8x128xf32>
    %147 = math.tanh %146 : vector<2x8x8x128xf32>
    %cst_94 = arith.constant 1.000000e+00 : f32
    %148 = vector.broadcast %cst_94 : f32 to vector<2x8x8x128xf32>
    %149 = arith.addf %148, %147 : vector<2x8x8x128xf32>
    %150 = arith.mulf %139, %149 : vector<2x8x8x128xf32>
    %c0_95 = arith.constant 0 : index
    %c1_96 = arith.constant 1 : index
    %c1_97 = arith.constant 1 : index
    %c0_98 = arith.constant 0 : index
    %151 = vector.load %arg11[%c0_95, %c1_96, %c1_97, %c0_98] : memref<2x10x16x128xbf16, #tpu.memory_space<vmem>>, vector<2x8x8x128xbf16>
    %152 = arith.extf %151 : vector<2x8x8x128xbf16> to vector<2x8x8x128xf32>
    %153 = arith.addf %152, %150 : vector<2x8x8x128xf32>
    %154 = arith.truncf %153 : vector<2x8x8x128xf32> to vector<2x8x8x128xbf16>
    %155 = vector.shape_cast %154 : vector<2x8x8x128xbf16> to vector<128x128xbf16>
    %c0_99 = arith.constant 0 : index
    %c0_100 = arith.constant 0 : index
    %156 = vector.load %arg8[%c0_99, %c0_100] : memref<128x16xbf16, #tpu.memory_space<vmem>>, vector<128x16xbf16>
    %cst_101 = arith.constant dense<0.000000e+00> : vector<128x16xf32>
    %157 = tpu.matmul %155, %156, %cst_101 {dimension_numbers = #tpu.dot_dimension_numbers<[1], [0], [0], [1], [0, 0, 1, 1], [], []>} : vector<128x128xbf16>, vector<128x16xbf16>, vector<128x16xf32> -> vector<128x16xf32>
    %c0_102 = arith.constant 0 : index
    %c0_103 = arith.constant 0 : index
    %158 = vector.load %arg9[%c0_102, %c0_103] : memref<1x16xf32, #tpu.memory_space<vmem>>, vector<1x16xf32>
    %159 = vector.broadcast %158 : vector<1x16xf32> to vector<128x16xf32>
    %160 = arith.addf %157, %159 : vector<128x16xf32>
    %161 = vector.shape_cast %160 : vector<128x16xf32> to vector<2x64x16xf32>
    %c0_104 = arith.constant 0 : index
    %c0_105 = arith.constant 0 : index
    %c0_106 = arith.constant 0 : index
    %162 = vector.load %arg10[%c0_104, %c0_105, %c0_106] : memref<2x64x16xf32, #tpu.memory_space<vmem>>, vector<2x64x16xf32>
    tpu.vector_store %arg10[%c0_104, %c0_105, %c0_106], %161 {strides = array<i32>} : memref<2x64x16xf32, #tpu.memory_space<vmem>>, vector<2x64x16xf32>,
    return
  }
  func.func @transform_0(%arg0: i32) -> (i32, i32, i32) {
    %c0_i32 = arith.constant 0 : i32
    %c0_i32_0 = arith.constant 0 : i32
    %c0_i32_1 = arith.constant 0 : i32
    return %arg0, %c0_i32, %c0_i32_0 : i32, i32, i32
  }
  func.func @transform_1(%arg0: i32) -> (i32, i32) {
    %c0_i32 = arith.constant 0 : i32
    %c0_i32_0 = arith.constant 0 : i32
    %c0_i32_1 = arith.constant 0 : i32
    return %c0_i32, %c0_i32_0 : i32, i32
  }
  func.func @transform_2(%arg0: i32) -> (i32, i32) {
    %c0_i32 = arith.constant 0 : i32
    %c0_i32_0 = arith.constant 0 : i32
    %c0_i32_1 = arith.constant 0 : i32
    return %c0_i32, %c0_i32_0 : i32, i32
  }
  func.func @transform_3(%arg0: i32) -> (i32, i32) {
    %c0_i32 = arith.constant 0 : i32
    %c0_i32_0 = arith.constant 0 : i32
    %c0_i32_1 = arith.constant 0 : i32
    return %c0_i32, %c0_i32_0 : i32, i32
  }
  func.func @transform_4(%arg0: i32) -> (i32, i32) {
    %c0_i32 = arith.constant 0 : i32
    %c0_i32_0 = arith.constant 0 : i32
    %c0_i32_1 = arith.constant 0 : i32
    return %c0_i32, %c0_i32_0 : i32, i32
  }
  func.func @transform_5(%arg0: i32) -> (i32, i32) {
    %c0_i32 = arith.constant 0 : i32
    %c0_i32_0 = arith.constant 0 : i32
    %c0_i32_1 = arith.constant 0 : i32
    return %c0_i32, %c0_i32_0 : i32, i32
  }
  func.func @transform_6(%arg0: i32) -> (i32, i32) {
    %c0_i32 = arith.constant 0 : i32
    %c0_i32_0 = arith.constant 0 : i32
    %c0_i32_1 = arith.constant 0 : i32
    return %c0_i32, %c0_i32_0 : i32, i32
  }
  func.func @transform_7(%arg0: i32) -> (i32, i32) {
    %c0_i32 = arith.constant 0 : i32
    %c0_i32_0 = arith.constant 0 : i32
    %c0_i32_1 = arith.constant 0 : i32
    return %c0_i32, %c0_i32_0 : i32, i32
  }
  func.func @transform_8(%arg0: i32) -> (i32, i32) {
    %c0_i32 = arith.constant 0 : i32
    %c0_i32_0 = arith.constant 0 : i32
    %c0_i32_1 = arith.constant 0 : i32
    return %c0_i32, %c0_i32_0 : i32, i32
  }
  func.func @transform_9(%arg0: i32) -> (i32, i32, i32) {
    %c0_i32 = arith.constant 0 : i32
    %c0_i32_0 = arith.constant 0 : i32
    %c0_i32_1 = arith.constant 0 : i32
    return %arg0, %c0_i32, %c0_i32_0 : i32, i32, i32
  }
}

</mosaic_0001>

<llo_original>
// kernel: tpu_custom_call.1
$region0: #{tpu_custom_call.1}
  #allocation0 [shape = 'u32[]', space=smem, size = 0x4, offset = 0x4, fixed_abs, tag = 'smem constant byte address 0x4 - core index']
  #allocation1 [shape = 'u32[144,128]{1,0:T(1,128)}', space=vmem, size = 0x12000, scoped, tag = 'internal scratch']
  #allocation2 [shape = 'bf16[2,10,16,128]{3,2,1,0:T(8,128)(2,1)}', space=vmem, size = 0x14000, scoped, tag = 'scratch operand']
  %s0 = inlined_call_operand.vmem [shape: bf16[4,64,16], index: 0, kind: input, shape index: {}]
  %s1 = inlined_call_operand.vmem [shape: bf16[16,128], index: 1, kind: input, shape index: {}]
  %s2 = inlined_call_operand.vmem [shape: f32[1,128], index: 2, kind: input, shape index: {}]
  %s3 = inlined_call_operand.vmem [shape: f32[9,128], index: 3, kind: input, shape index: {}]
  %s4 = inlined_call_operand.vmem [shape: f32[1,128], index: 4, kind: input, shape index: {}]
  %s5 = inlined_call_operand.vmem [shape: f32[1,128], index: 5, kind: input, shape index: {}]
  %s6 = inlined_call_operand.vmem [shape: f32[1,128], index: 6, kind: input, shape index: {}]
  %s7 = inlined_call_operand.vmem [shape: bf16[128,16], index: 7, kind: input, shape index: {}]
  %s8 = inlined_call_operand.vmem [shape: f32[1,16], index: 8, kind: input, shape index: {}]
  %s9 = inlined_call_operand.vmem [shape: f32[4,64,16], index: 9, kind: output, shape index: {}]
  %s10 = sld [smem:[#allocation0]]
  $region69: #{tpu_custom_call.1} parent=0
    _
  %s12 = ssub.s32 1, %s10
  %s13 = scalar_select 0, %s12, %s10
  loop: start=0, step=1, limit=4
  $region2: #{tpu_custom_call.1} parent=0 // loop_pre_header
    _
  $region3: #{tpu_custom_call.1} parent=0 // loop_header
    %s15 = sphi 0, %s19
    %p16 = scmp.ge.s32.totalorder %s15, 4
    %s25 = sphi 0, %s27
    %s28 = sphi 0, %s25
    %s29 = sphi 0, %s28
    %s45 = sphi 0, %s29
    %s49 = sphi 0, %s49
    %s51 = sphi 0, %s49
    %s52 = sphi 0, %s51
    %s66 = sphi 0, %s52
    %s70 = sphi 0, %s70
    %s72 = sphi 0, %s70
    %s73 = sphi 0, %s72
    %s87 = sphi 0, %s73
    %s91 = sphi 0, %s91
    %s93 = sphi 0, %s91
    %s94 = sphi 0, %s93
    %s108 = sphi 0, %s94
    %s112 = sphi 0, %s112
    %s114 = sphi 0, %s112
    %s115 = sphi 0, %s114
    %s129 = sphi 0, %s115
    %s133 = sphi 0, %s133
    %s135 = sphi 0, %s133
    %s136 = sphi 0, %s135
    %s150 = sphi 0, %s136
    %s154 = sphi 0, %s154
    %s156 = sphi 0, %s154
    %s157 = sphi 0, %s156
    %s171 = sphi 0, %s157
    %s175 = sphi 0, %s175
    %s177 = sphi 0, %s175
    %s178 = sphi 0, %s177
    %s192 = sphi 0, %s178
    %s196 = sphi 0, %s196
    %s198 = sphi 0, %s196
    %s199 = sphi 0, %s198
    %s213 = sphi 0, %s199
    %s219 = sphi 0, %s221
    %s222 = sphi 0, %s219
    %s223 = sphi 0, %s222
    %s239 = sphi 0, %s223
  $region4: #{tpu_custom_call.1} parent=0 // loop_header_branch
    %18 = sbr.rel (%p16) target = $region8
  $region5: #{tpu_custom_call.1} parent=0 // loop_body
    %s20 = ssub.s32 %s15, 1
    %s21 = ssub.s32 %s15, 2
    %s22 = sadd.s32 %s15, 1
    %s23 = ssub.s32 %s15, %s22
    %p24 = scmp.eq.s32.totalorder %s23, 0
    %s26 = sadd.s32 %s25, 1
    %s27 = scalar_select %p24, %s25, %s26
    %p30 = pneg %p24
    %p31 = scmp.eq.s32.totalorder %s15, 1
    %p32 = por %p30, %p31
    %p33 = scmp.ne.s32.totalorder %s25, %s28
    %p34 = scmp.eq.s32.totalorder %s15, 0
    %p35 = por %p33, %p34
    %p36 = scmp.ne.s32.totalorder %s25, %s28
    %p37 = scmp.eq.s32.totalorder %s20, 1
    %p38 = por %p36, %p37
    %p39 = scmp.ne.s32.totalorder %s28, %s29
    %p40 = scmp.eq.s32.totalorder %s20, 0
    %p41 = por %p39, %p40
    %p42 = scmp.ne.s32.totalorder %s28, %s29
    %p43 = scmp.eq.s32.totalorder %s21, 1
    %p44 = por %p42, %p43
    %p46 = scmp.ne.s32.totalorder %s29, %s45
    %p47 = scmp.eq.s32.totalorder %s21, 0
    %p48 = por %p46, %p47
    %s50 = sadd.s32 %s49, 1
    %p53 = scmp.eq.s32.totalorder %s15, 1
    %p54 = scmp.ne.s32.totalorder %s49, %s51
    %p55 = scmp.eq.s32.totalorder %s15, 0
    %p56 = por %p54, %p55
    %p57 = scmp.ne.s32.totalorder %s49, %s51
    %p58 = scmp.eq.s32.totalorder %s20, 1
    %p59 = por %p57, %p58
    %p60 = scmp.ne.s32.totalorder %s51, %s52
    %p61 = scmp.eq.s32.totalorder %s20, 0
    %p62 = por %p60, %p61
    %p63 = scmp.ne.s32.totalorder %s51, %s52
    %p64 = scmp.eq.s32.totalorder %s21, 1
    %p65 = por %p63, %p64
    %p67 = scmp.ne.s32.totalorder %s52, %s66
    %p68 = scmp.eq.s32.totalorder %s21, 0
    %p69 = por %p67, %p68
    %s71 = sadd.s32 %s70, 1
    %p74 = scmp.eq.s32.totalorder %s15, 1
    %p75 = scmp.ne.s32.totalorder %s70, %s72
    %p76 = scmp.eq.s32.totalorder %s15, 0
    %p77 = por %p75, %p76
    %p78 = scmp.ne.s32.totalorder %s70, %s72
    %p79 = scmp.eq.s32.totalorder %s20, 1
    %p80 = por %p78, %p79
    %p81 = scmp.ne.s32.totalorder %s72, %s73
    %p82 = scmp.eq.s32.totalorder %s20, 0
    %p83 = por %p81, %p82
    %p84 = scmp.ne.s32.totalorder %s72, %s73
    %p85 = scmp.eq.s32.totalorder %s21, 1
    %p86 = por %p84, %p85
    %p88 = scmp.ne.s32.totalorder %s73, %s87
    %p89 = scmp.eq.s32.totalorder %s21, 0
    %p90 = por %p88, %p89
    %s92 = sadd.s32 %s91, 1
    %p95 = scmp.eq.s32.totalorder %s15, 1
    %p96 = scmp.ne.s32.totalorder %s91, %s93
    %p97 = scmp.eq.s32.totalorder %s15, 0
    %p98 = por %p96, %p97
    %p99 = scmp.ne.s32.totalorder %s91, %s93
    %p100 = scmp.eq.s32.totalorder %s20, 1
    %p101 = por %p99, %p100
    %p102 = scmp.ne.s32.totalorder %s93, %s94
    %p103 = scmp.eq.s32.totalorder %s20, 0
    %p104 = por %p102, %p103
    %p105 = scmp.ne.s32.totalorder %s93, %s94
    %p106 = scmp.eq.s32.totalorder %s21, 1
    %p107 = por %p105, %p106
    %p109 = scmp.ne.s32.totalorder %s94, %s108
    %p110 = scmp.eq.s32.totalorder %s21, 0
    %p111 = por %p109, %p110
    %s113 = sadd.s32 %s112, 1
    %p116 = scmp.eq.s32.totalorder %s15, 1
    %p117 = scmp.ne.s32.totalorder %s112, %s114
    %p118 = scmp.eq.s32.totalorder %s15, 0
    %p119 = por %p117, %p118
    %p120 = scmp.ne.s32.totalorder %s112, %s114
    %p121 = scmp.eq.s32.totalorder %s20, 1
    %p122 = por %p120, %p121
    %p123 = scmp.ne.s32.totalorder %s114, %s115
    %p124 = scmp.eq.s32.totalorder %s20, 0
    %p125 = por %p123, %p124
    %p126 = scmp.ne.s32.totalorder %s114, %s115
    %p127 = scmp.eq.s32.totalorder %s21, 1
    %p128 = por %p126, %p127
    %p130 = scmp.ne.s32.totalorder %s115, %s129
    %p131 = scmp.eq.s32.totalorder %s21, 0
    %p132 = por %p130, %p131
    %s134 = sadd.s32 %s133, 1
    %p137 = scmp.eq.s32.totalorder %s15, 1
    %p138 = scmp.ne.s32.totalorder %s133, %s135
    %p139 = scmp.eq.s32.totalorder %s15, 0
    %p140 = por %p138, %p139
    %p141 = scmp.ne.s32.totalorder %s133, %s135
    %p142 = scmp.eq.s32.totalorder %s20, 1
    %p143 = por %p141, %p142
    %p144 = scmp.ne.s32.totalorder %s135, %s136
    %p145 = scmp.eq.s32.totalorder %s20, 0
    %p146 = por %p144, %p145
    %p147 = scmp.ne.s32.totalorder %s135, %s136
    %p148 = scmp.eq.s32.totalorder %s21, 1
    %p149 = por %p147, %p148
    %p151 = scmp.ne.s32.totalorder %s136, %s150
    %p152 = scmp.eq.s32.totalorder %s21, 0
    %p153 = por %p151, %p152
    %s155 = sadd.s32 %s154, 1
    %p158 = scmp.eq.s32.totalorder %s15, 1
    %p159 = scmp.ne.s32.totalorder %s154, %s156
    %p160 = scmp.eq.s32.totalorder %s15, 0
    %p161 = por %p159, %p160
    %p162 = scmp.ne.s32.totalorder %s154, %s156
    %p163 = scmp.eq.s32.totalorder %s20, 1
    %p164 = por %p162, %p163
    %p165 = scmp.ne.s32.totalorder %s156, %s157
    %p166 = scmp.eq.s32.totalorder %s20, 0
    %p167 = por %p165, %p166
    %p168 = scmp.ne.s32.totalorder %s156, %s157
    %p169 = scmp.eq.s32.totalorder %s21, 1
    %p170 = por %p168, %p169
    %p172 = scmp.ne.s32.totalorder %s157, %s171
    %p173 = scmp.eq.s32.totalorder %s21, 0
    %p174 = por %p172, %p173
    %s176 = sadd.s32 %s175, 1
    %p179 = scmp.eq.s32.totalorder %s15, 1
    %p180 = scmp.ne.s32.totalorder %s175, %s177
    %p181 = scmp.eq.s32.totalorder %s15, 0
    %p182 = por %p180, %p181
    %p183 = scmp.ne.s32.totalorder %s175, %s177
    %p184 = scmp.eq.s32.totalorder %s20, 1
    %p185 = por %p183, %p184
    %p186 = scmp.ne.s32.totalorder %s177, %s178
    %p187 = scmp.eq.s32.totalorder %s20, 0
    %p188 = por %p186, %p187
    %p189 = scmp.ne.s32.totalorder %s177, %s178
    %p190 = scmp.eq.s32.totalorder %s21, 1
    %p191 = por %p189, %p190
    %p193 = scmp.ne.s32.totalorder %s178, %s192
    %p194 = scmp.eq.s32.totalorder %s21, 0
    %p195 = por %p193, %p194
    %s197 = sadd.s32 %s196, 1
    %p200 = scmp.eq.s32.totalorder %s15, 1
    %p201 = scmp.ne.s32.totalorder %s196, %s198
    %p202 = scmp.eq.s32.totalorder %s15, 0
    %p203 = por %p201, %p202
    %p204 = scmp.ne.s32.totalorder %s196, %s198
    %p205 = scmp.eq.s32.totalorder %s20, 1
    %p206 = por %p204, %p205
    %p207 = scmp.ne.s32.totalorder %s198, %s199
    %p208 = scmp.eq.s32.totalorder %s20, 0
    %p209 = por %p207, %p208
    %p210 = scmp.ne.s32.totalorder %s198, %s199
    %p211 = scmp.eq.s32.totalorder %s21, 1
    %p212 = por %p210, %p211
    %p214 = scmp.ne.s32.totalorder %s199, %s213
    %p215 = scmp.eq.s32.totalorder %s21, 0
    %p216 = por %p214, %p215
    %s217 = ssub.s32 %s15, %s22
    %p218 = scmp.eq.s32.totalorder %s217, 0
    %s220 = sadd.s32 %s219, 1
    %s221 = scalar_select %p218, %s219, %s220
    %p224 = pneg %p218
    %p225 = scmp.eq.s32.totalorder %s15, 1
    %p226 = por %p224, %p225
    %p227 = scmp.ne.s32.totalorder %s219, %s222
    %p228 = scmp.eq.s32.totalorder %s15, 0
    %p229 = por %p227, %p228
    %p230 = scmp.ne.s32.totalorder %s219, %s222
    %p231 = scmp.eq.s32.totalorder %s20, 1
    %p232 = por %p230, %p231
    %p233 = scmp.ne.s32.totalorder %s222, %s223
    %p234 = scmp.eq.s32.totalorder %s20, 0
    %p235 = por %p233, %p234
    %p236 = scmp.ne.s32.totalorder %s222, %s223
    %p237 = scmp.eq.s32.totalorder %s21, 1
    %p238 = por %p236, %p237
    %p240 = scmp.ne.s32.totalorder %s223, %s239
    %p241 = scmp.eq.s32.totalorder %s21, 0
    %p242 = por %p240, %p241
    %p243 = scmp.le.s32.totalorder 1, %s15
    %p244 = scmp.lt.s32.totalorder %s15, 3
    %p245 = pnand %p243, %p244
    %p246 = pneg %p245
    // Predicated region
    $region9: #{tpu_custom_call.1} parent=5 // pred_check
      _
    $region10: #{tpu_custom_call.1} parent=5 // pred_check_branch
      %248 = sbr.rel (%p245) target = $region12
    $region11: #{tpu_custom_call.1} parent=5 // pred_region
      %s249 = ssub.s32 %s15, 1
      // Predicated region
      $region13: #{tpu_custom_call.1} parent=11 // pred_check
        %p250 = pneg %p62
      $region14: #{tpu_custom_call.1} parent=11 // pred_check_branch
        %252 = sbr.rel (%p250) target = $region16
      $region15: #{tpu_custom_call.1} parent=11 // pred_region
        _
      $region16: #{tpu_custom_call.1} parent=11 // pred_fallthru
        _
      // Predicated region
      $region17: #{tpu_custom_call.1} parent=11 // pred_check
        %p253 = pneg %p83
      $region18: #{tpu_custom_call.1} parent=11 // pred_check_branch
        %255 = sbr.rel (%p253) target = $region20
      $region19: #{tpu_custom_call.1} parent=11 // pred_region
        _
      $region20: #{tpu_custom_call.1} parent=11 // pred_fallthru
        _
      // Predicated region
      $region21: #{tpu_custom_call.1} parent=11 // pred_check
        %p256 = pneg %p104
      $region22: #{tpu_custom_call.1} parent=11 // pred_check_branch
        %258 = sbr.rel (%p256) target = $region24
      $region23: #{tpu_custom_call.1} parent=11 // pred_region
        _
      $region24: #{tpu_custom_call.1} parent=11 // pred_fallthru
        _
      // Predicated region
      $region25: #{tpu_custom_call.1} parent=11 // pred_check
        %p259 = pneg %p125
      $region26: #{tpu_custom_call.1} parent=11 // pred_check_branch
        %261 = sbr.rel (%p259) target = $region28
      $region27: #{tpu_custom_call.1} parent=11 // pred_region
        _
      $region28: #{tpu_custom_call.1} parent=11 // pred_fallthru
        _
      // Predicated region
      $region29: #{tpu_custom_call.1} parent=11 // pred_check
        %p262 = pneg %p146
      $region30: #{tpu_custom_call.1} parent=11 // pred_check_branch
        %264 = sbr.rel (%p262) target = $region32
      $region31: #{tpu_custom_call.1} parent=11 // pred_region
        _
      $region32: #{tpu_custom_call.1} parent=11 // pred_fallthru
        _
      // Predicated region
      $region33: #{tpu_custom_call.1} parent=11 // pred_check
        %p265 = pneg %p167
      $region34: #{tpu_custom_call.1} parent=11 // pred_check_branch
        %267 = sbr.rel (%p265) target = $region36
      $region35: #{tpu_custom_call.1} parent=11 // pred_region
        _
      $region36: #{tpu_custom_call.1} parent=11 // pred_fallthru
        _
      // Predicated region
      $region37: #{tpu_custom_call.1} parent=11 // pred_check
        %p268 = pneg %p188
      $region38: #{tpu_custom_call.1} parent=11 // pred_check_branch
        %270 = sbr.rel (%p268) target = $region40
      $region39: #{tpu_custom_call.1} parent=11 // pred_region
        _
      $region40: #{tpu_custom_call.1} parent=11 // pred_fallthru
        _
      // Predicated region
      $region41: #{tpu_custom_call.1} parent=11 // pred_check
        %p271 = pneg %p209
      $region42: #{tpu_custom_call.1} parent=11 // pred_check_branch
        %273 = sbr.rel (%p271) target = $region44
      $region43: #{tpu_custom_call.1} parent=11 // pred_region
        _
      $region44: #{tpu_custom_call.1} parent=11 // pred_fallthru
        _
    $region12: #{tpu_custom_call.1} parent=5 // pred_fallthru
      _
    %p274 = scmp.lt.s32.totalorder %s15, 2
    // Predicated region
    $region45: #{tpu_custom_call.1} parent=5 // pred_check
      %p275 = pneg %p274
    $region46: #{tpu_custom_call.1} parent=5 // pred_check_branch
      %277 = sbr.rel (%p275) target = $region48
    $region47: #{tpu_custom_call.1} parent=5 // pred_region
      // Predicated region
      $region49: #{tpu_custom_call.1} parent=47 // pred_check
        %p278 = pneg %p35
      $region50: #{tpu_custom_call.1} parent=47 // pred_check_branch
        %280 = sbr.rel (%p278) target = $region52
      $region51: #{tpu_custom_call.1} parent=47 // pred_region
        %s281 = smul.u32 2, %s15
        %p282 = scmp.lt.s32.totalorder %s281, 3
        %s283 = scalar_select %p282, %s281, 3
        %s284 = smul.addr %s283, 8
        %s285 = smul.addr %s284, 4
        %s286 = scalar_lea.vmem %s0, %s285
        %s287 = smul.u32 2, %s15
      $region52: #{tpu_custom_call.1} parent=47 // pred_fallthru
        _
    $region48: #{tpu_custom_call.1} parent=5 // pred_fallthru
      _
    %p288 = scmp.le.s32.totalorder 1, %s15
    %p289 = scmp.lt.s32.totalorder %s15, 3
    %p290 = pnand %p288, %p289
    %p291 = pneg %p290
    // Predicated region
    $region53: #{tpu_custom_call.1} parent=5 // pred_check
      _
    $region54: #{tpu_custom_call.1} parent=5 // pred_check_branch
      %293 = sbr.rel (%p290) target = $region56
    $region55: #{tpu_custom_call.1} parent=5 // pred_region
      %s294 = ssub.s32 %s15, 1
      %s295 = smul.u32 2, %s20
      %p296 = scmp.lt.s32.totalorder %s295, 3
      %s297 = scalar_select %p296, %s295, 3
      %s298 = smul.addr %s297, 8
      %s299 = smul.addr %s298, 4
      %s300 = scalar_lea.vmem %s0, %s299
      %p301 = pneg %p41
      %p302 = pneg %p38
      %p303 = pneg %p62
      %p304 = pneg %p59
      %p305 = pneg %p83
      %p306 = pneg %p80
      %p307 = pneg %p104
      %p308 = pneg %p101
      %p309 = pneg %p125
      %p310 = pneg %p122
      %p311 = pneg %p146
      %p312 = pneg %p143
      %p313 = pneg %p167
      %p314 = pneg %p164
      %p315 = pneg %p188
      %p316 = pneg %p185
      %p317 = pneg %p209
      %p318 = pneg %p206
      %p319 = pneg %p235
      %p320 = pneg %p232
      %s321 = smul.u32 2, %s20
      %p322 = scmp.lt.s32.totalorder %s321, 3
      %s323 = scalar_select %p322, %s321, 3
      %s324 = smul.addr %s323, 8
      %s325 = smul.addr %s324, 8
      %s326 = scalar_lea.vmem %s9, %s325
      %s327 = smul.u32 2, %s20
      %p328 = scmp.lt.s32.totalorder %s327, 3
      %s329 = scalar_select %p328, %s327, 3
      %s330 = smul.addr %s329, 8
      %s331 = smul.addr %s330, 4
      %s332 = scalar_lea.vmem %s0, %s331
      %s333 = smul.u32 2, %s20
      %s334 = smul.u32 2, %s20
      %p335 = scmp.lt.s32.totalorder %s334, 3
      %s336 = scalar_select %p335, %s334, 3
      %s337 = smul.addr %s336, 8
      %s338 = smul.addr %s337, 8
      %s339 = scalar_lea.vmem %s9, %s338
      %s340 = smul.u32 2, %s20
      %v342 = vld [vmem:[%s332] sm:$0xf]
      %v343 = vld [vmem:[%s332 + $0x4] sm:$0xf]
      %v344 = vld [vmem:[%s332 + $0x8] sm:$0xf]
      %v345 = vld [vmem:[%s332 + $0xc] sm:$0xf]
      %v346 = vld [vmem:[%s332 + $0x10] sm:$0xf]
      %v347 = vld [vmem:[%s332 + $0x14] sm:$0xf]
      %v348 = vld [vmem:[%s332 + $0x18] sm:$0xf]
      %v349 = vld [vmem:[%s332 + $0x1c] sm:$0xf]
      %v350 = vld [vmem:[%s332 + $0x20] sm:$0xf]
      %v351 = vld [vmem:[%s332 + $0x24] sm:$0xf]
      %v352 = vld [vmem:[%s332 + $0x28] sm:$0xf]
      %v353 = vld [vmem:[%s332 + $0x2c] sm:$0xf]
      %v354 = vld [vmem:[%s332 + $0x30] sm:$0xf]
      %v355 = vld [vmem:[%s332 + $0x34] sm:$0xf]
      %v356 = vld [vmem:[%s332 + $0x38] sm:$0xf]
      %v357 = vld [vmem:[%s332 + $0x3c] sm:$0xf]
      %v358 = vld [vmem:[%s1] sm:$0xf]
      %v359 = vld [vmem:[%s1 + $0x4] sm:$0xf]
      %v360 = vld [vmem:[%s2] sm:$0x1]
      %v362 = vlaneseq
      %v363 = vshrl.u32 %v362, 7
      %v364 = vsub.s32 0, %v363
      %v365 = vrot.slane %v360, %v364
      %v383 = vunpack.c.l.b16 %v342
      %v384 = vunpack.c.l.b16 %v343
      %v385 = vunpack.c.l.b16 %v344
      %v386 = vunpack.c.l.b16 %v345
      %v387 = vunpack.c.l.b16 %v346
      %v388 = vunpack.c.l.b16 %v347
      %v389 = vunpack.c.l.b16 %v348
      %v390 = vunpack.c.l.b16 %v349
      %v391 = vunpack.c.l.b16 %v350
      %v392 = vunpack.c.l.b16 %v351
      %v393 = vunpack.c.l.b16 %v352
      %v394 = vunpack.c.l.b16 %v353
      %v395 = vunpack.c.l.b16 %v354
      %v396 = vunpack.c.l.b16 %v355
      %v397 = vunpack.c.l.b16 %v356
      %v398 = vunpack.c.l.b16 %v357
      %v399 = vpack.c.b16 %v384, %v383
      %v400 = vpack.c.b16 %v386, %v385
      %v401 = vpack.c.b16 %v388, %v387
      %v402 = vpack.c.b16 %v390, %v389
      %v403 = vpack.c.b16 %v392, %v391
      %v404 = vpack.c.b16 %v394, %v393
      %v405 = vpack.c.b16 %v396, %v395
      %v406 = vpack.c.b16 %v398, %v397
      %v409 = vunpack.c.l.b16 %v358
      %v410 = vunpack.c.l.b16 %v359
      %v411 = vpack.c.b16 %v410, %v409
      %vm413 = vcmask 130048
      %v415 = vsel %vm413, %v399, 0
      %v418 = vsel %vm413, %v400, 0
      %v421 = vsel %vm413, %v401, 0
      %v424 = vsel %vm413, %v402, 0
      %v427 = vsel %vm413, %v403, 0
      %v430 = vsel %vm413, %v404, 0
      %v433 = vsel %vm413, %v405, 0
      %v436 = vsel %vm413, %v406, 0
      %438 = vmatprep.subr.bf16.mxu0 0
      %439 = vmatpush1.bf16.msra.mxu0 0
      %440 = vmatprep.subr.bf16.mxu0 0
      %441 = vmatpush1.bf16.msra.mxu0 0
      %442 = vmatprep.subr.bf16.mxu0 0
      %443 = vmatpush1.bf16.msra.mxu0 0
      %444 = vmatprep.subr.bf16.mxu0 0
      %445 = vmatpush1.bf16.msra.mxu0 0
      %446 = vmatprep.subr.bf16.mxu0 0
      %447 = vmatpush1.bf16.msra.mxu0 0
      %448 = vmatprep.subr.bf16.mxu0 0
      %449 = vmatpush1.bf16.msra.mxu0 0
      %450 = vmatprep.subr.bf16.mxu0 0
      %451 = vmatpush1.bf16.msra.mxu0 0
      %452 = vmatprep.subr.bf16.mxu0 0
      %453 = vmatpush1.bf16.msra.mxu0 %v411
      %454 = vmatprep.subr.bf16.mxu0 0
      %455 = vmatpush2.bf16.msra.mxu0 0
      %456 = vmatprep.subr.bf16.mxu0 0
      %457 = vmatpush2.bf16.msra.mxu0 0
      %458 = vmatprep.subr.bf16.mxu0 0
      %459 = vmatpush2.bf16.msra.mxu0 0
      %460 = vmatprep.subr.bf16.mxu0 0
      %461 = vmatpush2.bf16.msra.mxu0 0
      %462 = vmatprep.subr.bf16.mxu0 0
      %463 = vmatpush2.bf16.msra.mxu0 0
      %464 = vmatprep.subr.bf16.mxu0 0
      %465 = vmatpush2.bf16.msra.mxu0 0
      %466 = vmatprep.subr.bf16.mxu0 0
      %467 = vmatpush2.bf16.msra.mxu0 0
      %468 = vmatprep.subr.bf16.mxu0 0
      %469 = vmatpush2.bf16.msra.mxu0 0
      %470 = vmatprep.mubr.bf16.mxu0 0
      %471 = vmatmul.mubr.bf16.gmra.mxu0 %v415
      %v472 = vpop.f32.mrf.mxu0
      %v473 = vadd.f32 %v365, %v472
      %v474 = vpop.f32.mrf.mxu0
      %v475 = vpop.f32.mrf.mxu0
      %v476 = vadd.f32 %v365, %v475
      %v477 = vpop.f32.mrf.mxu0
      %478 = vmatprep.mubr.bf16.mxu0 0
      %479 = vmatmul.mubr.bf16.gmra.mxu0 %v418
      %v480 = vpop.f32.mrf.mxu0
      %v481 = vadd.f32 %v365, %v480
      %v482 = vpop.f32.mrf.mxu0
      %v483 = vpop.f32.mrf.mxu0
      %v484 = vadd.f32 %v365, %v483
      %v485 = vpop.f32.mrf.mxu0
      %486 = vmatprep.mubr.bf16.mxu0 0
      %487 = vmatmul.mubr.bf16.gmra.mxu0 %v421
      %v488 = vpop.f32.mrf.mxu0
      %v489 = vadd.f32 %v365, %v488
      %v490 = vpop.f32.mrf.mxu0
      %v491 = vpop.f32.mrf.mxu0
      %v492 = vadd.f32 %v365, %v491
      %v493 = vpop.f32.mrf.mxu0
      %494 = vmatprep.mubr.bf16.mxu0 0
      %495 = vmatmul.mubr.bf16.gmra.mxu0 %v424
      %v496 = vpop.f32.mrf.mxu0
      %v497 = vadd.f32 %v365, %v496
      %v498 = vpop.f32.mrf.mxu0
      %v499 = vpop.f32.mrf.mxu0
      %v500 = vadd.f32 %v365, %v499
      %v501 = vpop.f32.mrf.mxu0
      %502 = vmatprep.mubr.bf16.mxu0 0
      %503 = vmatmul.mubr.bf16.gmra.mxu0 %v427
      %v504 = vpop.f32.mrf.mxu0
      %v505 = vadd.f32 %v365, %v504
      %v506 = vpop.f32.mrf.mxu0
      %v507 = vpop.f32.mrf.mxu0
      %v508 = vadd.f32 %v365, %v507
      %v509 = vpop.f32.mrf.mxu0
      %510 = vmatprep.mubr.bf16.mxu0 0
      %511 = vmatmul.mubr.bf16.gmra.mxu0 %v430
      %v512 = vpop.f32.mrf.mxu0
      %v513 = vadd.f32 %v365, %v512
      %v514 = vpop.f32.mrf.mxu0
      %v515 = vpop.f32.mrf.mxu0
      %v516 = vadd.f32 %v365, %v515
      %v517 = vpop.f32.mrf.mxu0
      %518 = vmatprep.mubr.bf16.mxu0 0
      %519 = vmatmul.mubr.bf16.gmra.mxu0 %v433
      %v520 = vpop.f32.mrf.mxu0
      %v521 = vadd.f32 %v365, %v520
      %v522 = vpop.f32.mrf.mxu0
      %v523 = vpop.f32.mrf.mxu0
      %v524 = vadd.f32 %v365, %v523
      %v525 = vpop.f32.mrf.mxu0
      %526 = vmatprep.mubr.bf16.mxu0 0
      %527 = vmatmul.mubr.bf16.gmra.mxu0 %v436
      %v528 = vpop.f32.mrf.mxu0
      %v529 = vadd.f32 %v365, %v528
      %v530 = vpop.f32.mrf.mxu0
      %v531 = vpop.f32.mrf.mxu0
      %v532 = vadd.f32 %v365, %v531
      %v533 = vpop.f32.mrf.mxu0
      %534 = vdwg.mxu0
      %v535 = vmul.f32 %v473, 0.5
      %v536 = vmul.f32 %v476, 0.5
      %v537 = vmul.f32 %v481, 0.5
      %v538 = vmul.f32 %v484, 0.5
      %v539 = vmul.f32 %v489, 0.5
      %v540 = vmul.f32 %v492, 0.5
      %v541 = vmul.f32 %v497, 0.5
      %v542 = vmul.f32 %v500, 0.5
      %v543 = vmul.f32 %v505, 0.5
      %v544 = vmul.f32 %v508, 0.5
      %v545 = vmul.f32 %v513, 0.5
      %v546 = vmul.f32 %v516, 0.5
      %v547 = vmul.f32 %v521, 0.5
      %v548 = vmul.f32 %v524, 0.5
      %v549 = vmul.f32 %v529, 0.5
      %v550 = vmul.f32 %v532, 0.5
      %v551 = vmul.f32 %v473, 0.044715
      %v552 = vmul.f32 %v476, 0.044715
      %v553 = vmul.f32 %v481, 0.044715
      %v554 = vmul.f32 %v484, 0.044715
      %v555 = vmul.f32 %v489, 0.044715
      %v556 = vmul.f32 %v492, 0.044715
      %v557 = vmul.f32 %v497, 0.044715
      %v558 = vmul.f32 %v500, 0.044715
      %v559 = vmul.f32 %v505, 0.044715
      %v560 = vmul.f32 %v508, 0.044715
      %v561 = vmul.f32 %v513, 0.044715
      %v562 = vmul.f32 %v516, 0.044715
      %v563 = vmul.f32 %v521, 0.044715
      %v564 = vmul.f32 %v524, 0.044715
      %v565 = vmul.f32 %v529, 0.044715
      %v566 = vmul.f32 %v532, 0.044715
      %v567 = vmul.f32 %v551, %v473
      %v568 = vmul.f32 %v552, %v476
      %v569 = vmul.f32 %v553, %v481
      %v570 = vmul.f32 %v554, %v484
      %v571 = vmul.f32 %v555, %v489
      %v572 = vmul.f32 %v556, %v492
      %v573 = vmul.f32 %v557, %v497
      %v574 = vmul.f32 %v558, %v500
      %v575 = vmul.f32 %v559, %v505
      %v576 = vmul.f32 %v560, %v508
      %v577 = vmul.f32 %v561, %v513
      %v578 = vmul.f32 %v562, %v516
      %v579 = vmul.f32 %v563, %v521
      %v580 = vmul.f32 %v564, %v524
      %v581 = vmul.f32 %v565, %v529
      %v582 = vmul.f32 %v566, %v532
      %v583 = vmul.f32 %v567, %v473
      %v584 = vmul.f32 %v568, %v476
      %v585 = vmul.f32 %v569, %v481
      %v586 = vmul.f32 %v570, %v484
      %v587 = vmul.f32 %v571, %v489
      %v588 = vmul.f32 %v572, %v492
      %v589 = vmul.f32 %v573, %v497
      %v590 = vmul.f32 %v574, %v500
      %v591 = vmul.f32 %v575, %v505
      %v592 = vmul.f32 %v576, %v508
      %v593 = vmul.f32 %v577, %v513
      %v594 = vmul.f32 %v578, %v516
      %v595 = vmul.f32 %v579, %v521
      %v596 = vmul.f32 %v580, %v524
      %v597 = vmul.f32 %v581, %v529
      %v598 = vmul.f32 %v582, %v532
      %v599 = vadd.f32 %v473, %v583
      %v600 = vadd.f32 %v476, %v584
      %v601 = vadd.f32 %v481, %v585
      %v602 = vadd.f32 %v484, %v586
      %v603 = vadd.f32 %v489, %v587
      %v604 = vadd.f32 %v492, %v588
      %v605 = vadd.f32 %v497, %v589
      %v606 = vadd.f32 %v500, %v590
      %v607 = vadd.f32 %v505, %v591
      %v608 = vadd.f32 %v508, %v592
      %v609 = vadd.f32 %v513, %v593
      %v610 = vadd.f32 %v516, %v594
      %v611 = vadd.f32 %v521, %v595
      %v612 = vadd.f32 %v524, %v596
      %v613 = vadd.f32 %v529, %v597
      %v614 = vadd.f32 %v532, %v598
      %v615 = vmul.f32 %v599, 0.7978846
      %v616 = vmul.f32 %v600, 0.7978846
      %v617 = vmul.f32 %v601, 0.7978846
      %v618 = vmul.f32 %v602, 0.7978846
      %v619 = vmul.f32 %v603, 0.7978846
      %v620 = vmul.f32 %v604, 0.7978846
      %v621 = vmul.f32 %v605, 0.7978846
      %v622 = vmul.f32 %v606, 0.7978846
      %v623 = vmul.f32 %v607, 0.7978846
      %v624 = vmul.f32 %v608, 0.7978846
      %v625 = vmul.f32 %v609, 0.7978846
      %v626 = vmul.f32 %v610, 0.7978846
      %v627 = vmul.f32 %v611, 0.7978846
      %v628 = vmul.f32 %v612, 0.7978846
      %v629 = vmul.f32 %v613, 0.7978846
      %v630 = vmul.f32 %v614, 0.7978846
      %v631 = vtanh.pop %v615
      %v632 = vtanh.pop %v616
      %v633 = vtanh.pop %v617
      %v634 = vtanh.pop %v618
      %v635 = vtanh.pop %v619
      %v636 = vtanh.pop %v620
      %v637 = vtanh.pop %v621
      %v638 = vtanh.pop %v622
      %v639 = vtanh.pop %v623
      %v640 = vtanh.pop %v624
      %v641 = vtanh.pop %v625
      %v642 = vtanh.pop %v626
      %v643 = vtanh.pop %v627
      %v644 = vtanh.pop %v628
      %v645 = vtanh.pop %v629
      %v646 = vtanh.pop %v630
      %v647 = vadd.f32 %v631, 1.0
      %v648 = vadd.f32 %v632, 1.0
      %v649 = vadd.f32 %v633, 1.0
      %v650 = vadd.f32 %v634, 1.0
      %v651 = vadd.f32 %v635, 1.0
      %v652 = vadd.f32 %v636, 1.0
      %v653 = vadd.f32 %v637, 1.0
      %v654 = vadd.f32 %v638, 1.0
      %v655 = vadd.f32 %v639, 1.0
      %v656 = vadd.f32 %v640, 1.0
      %v657 = vadd.f32 %v641, 1.0
      %v658 = vadd.f32 %v642, 1.0
      %v659 = vadd.f32 %v643, 1.0
      %v660 = vadd.f32 %v644, 1.0
      %v661 = vadd.f32 %v645, 1.0
      %v662 = vadd.f32 %v646, 1.0
      %v663 = vmul.f32 %v535, %v647
      %v664 = vmul.f32 %v536, %v648
      %v665 = vmul.f32 %v537, %v649
      %v666 = vmul.f32 %v538, %v650
      %v667 = vmul.f32 %v539, %v651
      %v668 = vmul.f32 %v540, %v652
      %v669 = vmul.f32 %v541, %v653
      %v670 = vmul.f32 %v542, %v654
      %v671 = vmul.f32 %v543, %v655
      %v672 = vmul.f32 %v544, %v656
      %v673 = vmul.f32 %v545, %v657
      %v674 = vmul.f32 %v546, %v658
      %v675 = vmul.f32 %v547, %v659
      %v676 = vmul.f32 %v548, %v660
      %v677 = vmul.f32 %v549, %v661
      %v678 = vmul.f32 %v550, %v662
      %679 = vst [vmem:[#allocation2] sm:$0xf] 0
      %680 = vst [vmem:[#allocation2 + $0x4] sm:$0xf] 0
      %681 = vst [vmem:[#allocation2 + $0x50] sm:$0xf] 0
      %682 = vst [vmem:[#allocation2 + $0x54] sm:$0xf] 0
      %s683 = scalar_lea.vmem [#allocation2], 72
      %684 = vst [vmem:[%s683] sm:$0xf] 0
      %685 = vst [vmem:[%s683 + $0x4] sm:$0xf] 0
      %686 = vst [vmem:[%s683 + $0x50] sm:$0xf] 0
      %687 = vst [vmem:[%s683 + $0x54] sm:$0xf] 0
      %vm688 = vcmask 1040384
      %vm689 = vsmask.f32 256
      %vm690 = vmand %vm688, %vm689
      %v691 = vld [vmem:[#allocation2] sm:$0x1]
      %v692 = vsel %vm690, 0, %v691
      %693 = vst [vmem:[#allocation2] sm:$0x1] %v692
      %v694 = vld [vmem:[#allocation2 + $0x8] sm:$0x1]
      %v695 = vsel %vm690, 0, %v694
      %696 = vst [vmem:[#allocation2 + $0x8] sm:$0x1] %v695
      %v697 = vld [vmem:[#allocation2 + $0x10] sm:$0x1]
      %v698 = vsel %vm690, 0, %v697
      %699 = vst [vmem:[#allocation2 + $0x10] sm:$0x1] %v698
      %v700 = vld [vmem:[#allocation2 + $0x18] sm:$0x1]
      %v701 = vsel %vm690, 0, %v700
      %702 = vst [vmem:[#allocation2 + $0x18] sm:$0x1] %v701
      %v703 = vld [vmem:[#allocation2 + $0x20] sm:$0x1]
      %v704 = vsel %vm690, 0, %v703
      %705 = vst [vmem:[#allocation2 + $0x20] sm:$0x1] %v704
      %v706 = vld [vmem:[#allocation2 + $0x28] sm:$0x1]
      %v707 = vsel %vm690, 0, %v706
      %708 = vst [vmem:[#allocation2 + $0x28] sm:$0x1] %v707
      %v709 = vld [vmem:[#allocation2 + $0x30] sm:$0x1]
      %v710 = vsel %vm690, 0, %v709
      %711 = vst [vmem:[#allocation2 + $0x30] sm:$0x1] %v710
      %v712 = vld [vmem:[#allocation2 + $0x38] sm:$0x1]
      %v713 = vsel %vm690, 0, %v712
      %714 = vst [vmem:[#allocation2 + $0x38] sm:$0x1] %v713
      %v715 = vld [vmem:[#allocation2 + $0x40] sm:$0x1]
      %v716 = vsel %vm690, 0, %v715
      %717 = vst [vmem:[#allocation2 + $0x40] sm:$0x1] %v716
      %v718 = vld [vmem:[#allocation2 + $0x48] sm:$0x1]
      %v719 = vsel %vm690, 0, %v718
      %720 = vst [vmem:[#allocation2 + $0x48] sm:$0x1] %v719
      %v721 = vld [vmem:[#allocation2 + $0x50] sm:$0x1]
      %v722 = vsel %vm690, 0, %v721
      %723 = vst [vmem:[#allocation2 + $0x50] sm:$0x1] %v722
      %v724 = vld [vmem:[#allocation2 + $0x58] sm:$0x1]
      %v725 = vsel %vm690, 0, %v724
      %726 = vst [vmem:[#allocation2 + $0x58] sm:$0x1] %v725
      %v727 = vld [vmem:[#allocation2 + $0x60] sm:$0x1]
      %v728 = vsel %vm690, 0, %v727
      %729 = vst [vmem:[#allocation2 + $0x60] sm:$0x1] %v728
      %v730 = vld [vmem:[#allocation2 + $0x68] sm:$0x1]
      %v731 = vsel %vm690, 0, %v730
      %732 = vst [vmem:[#allocation2 + $0x68] sm:$0x1] %v731
      %v733 = vld [vmem:[#allocation2 + $0x70] sm:$0x1]
      %v734 = vsel %vm690, 0, %v733
      %735 = vst [vmem:[#allocation2 + $0x70] sm:$0x1] %v734
      %v736 = vld [vmem:[#allocation2 + $0x78] sm:$0x1]
      %v737 = vsel %vm690, 0, %v736
      %738 = vst [vmem:[#allocation2 + $0x78] sm:$0x1] %v737
      %v739 = vld [vmem:[#allocation2 + $0x80] sm:$0x1]
      %v740 = vsel %vm690, 0, %v739
      %741 = vst [vmem:[#allocation2 + $0x80] sm:$0x1] %v740
      %v742 = vld [vmem:[#allocation2 + $0x88] sm:$0x1]
      %v743 = vsel %vm690, 0, %v742
      %744 = vst [vmem:[#allocation2 + $0x88] sm:$0x1] %v743
      %v745 = vld [vmem:[#allocation2 + $0x90] sm:$0x1]
      %v746 = vsel %vm690, 0, %v745
      %747 = vst [vmem:[#allocation2 + $0x90] sm:$0x1] %v746
      %v748 = vld [vmem:[#allocation2 + $0x98] sm:$0x1]
      %v749 = vsel %vm690, 0, %v748
      %750 = vst [vmem:[#allocation2 + $0x98] sm:$0x1] %v749
      %vm751 = vcmask 1043456
      %vm752 = vsmask.f32 7938
      %vm753 = vmand %vm751, %vm752
      %v754 = vld [vmem:[#allocation2 + $0x4] sm:$0xf]
      %v755 = vsel %vm753, 0, %v754
      %756 = vst [vmem:[#allocation2 + $0x4] sm:$0xf] %v755
      %v757 = vld [vmem:[#allocation2 + $0xc] sm:$0xf]
      %v758 = vsel %vm753, 0, %v757
      %759 = vst [vmem:[#allocation2 + $0xc] sm:$0xf] %v758
      %v760 = vld [vmem:[#allocation2 + $0x14] sm:$0xf]
      %v761 = vsel %vm753, 0, %v760
      %762 = vst [vmem:[#allocation2 + $0x14] sm:$0xf] %v761
      %v763 = vld [vmem:[#allocation2 + $0x1c] sm:$0xf]
      %v764 = vsel %vm753, 0, %v763
      %765 = vst [vmem:[#allocation2 + $0x1c] sm:$0xf] %v764
      %v766 = vld [vmem:[#allocation2 + $0x24] sm:$0xf]
      %v767 = vsel %vm753, 0, %v766
      %768 = vst [vmem:[#allocation2 + $0x24] sm:$0xf] %v767
      %v769 = vld [vmem:[#allocation2 + $0x2c] sm:$0xf]
      %v770 = vsel %vm753, 0, %v769
      %771 = vst [vmem:[#allocation2 + $0x2c] sm:$0xf] %v770
      %v772 = vld [vmem:[#allocation2 + $0x34] sm:$0xf]
      %v773 = vsel %vm753, 0, %v772
      %774 = vst [vmem:[#allocation2 + $0x34] sm:$0xf] %v773
      %v775 = vld [vmem:[#allocation2 + $0x3c] sm:$0xf]
      %v776 = vsel %vm753, 0, %v775
      %777 = vst [vmem:[#allocation2 + $0x3c] sm:$0xf] %v776
      %v778 = vld [vmem:[#allocation2 + $0x44] sm:$0xf]
      %v779 = vsel %vm753, 0, %v778
      %780 = vst [vmem:[#allocation2 + $0x44] sm:$0xf] %v779
      %v781 = vld [vmem:[#allocation2 + $0x4c] sm:$0xf]
      %v782 = vsel %vm753, 0, %v781
      %783 = vst [vmem:[#allocation2 + $0x4c] sm:$0xf] %v782
      %v784 = vld [vmem:[#allocation2 + $0x54] sm:$0xf]
      %v785 = vsel %vm753, 0, %v784
      %786 = vst [vmem:[#allocation2 + $0x54] sm:$0xf] %v785
      %v787 = vld [vmem:[#allocation2 + $0x5c] sm:$0xf]
      %v788 = vsel %vm753, 0, %v787
      %789 = vst [vmem:[#allocation2 + $0x5c] sm:$0xf] %v788
      %v790 = vld [vmem:[#allocation2 + $0x64] sm:$0xf]
      %v791 = vsel %vm753, 0, %v790
      %792 = vst [vmem:[#allocation2 + $0x64] sm:$0xf] %v791
      %v793 = vld [vmem:[#allocation2 + $0x6c] sm:$0xf]
      %v794 = vsel %vm753, 0, %v793
      %795 = vst [vmem:[#allocation2 + $0x6c] sm:$0xf] %v794
      %v796 = vld [vmem:[#allocation2 + $0x74] sm:$0xf]
      %v797 = vsel %vm753, 0, %v796
      %798 = vst [vmem:[#allocation2 + $0x74] sm:$0xf] %v797
      %v799 = vld [vmem:[#allocation2 + $0x7c] sm:$0xf]
      %v800 = vsel %vm753, 0, %v799
      %801 = vst [vmem:[#allocation2 + $0x7c] sm:$0xf] %v800
      %v802 = vld [vmem:[#allocation2 + $0x84] sm:$0xf]
      %v803 = vsel %vm753, 0, %v802
      %804 = vst [vmem:[#allocation2 + $0x84] sm:$0xf] %v803
      %v805 = vld [vmem:[#allocation2 + $0x8c] sm:$0xf]
      %v806 = vsel %vm753, 0, %v805
      %807 = vst [vmem:[#allocation2 + $0x8c] sm:$0xf] %v806
      %v808 = vld [vmem:[#allocation2 + $0x94] sm:$0xf]
      %v809 = vsel %vm753, 0, %v808
      %810 = vst [vmem:[#allocation2 + $0x94] sm:$0xf] %v809
      %v811 = vld [vmem:[#allocation2 + $0x9c] sm:$0xf]
      %v812 = vsel %vm753, 0, %v811
      %813 = vst [vmem:[#allocation2 + $0x9c] sm:$0xf] %v812
      %v814 = vpack.c.bf16 %v663, %v663
      %v815 = vpack.c.bf16 %v664, %v664
      %v816 = vpack.c.bf16 %v665, %v665
      %v817 = vpack.c.bf16 %v666, %v666
      %v818 = vpack.c.bf16 %v667, %v667
      %v819 = vpack.c.bf16 %v668, %v668
      %v820 = vpack.c.bf16 %v669, %v669
      %v821 = vpack.c.bf16 %v670, %v670
      %v822 = vpack.c.bf16 %v671, %v671
      %v823 = vpack.c.bf16 %v672, %v672
      %v824 = vpack.c.bf16 %v673, %v673
      %v825 = vpack.c.bf16 %v674, %v674
      %v826 = vpack.c.bf16 %v675, %v675
      %v827 = vpack.c.bf16 %v676, %v676
      %v828 = vpack.c.bf16 %v677, %v677
      %v829 = vpack.c.bf16 %v678, %v678
      %v846 = vunpack.c.l.b16 %v814
      %v847 = vunpack.c.l.b16 %v815
      %v848 = vunpack.c.l.b16 %v816
      %v849 = vunpack.c.l.b16 %v817
      %v850 = vunpack.c.l.b16 %v818
      %v851 = vunpack.c.l.b16 %v819
      %v852 = vunpack.c.l.b16 %v820
      %v853 = vunpack.c.l.b16 %v821
      %v854 = vunpack.c.l.b16 %v822
      %v855 = vunpack.c.l.b16 %v823
      %v856 = vunpack.c.l.b16 %v824
      %v857 = vunpack.c.l.b16 %v825
      %v858 = vunpack.c.l.b16 %v826
      %v859 = vunpack.c.l.b16 %v827
      %v860 = vunpack.c.l.b16 %v828
      %v861 = vunpack.c.l.b16 %v829
      %v862 = vpack.c.b16 %v846, %v846
      %v863 = vpack.c.b16 %v847, %v847
      %v864 = vpack.c.b16 %v848, %v848
      %v865 = vpack.c.b16 %v849, %v849
      %v866 = vpack.c.b16 %v850, %v850
      %v867 = vpack.c.b16 %v851, %v851
      %v868 = vpack.c.b16 %v852, %v852
      %v869 = vpack.c.b16 %v853, %v853
      %v870 = vpack.c.b16 %v854, %v854
      %v871 = vpack.c.b16 %v855, %v855
      %v872 = vpack.c.b16 %v856, %v856
      %v873 = vpack.c.b16 %v857, %v857
      %v874 = vpack.c.b16 %v858, %v858
      %v875 = vpack.c.b16 %v859, %v859
      %v876 = vpack.c.b16 %v860, %v860
      %v877 = vpack.c.b16 %v861, %v861
      %v879 = vshrl.u32 %v862, 16
      %v881 = vrot.slane %v879, 7
      %v882 = vshll.u32 %v862, 16
      %v884 = vor.u32 %v881, %v882
      %v885 = vrot.slane %v881, 4
      %v887 = vshrl.u32 %v863, 16
      %v889 = vrot.slane %v887, 7
      %v890 = vshll.u32 %v863, 16
      %v892 = vor.u32 %v889, %v890
      %v893 = vrot.slane %v889, 4
      %v895 = vshrl.u32 %v864, 16
      %v897 = vrot.slane %v895, 7
      %v898 = vshll.u32 %v864, 16
      %v900 = vor.u32 %v897, %v898
      %v901 = vrot.slane %v897, 4
      %v903 = vshrl.u32 %v865, 16
      %v905 = vrot.slane %v903, 7
      %v906 = vshll.u32 %v865, 16
      %v908 = vor.u32 %v905, %v906
      %v909 = vrot.slane %v905, 4
      %v911 = vshrl.u32 %v866, 16
      %v913 = vrot.slane %v911, 7
      %v914 = vshll.u32 %v866, 16
      %v916 = vor.u32 %v913, %v914
      %v917 = vrot.slane %v913, 4
      %v919 = vshrl.u32 %v867, 16
      %v921 = vrot.slane %v919, 7
      %v922 = vshll.u32 %v867, 16
      %v924 = vor.u32 %v921, %v922
      %v925 = vrot.slane %v921, 4
      %v927 = vshrl.u32 %v868, 16
      %v929 = vrot.slane %v927, 7
      %v930 = vshll.u32 %v868, 16
      %v932 = vor.u32 %v929, %v930
      %v933 = vrot.slane %v929, 4
      %v935 = vshrl.u32 %v869, 16
      %v937 = vrot.slane %v935, 7
      %v938 = vshll.u32 %v869, 16
      %v940 = vor.u32 %v937, %v938
      %v941 = vrot.slane %v937, 4
      %v943 = vshrl.u32 %v870, 16
      %v945 = vrot.slane %v943, 7
      %v946 = vshll.u32 %v870, 16
      %v948 = vor.u32 %v945, %v946
      %v949 = vrot.slane %v945, 4
      %v951 = vshrl.u32 %v871, 16
      %v953 = vrot.slane %v951, 7
      %v954 = vshll.u32 %v871, 16
      %v956 = vor.u32 %v953, %v954
      %v957 = vrot.slane %v953, 4
      %v959 = vshrl.u32 %v872, 16
      %v961 = vrot.slane %v959, 7
      %v962 = vshll.u32 %v872, 16
      %v964 = vor.u32 %v961, %v962
      %v965 = vrot.slane %v961, 4
      %v967 = vshrl.u32 %v873, 16
      %v969 = vrot.slane %v967, 7
      %v970 = vshll.u32 %v873, 16
      %v972 = vor.u32 %v969, %v970
      %v973 = vrot.slane %v969, 4
      %v975 = vshrl.u32 %v874, 16
      %v977 = vrot.slane %v975, 7
      %v978 = vshll.u32 %v874, 16
      %v980 = vor.u32 %v977, %v978
      %v981 = vrot.slane %v977, 4
      %v983 = vshrl.u32 %v875, 16
      %v985 = vrot.slane %v983, 7
      %v986 = vshll.u32 %v875, 16
      %v988 = vor.u32 %v985, %v986
      %v989 = vrot.slane %v985, 4
      %v991 = vshrl.u32 %v876, 16
      %v993 = vrot.slane %v991, 7
      %v994 = vshll.u32 %v876, 16
      %v996 = vor.u32 %v993, %v994
      %v997 = vrot.slane %v993, 4
      %v999 = vshrl.u32 %v877, 16
      %v1001 = vrot.slane %v999, 7
      %v1002 = vshll.u32 %v877, 16
      %v1004 = vor.u32 %v1001, %v1002
      %v1005 = vrot.slane %v1001, 4
      %s1038 = scalar_lea.vmem [#allocation2], 8
      %v1039 = vld [vmem:[%s1038] sm:$0xf]
      %v1040 = vsel %vm753, %v884, %v1039
      %1041 = vst [vmem:[%s1038] sm:$0xf] %v1040
      %v1042 = vld [vmem:[%s1038 + $0x4] sm:$0x1]
      %v1043 = vsel %vm690, %v885, %v1042
      %1044 = vst [vmem:[%s1038 + $0x4] sm:$0x1] %v1043
      %v1045 = vld [vmem:[%s1038 + $0x8] sm:$0xf]
      %v1046 = vsel %vm753, %v892, %v1045
      %1047 = vst [vmem:[%s1038 + $0x8] sm:$0xf] %v1046
      %v1048 = vld [vmem:[%s1038 + $0xc] sm:$0x1]
      %v1049 = vsel %vm690, %v893, %v1048
      %1050 = vst [vmem:[%s1038 + $0xc] sm:$0x1] %v1049
      %v1051 = vld [vmem:[%s1038 + $0x10] sm:$0xf]
      %v1052 = vsel %vm753, %v900, %v1051
      %1053 = vst [vmem:[%s1038 + $0x10] sm:$0xf] %v1052
      %v1054 = vld [vmem:[%s1038 + $0x14] sm:$0x1]
      %v1055 = vsel %vm690, %v901, %v1054
      %1056 = vst [vmem:[%s1038 + $0x14] sm:$0x1] %v1055
      %v1057 = vld [vmem:[%s1038 + $0x18] sm:$0xf]
      %v1058 = vsel %vm753, %v908, %v1057
      %1059 = vst [vmem:[%s1038 + $0x18] sm:$0xf] %v1058
      %v1060 = vld [vmem:[%s1038 + $0x1c] sm:$0x1]
      %v1061 = vsel %vm690, %v909, %v1060
      %1062 = vst [vmem:[%s1038 + $0x1c] sm:$0x1] %v1061
      %v1063 = vld [vmem:[%s1038 + $0x20] sm:$0xf]
      %v1064 = vsel %vm753, %v916, %v1063
      %1065 = vst [vmem:[%s1038 + $0x20] sm:$0xf] %v1064
      %v1066 = vld [vmem:[%s1038 + $0x24] sm:$0x1]
      %v1067 = vsel %vm690, %v917, %v1066
      %1068 = vst [vmem:[%s1038 + $0x24] sm:$0x1] %v1067
      %v1069 = vld [vmem:[%s1038 + $0x28] sm:$0xf]
      %v1070 = vsel %vm753, %v924, %v1069
      %1071 = vst [vmem:[%s1038 + $0x28] sm:$0xf] %v1070
      %v1072 = vld [vmem:[%s1038 + $0x2c] sm:$0x1]
      %v1073 = vsel %vm690, %v925, %v1072
      %1074 = vst [vmem:[%s1038 + $0x2c] sm:$0x1] %v1073
      %v1075 = vld [vmem:[%s1038 + $0x30] sm:$0xf]
      %v1076 = vsel %vm753, %v932, %v1075
      %1077 = vst [vmem:[%s1038 + $0x30] sm:$0xf] %v1076
      %v1078 = vld [vmem:[%s1038 + $0x34] sm:$0x1]
      %v1079 = vsel %vm690, %v933, %v1078
      %1080 = vst [vmem:[%s1038 + $0x34] sm:$0x1] %v1079
      %v1081 = vld [vmem:[%s1038 + $0x38] sm:$0xf]
      %v1082 = vsel %vm753, %v940, %v1081
      %1083 = vst [vmem:[%s1038 + $0x38] sm:$0xf] %v1082
      %v1084 = vld [vmem:[%s1038 + $0x3c] sm:$0x1]
      %v1085 = vsel %vm690, %v941, %v1084
      %1086 = vst [vmem:[%s1038 + $0x3c] sm:$0x1] %v1085
      %v1087 = vld [vmem:[%s1038 + $0x50] sm:$0xf]
      %v1088 = vsel %vm753, %v948, %v1087
      %1089 = vst [vmem:[%s1038 + $0x50] sm:$0xf] %v1088
      %v1090 = vld [vmem:[%s1038 + $0x54] sm:$0x1]
      %v1091 = vsel %vm690, %v949, %v1090
      %1092 = vst [vmem:[%s1038 + $0x54] sm:$0x1] %v1091
      %v1093 = vld [vmem:[%s1038 + $0x58] sm:$0xf]
      %v1094 = vsel %vm753, %v956, %v1093
      %1095 = vst [vmem:[%s1038 + $0x58] sm:$0xf] %v1094
      %v1096 = vld [vmem:[%s1038 + $0x5c] sm:$0x1]
      %v1097 = vsel %vm690, %v957, %v1096
      %1098 = vst [vmem:[%s1038 + $0x5c] sm:$0x1] %v1097
      %v1099 = vld [vmem:[%s1038 + $0x60] sm:$0xf]
      %v1100 = vsel %vm753, %v964, %v1099
      %1101 = vst [vmem:[%s1038 + $0x60] sm:$0xf] %v1100
      %v1102 = vld [vmem:[%s1038 + $0x64] sm:$0x1]
      %v1103 = vsel %vm690, %v965, %v1102
      %1104 = vst [vmem:[%s1038 + $0x64] sm:$0x1] %v1103
      %v1105 = vld [vmem:[%s1038 + $0x68] sm:$0xf]
      %v1106 = vsel %vm753, %v972, %v1105
      %1107 = vst [vmem:[%s1038 + $0x68] sm:$0xf] %v1106
      %v1108 = vld [vmem:[%s1038 + $0x6c] sm:$0x1]
      %v1109 = vsel %vm690, %v973, %v1108
      %1110 = vst [vmem:[%s1038 + $0x6c] sm:$0x1] %v1109
      %v1111 = vld [vmem:[%s1038 + $0x70] sm:$0xf]
      %v1112 = vsel %vm753, %v980, %v1111
      %1113 = vst [vmem:[%s1038 + $0x70] sm:$0xf] %v1112
      %v1114 = vld [vmem:[%s1038 + $0x74] sm:$0x1]
      %v1115 = vsel %vm690, %v981, %v1114
      %1116 = vst [vmem:[%s1038 + $0x74] sm:$0x1] %v1115
      %v1117 = vld [vmem:[%s1038 + $0x78] sm:$0xf]
      %v1118 = vsel %vm753, %v988, %v1117
      %1119 = vst [vmem:[%s1038 + $0x78] sm:$0xf] %v1118
      %v1120 = vld [vmem:[%s1038 + $0x7c] sm:$0x1]
      %v1121 = vsel %vm690, %v989, %v1120
      %1122 = vst [vmem:[%s1038 + $0x7c] sm:$0x1] %v1121
      %v1123 = vld [vmem:[%s1038 + $0x80] sm:$0xf]
      %v1124 = vsel %vm753, %v996, %v1123
      %1125 = vst [vmem:[%s1038 + $0x80] sm:$0xf] %v1124
      %v1126 = vld [vmem:[%s1038 + $0x84] sm:$0x1]
      %v1127 = vsel %vm690, %v997, %v1126
      %1128 = vst [vmem:[%s1038 + $0x84] sm:$0x1] %v1127
      %v1129 = vld [vmem:[%s1038 + $0x88] sm:$0xf]
      %v1130 = vsel %vm753, %v1004, %v1129
      %1131 = vst [vmem:[%s1038 + $0x88] sm:$0xf] %v1130
      %v1132 = vld [vmem:[%s1038 + $0x8c] sm:$0x1]
      %v1133 = vsel %vm690, %v1005, %v1132
      %1134 = vst [vmem:[%s1038 + $0x8c] sm:$0x1] %v1133
      %v1135 = vld [vmem:[%s4] sm:$0x1]
      %v1137 = vlaneseq
      %v1138 = vshrl.u32 %v1137, 7
      %v1139 = vsub.s32 0, %v1138
      %v1140 = vrot.slane %v1135, %v1139
      %v1142 = vld [vmem:[#allocation2] sm:$0xf]
      %v1143 = vld [vmem:[#allocation2 + $0x8] sm:$0xf]
      %v1144 = vld [vmem:[#allocation2 + $0x10] sm:$0xf]
      %v1145 = vld [vmem:[#allocation2 + $0x18] sm:$0xf]
      %v1146 = vld [vmem:[#allocation2 + $0x20] sm:$0xf]
      %v1147 = vld [vmem:[#allocation2 + $0x28] sm:$0xf]
      %v1148 = vld [vmem:[#allocation2 + $0x30] sm:$0xf]
      %v1149 = vld [vmem:[#allocation2 + $0x38] sm:$0xf]
      %v1150 = vld [vmem:[#allocation2 + $0x50] sm:$0xf]
      %v1151 = vld [vmem:[#allocation2 + $0x58] sm:$0xf]
      %v1152 = vld [vmem:[#allocation2 + $0x60] sm:$0xf]
      %v1153 = vld [vmem:[#allocation2 + $0x68] sm:$0xf]
      %v1154 = vld [vmem:[#allocation2 + $0x70] sm:$0xf]
      %v1155 = vld [vmem:[#allocation2 + $0x78] sm:$0xf]
      %v1156 = vld [vmem:[#allocation2 + $0x80] sm:$0xf]
      %v1157 = vld [vmem:[#allocation2 + $0x88] sm:$0xf]
      %v1158 = vunpack.c.l.bf16 %v1142
      %v1159 = vunpack.c.l.bf16 %v1143
      %v1160 = vunpack.c.l.bf16 %v1144
      %v1161 = vunpack.c.l.bf16 %v1145
      %v1162 = vunpack.c.l.bf16 %v1146
      %v1163 = vunpack.c.l.bf16 %v1147
      %v1164 = vunpack.c.l.bf16 %v1148
      %v1165 = vunpack.c.l.bf16 %v1149
      %v1166 = vunpack.c.l.bf16 %v1150
      %v1167 = vunpack.c.l.bf16 %v1151
      %v1168 = vunpack.c.l.bf16 %v1152
      %v1169 = vunpack.c.l.bf16 %v1153
      %v1170 = vunpack.c.l.bf16 %v1154
      %v1171 = vunpack.c.l.bf16 %v1155
      %v1172 = vunpack.c.l.bf16 %v1156
      %v1173 = vunpack.c.l.bf16 %v1157
      %v1174 = vld [vmem:[%s3] sm:$0x1]
      %v1175 = vlaneseq
      %v1176 = vshrl.u32 %v1175, 7
      %v1177 = vsub.s32 0, %v1176
      %v1178 = vrot.slane %v1174, %v1177
      %v1179 = vmul.f32 %v1178, %v1158
      %v1180 = vmul.f32 %v1178, %v1159
      %v1181 = vmul.f32 %v1178, %v1160
      %v1182 = vmul.f32 %v1178, %v1161
      %v1183 = vmul.f32 %v1178, %v1162
      %v1184 = vmul.f32 %v1178, %v1163
      %v1185 = vmul.f32 %v1178, %v1164
      %v1186 = vmul.f32 %v1178, %v1165
      %v1187 = vmul.f32 %v1178, %v1166
      %v1188 = vmul.f32 %v1178, %v1167
      %v1189 = vmul.f32 %v1178, %v1168
      %v1190 = vmul.f32 %v1178, %v1169
      %v1191 = vmul.f32 %v1178, %v1170
      %v1192 = vmul.f32 %v1178, %v1171
      %v1193 = vmul.f32 %v1178, %v1172
      %v1194 = vmul.f32 %v1178, %v1173
      %v1195 = vadd.f32 %v1140, %v1179
      %v1196 = vadd.f32 %v1140, %v1180
      %v1197 = vadd.f32 %v1140, %v1181
      %v1198 = vadd.f32 %v1140, %v1182
      %v1199 = vadd.f32 %v1140, %v1183
      %v1200 = vadd.f32 %v1140, %v1184
      %v1201 = vadd.f32 %v1140, %v1185
      %v1202 = vadd.f32 %v1140, %v1186
      %v1203 = vadd.f32 %v1140, %v1187
      %v1204 = vadd.f32 %v1140, %v1188
      %v1205 = vadd.f32 %v1140, %v1189
      %v1206 = vadd.f32 %v1140, %v1190
      %v1207 = vadd.f32 %v1140, %v1191
      %v1208 = vadd.f32 %v1140, %v1192
      %v1209 = vadd.f32 %v1140, %v1193
      %v1210 = vadd.f32 %v1140, %v1194
      %v1211 = vld [vmem:[#allocation2 + $0x4] sm:$0x1]
      %v1212 = vld [vmem:[#allocation2 + $0xc] sm:$0x1]
      %v1213 = vld [vmem:[#allocation2 + $0x14] sm:$0x1]
      %v1214 = vld [vmem:[#allocation2 + $0x1c] sm:$0x1]
      %v1215 = vld [vmem:[#allocation2 + $0x24] sm:$0x1]
      %v1216 = vld [vmem:[#allocation2 + $0x2c] sm:$0x1]
      %v1217 = vld [vmem:[#allocation2 + $0x34] sm:$0x1]
      %v1218 = vld [vmem:[#allocation2 + $0x3c] sm:$0x1]
      %v1219 = vld [vmem:[#allocation2 + $0x54] sm:$0x1]
      %v1220 = vld [vmem:[#allocation2 + $0x5c] sm:$0x1]
      %v1221 = vld [vmem:[#allocation2 + $0x64] sm:$0x1]
      %v1222 = vld [vmem:[#allocation2 + $0x6c] sm:$0x1]
      %v1223 = vld [vmem:[#allocation2 + $0x74] sm:$0x1]
      %v1224 = vld [vmem:[#allocation2 + $0x7c] sm:$0x1]
      %v1225 = vld [vmem:[#allocation2 + $0x84] sm:$0x1]
      %v1226 = vld [vmem:[#allocation2 + $0x8c] sm:$0x1]
      %v1227 = vunpack.c.l.bf16 %v1211
      %v1228 = vunpack.c.l.bf16 %v1212
      %v1229 = vunpack.c.l.bf16 %v1213
      %v1230 = vunpack.c.l.bf16 %v1214
      %v1231 = vunpack.c.l.bf16 %v1215
      %v1232 = vunpack.c.l.bf16 %v1216
      %v1233 = vunpack.c.l.bf16 %v1217
      %v1234 = vunpack.c.l.bf16 %v1218
      %v1235 = vunpack.c.l.bf16 %v1219
      %v1236 = vunpack.c.l.bf16 %v1220
      %v1237 = vunpack.c.l.bf16 %v1221
      %v1238 = vunpack.c.l.bf16 %v1222
      %v1239 = vunpack.c.l.bf16 %v1223
      %v1240 = vunpack.c.l.bf16 %v1224
      %v1241 = vunpack.c.l.bf16 %v1225
      %v1242 = vunpack.c.l.bf16 %v1226
      %v1243 = vld [vmem:[%s3 + $0x1] sm:$0x1]
      %v1244 = vlaneseq
      %v1245 = vshrl.u32 %v1244, 7
      %v1246 = vsub.s32 0, %v1245
      %v1247 = vrot.slane %v1243, %v1246
      %v1248 = vmul.f32 %v1247, %v1158
      %v1249 = vmul.f32 %v1247, %v1227
      %v1250 = vmul.f32 %v1247, %v1159
      %v1251 = vmul.f32 %v1247, %v1228
      %v1252 = vmul.f32 %v1247, %v1160
      %v1253 = vmul.f32 %v1247, %v1229
      %v1254 = vmul.f32 %v1247, %v1161
      %v1255 = vmul.f32 %v1247, %v1230
      %v1256 = vmul.f32 %v1247, %v1162
      %v1257 = vmul.f32 %v1247, %v1231
      %v1258 = vmul.f32 %v1247, %v1163
      %v1259 = vmul.f32 %v1247, %v1232
      %v1260 = vmul.f32 %v1247, %v1164
      %v1261 = vmul.f32 %v1247, %v1233
      %v1262 = vmul.f32 %v1247, %v1165
      %v1263 = vmul.f32 %v1247, %v1234
      %v1264 = vmul.f32 %v1247, %v1166
      %v1265 = vmul.f32 %v1247, %v1235
      %v1266 = vmul.f32 %v1247, %v1167
      %v1267 = vmul.f32 %v1247, %v1236
      %v1268 = vmul.f32 %v1247, %v1168
      %v1269 = vmul.f32 %v1247, %v1237
      %v1270 = vmul.f32 %v1247, %v1169
      %v1271 = vmul.f32 %v1247, %v1238
      %v1272 = vmul.f32 %v1247, %v1170
      %v1273 = vmul.f32 %v1247, %v1239
      %v1274 = vmul.f32 %v1247, %v1171
      %v1275 = vmul.f32 %v1247, %v1240
      %v1276 = vmul.f32 %v1247, %v1172
      %v1277 = vmul.f32 %v1247, %v1241
      %v1278 = vmul.f32 %v1247, %v1173
      %v1279 = vmul.f32 %v1247, %v1242
      %vm1312 = vcmask 1046528
      %v1313 = vrot.slane %v1248, 1
      %v1314 = vrot.slane %v1249, 1
      %v1315 = vsel %vm1312, %v1313, %v1314
      %v1316 = vrot.slane %v1250, 1
      %v1317 = vrot.slane %v1251, 1
      %v1318 = vsel %vm1312, %v1316, %v1317
      %v1319 = vrot.slane %v1252, 1
      %v1320 = vrot.slane %v1253, 1
      %v1321 = vsel %vm1312, %v1319, %v1320
      %v1322 = vrot.slane %v1254, 1
      %v1323 = vrot.slane %v1255, 1
      %v1324 = vsel %vm1312, %v1322, %v1323
      %v1325 = vrot.slane %v1256, 1
      %v1326 = vrot.slane %v1257, 1
      %v1327 = vsel %vm1312, %v1325, %v1326
      %v1328 = vrot.slane %v1258, 1
      %v1329 = vrot.slane %v1259, 1
      %v1330 = vsel %vm1312, %v1328, %v1329
      %v1331 = vrot.slane %v1260, 1
      %v1332 = vrot.slane %v1261, 1
      %v1333 = vsel %vm1312, %v1331, %v1332
      %v1334 = vrot.slane %v1262, 1
      %v1335 = vrot.slane %v1263, 1
      %v1336 = vsel %vm1312, %v1334, %v1335
      %v1337 = vrot.slane %v1264, 1
      %v1338 = vrot.slane %v1265, 1
      %v1339 = vsel %vm1312, %v1337, %v1338
      %v1340 = vrot.slane %v1266, 1
      %v1341 = vrot.slane %v1267, 1
      %v1342 = vsel %vm1312, %v1340, %v1341
      %v1343 = vrot.slane %v1268, 1
      %v1344 = vrot.slane %v1269, 1
      %v1345 = vsel %vm1312, %v1343, %v1344
      %v1346 = vrot.slane %v1270, 1
      %v1347 = vrot.slane %v1271, 1
      %v1348 = vsel %vm1312, %v1346, %v1347
      %v1349 = vrot.slane %v1272, 1
      %v1350 = vrot.slane %v1273, 1
      %v1351 = vsel %vm1312, %v1349, %v1350
      %v1352 = vrot.slane %v1274, 1
      %v1353 = vrot.slane %v1275, 1
      %v1354 = vsel %vm1312, %v1352, %v1353
      %v1355 = vrot.slane %v1276, 1
      %v1356 = vrot.slane %v1277, 1
      %v1357 = vsel %vm1312, %v1355, %v1356
      %v1358 = vrot.slane %v1278, 1
      %v1359 = vrot.slane %v1279, 1
      %v1360 = vsel %vm1312, %v1358, %v1359
      %v1377 = vadd.f32 %v1195, %v1315
      %v1378 = vadd.f32 %v1196, %v1318
      %v1379 = vadd.f32 %v1197, %v1321
      %v1380 = vadd.f32 %v1198, %v1324
      %v1381 = vadd.f32 %v1199, %v1327
      %v1382 = vadd.f32 %v1200, %v1330
      %v1383 = vadd.f32 %v1201, %v1333
      %v1384 = vadd.f32 %v1202, %v1336
      %v1385 = vadd.f32 %v1203, %v1339
      %v1386 = vadd.f32 %v1204, %v1342
      %v1387 = vadd.f32 %v1205, %v1345
      %v1388 = vadd.f32 %v1206, %v1348
      %v1389 = vadd.f32 %v1207, %v1351
      %v1390 = vadd.f32 %v1208, %v1354
      %v1391 = vadd.f32 %v1209, %v1357
      %v1392 = vadd.f32 %v1210, %v1360
      %v1393 = vld [vmem:[#allocation2] sm:$0xe]
      %v1394 = vld [vmem:[#allocation2 + $0x8] sm:$0xe]
      %v1395 = vld [vmem:[#allocation2 + $0x10] sm:$0xe]
      %v1396 = vld [vmem:[#allocation2 + $0x18] sm:$0xe]
      %v1397 = vld [vmem:[#allocation2 + $0x20] sm:$0xe]
      %v1398 = vld [vmem:[#allocation2 + $0x28] sm:$0xe]
      %v1399 = vld [vmem:[#allocation2 + $0x30] sm:$0xe]
      %v1400 = vld [vmem:[#allocation2 + $0x38] sm:$0xe]
      %v1401 = vld [vmem:[#allocation2 + $0x50] sm:$0xe]
      %v1402 = vld [vmem:[#allocation2 + $0x58] sm:$0xe]
      %v1403 = vld [vmem:[#allocation2 + $0x60] sm:$0xe]
      %v1404 = vld [vmem:[#allocation2 + $0x68] sm:$0xe]
      %v1405 = vld [vmem:[#allocation2 + $0x70] sm:$0xe]
      %v1406 = vld [vmem:[#allocation2 + $0x78] sm:$0xe]
      %v1407 = vld [vmem:[#allocation2 + $0x80] sm:$0xe]
      %v1408 = vld [vmem:[#allocation2 + $0x88] sm:$0xe]
      %v1409 = vunpack.c.l.bf16 %v1393
      %v1410 = vunpack.c.l.bf16 %v1394
      %v1411 = vunpack.c.l.bf16 %v1395
      %v1412 = vunpack.c.l.bf16 %v1396
      %v1413 = vunpack.c.l.bf16 %v1397
      %v1414 = vunpack.c.l.bf16 %v1398
      %v1415 = vunpack.c.l.bf16 %v1399
      %v1416 = vunpack.c.l.bf16 %v1400
      %v1417 = vunpack.c.l.bf16 %v1401
      %v1418 = vunpack.c.l.bf16 %v1402
      %v1419 = vunpack.c.l.bf16 %v1403
      %v1420 = vunpack.c.l.bf16 %v1404
      %v1421 = vunpack.c.l.bf16 %v1405
      %v1422 = vunpack.c.l.bf16 %v1406
      %v1423 = vunpack.c.l.bf16 %v1407
      %v1424 = vunpack.c.l.bf16 %v1408
      %v1425 = vld [vmem:[%s3 + $0x2] sm:$0x1]
      %v1426 = vlaneseq
      %v1427 = vshrl.u32 %v1426, 7
      %v1428 = vsub.s32 0, %v1427
      %v1429 = vrot.slane %v1425, %v1428
      %v1430 = vmul.f32 %v1429, %v1409
      %v1431 = vmul.f32 %v1429, %v1227
      %v1432 = vmul.f32 %v1429, %v1410
      %v1433 = vmul.f32 %v1429, %v1228
      %v1434 = vmul.f32 %v1429, %v1411
      %v1435 = vmul.f32 %v1429, %v1229
      %v1436 = vmul.f32 %v1429, %v1412
      %v1437 = vmul.f32 %v1429, %v1230
      %v1438 = vmul.f32 %v1429, %v1413
      %v1439 = vmul.f32 %v1429, %v1231
      %v1440 = vmul.f32 %v1429, %v1414
      %v1441 = vmul.f32 %v1429, %v1232
      %v1442 = vmul.f32 %v1429, %v1415
      %v1443 = vmul.f32 %v1429, %v1233
      %v1444 = vmul.f32 %v1429, %v1416
      %v1445 = vmul.f32 %v1429, %v1234
      %v1446 = vmul.f32 %v1429, %v1417
      %v1447 = vmul.f32 %v1429, %v1235
      %v1448 = vmul.f32 %v1429, %v1418
      %v1449 = vmul.f32 %v1429, %v1236
      %v1450 = vmul.f32 %v1429, %v1419
      %v1451 = vmul.f32 %v1429, %v1237
      %v1452 = vmul.f32 %v1429, %v1420
      %v1453 = vmul.f32 %v1429, %v1238
      %v1454 = vmul.f32 %v1429, %v1421
      %v1455 = vmul.f32 %v1429, %v1239
      %v1456 = vmul.f32 %v1429, %v1422
      %v1457 = vmul.f32 %v1429, %v1240
      %v1458 = vmul.f32 %v1429, %v1423
      %v1459 = vmul.f32 %v1429, %v1241
      %v1460 = vmul.f32 %v1429, %v1424
      %v1461 = vmul.f32 %v1429, %v1242
      %vm1494 = vcmask 1045504
      %v1495 = vrot.slane %v1430, 2
      %v1496 = vrot.slane %v1431, 2
      %v1497 = vsel %vm1494, %v1495, %v1496
      %v1498 = vrot.slane %v1432, 2
      %v1499 = vrot.slane %v1433, 2
      %v1500 = vsel %vm1494, %v1498, %v1499
      %v1501 = vrot.slane %v1434, 2
      %v1502 = vrot.slane %v1435, 2
      %v1503 = vsel %vm1494, %v1501, %v1502
      %v1504 = vrot.slane %v1436, 2
      %v1505 = vrot.slane %v1437, 2
      %v1506 = vsel %vm1494, %v1504, %v1505
      %v1507 = vrot.slane %v1438, 2
      %v1508 = vrot.slane %v1439, 2
      %v1509 = vsel %vm1494, %v1507, %v1508
      %v1510 = vrot.slane %v1440, 2
      %v1511 = vrot.slane %v1441, 2
      %v1512 = vsel %vm1494, %v1510, %v1511
      %v1513 = vrot.slane %v1442, 2
      %v1514 = vrot.slane %v1443, 2
      %v1515 = vsel %vm1494, %v1513, %v1514
      %v1516 = vrot.slane %v1444, 2
      %v1517 = vrot.slane %v1445, 2
      %v1518 = vsel %vm1494, %v1516, %v1517
      %v1519 = vrot.slane %v1446, 2
      %v1520 = vrot.slane %v1447, 2
      %v1521 = vsel %vm1494, %v1519, %v1520
      %v1522 = vrot.slane %v1448, 2
      %v1523 = vrot.slane %v1449, 2
      %v1524 = vsel %vm1494, %v1522, %v1523
      %v1525 = vrot.slane %v1450, 2
      %v1526 = vrot.slane %v1451, 2
      %v1527 = vsel %vm1494, %v1525, %v1526
      %v1528 = vrot.slane %v1452, 2
      %v1529 = vrot.slane %v1453, 2
      %v1530 = vsel %vm1494, %v1528, %v1529
      %v1531 = vrot.slane %v1454, 2
      %v1532 = vrot.slane %v1455, 2
      %v1533 = vsel %vm1494, %v1531, %v1532
      %v1534 = vrot.slane %v1456, 2
      %v1535 = vrot.slane %v1457, 2
      %v1536 = vsel %vm1494, %v1534, %v1535
      %v1537 = vrot.slane %v1458, 2
      %v1538 = vrot.slane %v1459, 2
      %v1539 = vsel %vm1494, %v1537, %v1538
      %v1540 = vrot.slane %v1460, 2
      %v1541 = vrot.slane %v1461, 2
      %v1542 = vsel %vm1494, %v1540, %v1541
      %v1559 = vadd.f32 %v1377, %v1497
      %v1560 = vadd.f32 %v1378, %v1500
      %v1561 = vadd.f32 %v1379, %v1503
      %v1562 = vadd.f32 %v1380, %v1506
      %v1563 = vadd.f32 %v1381, %v1509
      %v1564 = vadd.f32 %v1382, %v1512
      %v1565 = vadd.f32 %v1383, %v1515
      %v1566 = vadd.f32 %v1384, %v1518
      %v1567 = vadd.f32 %v1385, %v1521
      %v1568 = vadd.f32 %v1386, %v1524
      %v1569 = vadd.f32 %v1387, %v1527
      %v1570 = vadd.f32 %v1388, %v1530
      %v1571 = vadd.f32 %v1389, %v1533
      %v1572 = vadd.f32 %v1390, %v1536
      %v1573 = vadd.f32 %v1391, %v1539
      %v1574 = vadd.f32 %v1392, %v1542
      %v1575 = vld [vmem:[%s1038] sm:$0xf]
      %v1576 = vld [vmem:[%s1038 + $0x8] sm:$0xf]
      %v1577 = vld [vmem:[%s1038 + $0x10] sm:$0xf]
      %v1578 = vld [vmem:[%s1038 + $0x18] sm:$0xf]
      %v1579 = vld [vmem:[%s1038 + $0x20] sm:$0xf]
      %v1580 = vld [vmem:[%s1038 + $0x28] sm:$0xf]
      %v1581 = vld [vmem:[%s1038 + $0x30] sm:$0xf]
      %v1582 = vld [vmem:[%s1038 + $0x38] sm:$0xf]
      %v1583 = vld [vmem:[%s1038 + $0x50] sm:$0xf]
      %v1584 = vld [vmem:[%s1038 + $0x58] sm:$0xf]
      %v1585 = vld [vmem:[%s1038 + $0x60] sm:$0xf]
      %v1586 = vld [vmem:[%s1038 + $0x68] sm:$0xf]
      %v1587 = vld [vmem:[%s1038 + $0x70] sm:$0xf]
      %v1588 = vld [vmem:[%s1038 + $0x78] sm:$0xf]
      %v1589 = vld [vmem:[%s1038 + $0x80] sm:$0xf]
      %v1590 = vld [vmem:[%s1038 + $0x88] sm:$0xf]
      %v1591 = vunpack.c.l.bf16 %v1575
      %v1592 = vunpack.c.l.bf16 %v1576
      %v1593 = vunpack.c.l.bf16 %v1577
      %v1594 = vunpack.c.l.bf16 %v1578
      %v1595 = vunpack.c.l.bf16 %v1579
      %v1596 = vunpack.c.l.bf16 %v1580
      %v1597 = vunpack.c.l.bf16 %v1581
      %v1598 = vunpack.c.l.bf16 %v1582
      %v1599 = vunpack.c.l.bf16 %v1583
      %v1600 = vunpack.c.l.bf16 %v1584
      %v1601 = vunpack.c.l.bf16 %v1585
      %v1602 = vunpack.c.l.bf16 %v1586
      %v1603 = vunpack.c.l.bf16 %v1587
      %v1604 = vunpack.c.l.bf16 %v1588
      %v1605 = vunpack.c.l.bf16 %v1589
      %v1606 = vunpack.c.l.bf16 %v1590
      %v1607 = vld [vmem:[%s3 + $0x3] sm:$0x1]
      %v1608 = vlaneseq
      %v1609 = vshrl.u32 %v1608, 7
      %v1610 = vsub.s32 0, %v1609
      %v1611 = vrot.slane %v1607, %v1610
      %v1612 = vmul.f32 %v1611, %v1591
      %v1613 = vmul.f32 %v1611, %v1592
      %v1614 = vmul.f32 %v1611, %v1593
      %v1615 = vmul.f32 %v1611, %v1594
      %v1616 = vmul.f32 %v1611, %v1595
      %v1617 = vmul.f32 %v1611, %v1596
      %v1618 = vmul.f32 %v1611, %v1597
      %v1619 = vmul.f32 %v1611, %v1598
      %v1620 = vmul.f32 %v1611, %v1599
      %v1621 = vmul.f32 %v1611, %v1600
      %v1622 = vmul.f32 %v1611, %v1601
      %v1623 = vmul.f32 %v1611, %v1602
      %v1624 = vmul.f32 %v1611, %v1603
      %v1625 = vmul.f32 %v1611, %v1604
      %v1626 = vmul.f32 %v1611, %v1605
      %v1627 = vmul.f32 %v1611, %v1606
      %v1628 = vadd.f32 %v1559, %v1612
      %v1629 = vadd.f32 %v1560, %v1613
      %v1630 = vadd.f32 %v1561, %v1614
      %v1631 = vadd.f32 %v1562, %v1615
      %v1632 = vadd.f32 %v1563, %v1616
      %v1633 = vadd.f32 %v1564, %v1617
      %v1634 = vadd.f32 %v1565, %v1618
      %v1635 = vadd.f32 %v1566, %v1619
      %v1636 = vadd.f32 %v1567, %v1620
      %v1637 = vadd.f32 %v1568, %v1621
      %v1638 = vadd.f32 %v1569, %v1622
      %v1639 = vadd.f32 %v1570, %v1623
      %v1640 = vadd.f32 %v1571, %v1624
      %v1641 = vadd.f32 %v1572, %v1625
      %v1642 = vadd.f32 %v1573, %v1626
      %v1643 = vadd.f32 %v1574, %v1627
      %v1644 = vld [vmem:[%s1038 + $0x4] sm:$0x1]
      %v1645 = vld [vmem:[%s1038 + $0xc] sm:$0x1]
      %v1646 = vld [vmem:[%s1038 + $0x14] sm:$0x1]
      %v1647 = vld [vmem:[%s1038 + $0x1c] sm:$0x1]
      %v1648 = vld [vmem:[%s1038 + $0x24] sm:$0x1]
      %v1649 = vld [vmem:[%s1038 + $0x2c] sm:$0x1]
      %v1650 = vld [vmem:[%s1038 + $0x34] sm:$0x1]
      %v1651 = vld [vmem:[%s1038 + $0x3c] sm:$0x1]
      %v1652 = vld [vmem:[%s1038 + $0x54] sm:$0x1]
      %v1653 = vld [vmem:[%s1038 + $0x5c] sm:$0x1]
      %v1654 = vld [vmem:[%s1038 + $0x64] sm:$0x1]
      %v1655 = vld [vmem:[%s1038 + $0x6c] sm:$0x1]
      %v1656 = vld [vmem:[%s1038 + $0x74] sm:$0x1]
      %v1657 = vld [vmem:[%s1038 + $0x7c] sm:$0x1]
      %v1658 = vld [vmem:[%s1038 + $0x84] sm:$0x1]
      %v1659 = vld [vmem:[%s1038 + $0x8c] sm:$0x1]
      %v1660 = vunpack.c.l.bf16 %v1644
      %v1661 = vunpack.c.l.bf16 %v1645
      %v1662 = vunpack.c.l.bf16 %v1646
      %v1663 = vunpack.c.l.bf16 %v1647
      %v1664 = vunpack.c.l.bf16 %v1648
      %v1665 = vunpack.c.l.bf16 %v1649
      %v1666 = vunpack.c.l.bf16 %v1650
      %v1667 = vunpack.c.l.bf16 %v1651
      %v1668 = vunpack.c.l.bf16 %v1652
      %v1669 = vunpack.c.l.bf16 %v1653
      %v1670 = vunpack.c.l.bf16 %v1654
      %v1671 = vunpack.c.l.bf16 %v1655
      %v1672 = vunpack.c.l.bf16 %v1656
      %v1673 = vunpack.c.l.bf16 %v1657
      %v1674 = vunpack.c.l.bf16 %v1658
      %v1675 = vunpack.c.l.bf16 %v1659
      %v1676 = vld [vmem:[%s3 + $0x4] sm:$0x1]
      %v1677 = vlaneseq
      %v1678 = vshrl.u32 %v1677, 7
      %v1679 = vsub.s32 0, %v1678
      %v1680 = vrot.slane %v1676, %v1679
      %v1681 = vmul.f32 %v1680, %v1591
      %v1682 = vmul.f32 %v1680, %v1660
      %v1683 = vmul.f32 %v1680, %v1592
      %v1684 = vmul.f32 %v1680, %v1661
      %v1685 = vmul.f32 %v1680, %v1593
      %v1686 = vmul.f32 %v1680, %v1662
      %v1687 = vmul.f32 %v1680, %v1594
      %v1688 = vmul.f32 %v1680, %v1663
      %v1689 = vmul.f32 %v1680, %v1595
      %v1690 = vmul.f32 %v1680, %v1664
      %v1691 = vmul.f32 %v1680, %v1596
      %v1692 = vmul.f32 %v1680, %v1665
      %v1693 = vmul.f32 %v1680, %v1597
      %v1694 = vmul.f32 %v1680, %v1666
      %v1695 = vmul.f32 %v1680, %v1598
      %v1696 = vmul.f32 %v1680, %v1667
      %v1697 = vmul.f32 %v1680, %v1599
      %v1698 = vmul.f32 %v1680, %v1668
      %v1699 = vmul.f32 %v1680, %v1600
      %v1700 = vmul.f32 %v1680, %v1669
      %v1701 = vmul.f32 %v1680, %v1601
      %v1702 = vmul.f32 %v1680, %v1670
      %v1703 = vmul.f32 %v1680, %v1602
      %v1704 = vmul.f32 %v1680, %v1671
      %v1705 = vmul.f32 %v1680, %v1603
      %v1706 = vmul.f32 %v1680, %v1672
      %v1707 = vmul.f32 %v1680, %v1604
      %v1708 = vmul.f32 %v1680, %v1673
      %v1709 = vmul.f32 %v1680, %v1605
      %v1710 = vmul.f32 %v1680, %v1674
      %v1711 = vmul.f32 %v1680, %v1606
      %v1712 = vmul.f32 %v1680, %v1675
      %v1745 = vrot.slane %v1681, 1
      %v1746 = vrot.slane %v1682, 1
      %v1747 = vsel %vm1312, %v1745, %v1746
      %v1748 = vrot.slane %v1683, 1
      %v1749 = vrot.slane %v1684, 1
      %v1750 = vsel %vm1312, %v1748, %v1749
      %v1751 = vrot.slane %v1685, 1
      %v1752 = vrot.slane %v1686, 1
      %v1753 = vsel %vm1312, %v1751, %v1752
      %v1754 = vrot.slane %v1687, 1
      %v1755 = vrot.slane %v1688, 1
      %v1756 = vsel %vm1312, %v1754, %v1755
      %v1757 = vrot.slane %v1689, 1
      %v1758 = vrot.slane %v1690, 1
      %v1759 = vsel %vm1312, %v1757, %v1758
      %v1760 = vrot.slane %v1691, 1
      %v1761 = vrot.slane %v1692, 1
      %v1762 = vsel %vm1312, %v1760, %v1761
      %v1763 = vrot.slane %v1693, 1
      %v1764 = vrot.slane %v1694, 1
      %v1765 = vsel %vm1312, %v1763, %v1764
      %v1766 = vrot.slane %v1695, 1
      %v1767 = vrot.slane %v1696, 1
      %v1768 = vsel %vm1312, %v1766, %v1767
      %v1769 = vrot.slane %v1697, 1
      %v1770 = vrot.slane %v1698, 1
      %v1771 = vsel %vm1312, %v1769, %v1770
      %v1772 = vrot.slane %v1699, 1
      %v1773 = vrot.slane %v1700, 1
      %v1774 = vsel %vm1312, %v1772, %v1773
      %v1775 = vrot.slane %v1701, 1
      %v1776 = vrot.slane %v1702, 1
      %v1777 = vsel %vm1312, %v1775, %v1776
      %v1778 = vrot.slane %v1703, 1
      %v1779 = vrot.slane %v1704, 1
      %v1780 = vsel %vm1312, %v1778, %v1779
      %v1781 = vrot.slane %v1705, 1
      %v1782 = vrot.slane %v1706, 1
      %v1783 = vsel %vm1312, %v1781, %v1782
      %v1784 = vrot.slane %v1707, 1
      %v1785 = vrot.slane %v1708, 1
      %v1786 = vsel %vm1312, %v1784, %v1785
      %v1787 = vrot.slane %v1709, 1
      %v1788 = vrot.slane %v1710, 1
      %v1789 = vsel %vm1312, %v1787, %v1788
      %v1790 = vrot.slane %v1711, 1
      %v1791 = vrot.slane %v1712, 1
      %v1792 = vsel %vm1312, %v1790, %v1791
      %v1809 = vadd.f32 %v1628, %v1747
      %v1810 = vadd.f32 %v1629, %v1750
      %v1811 = vadd.f32 %v1630, %v1753
      %v1812 = vadd.f32 %v1631, %v1756
      %v1813 = vadd.f32 %v1632, %v1759
      %v1814 = vadd.f32 %v1633, %v1762
      %v1815 = vadd.f32 %v1634, %v1765
      %v1816 = vadd.f32 %v1635, %v1768
      %v1817 = vadd.f32 %v1636, %v1771
      %v1818 = vadd.f32 %v1637, %v1774
      %v1819 = vadd.f32 %v1638, %v1777
      %v1820 = vadd.f32 %v1639, %v1780
      %v1821 = vadd.f32 %v1640, %v1783
      %v1822 = vadd.f32 %v1641, %v1786
      %v1823 = vadd.f32 %v1642, %v1789
      %v1824 = vadd.f32 %v1643, %v1792
      %v1825 = vld [vmem:[%s1038] sm:$0xe]
      %v1826 = vld [vmem:[%s1038 + $0x8] sm:$0xe]
      %v1827 = vld [vmem:[%s1038 + $0x10] sm:$0xe]
      %v1828 = vld [vmem:[%s1038 + $0x18] sm:$0xe]
      %v1829 = vld [vmem:[%s1038 + $0x20] sm:$0xe]
      %v1830 = vld [vmem:[%s1038 + $0x28] sm:$0xe]
      %v1831 = vld [vmem:[%s1038 + $0x30] sm:$0xe]
      %v1832 = vld [vmem:[%s1038 + $0x38] sm:$0xe]
      %v1833 = vld [vmem:[%s1038 + $0x50] sm:$0xe]
      %v1834 = vld [vmem:[%s1038 + $0x58] sm:$0xe]
      %v1835 = vld [vmem:[%s1038 + $0x60] sm:$0xe]
      %v1836 = vld [vmem:[%s1038 + $0x68] sm:$0xe]
      %v1837 = vld [vmem:[%s1038 + $0x70] sm:$0xe]
      %v1838 = vld [vmem:[%s1038 + $0x78] sm:$0xe]
      %v1839 = vld [vmem:[%s1038 + $0x80] sm:$0xe]
      %v1840 = vld [vmem:[%s1038 + $0x88] sm:$0xe]
      %v1841 = vunpack.c.l.bf16 %v1825
      %v1842 = vunpack.c.l.bf16 %v1826
      %v1843 = vunpack.c.l.bf16 %v1827
      %v1844 = vunpack.c.l.bf16 %v1828
      %v1845 = vunpack.c.l.bf16 %v1829
      %v1846 = vunpack.c.l.bf16 %v1830
      %v1847 = vunpack.c.l.bf16 %v1831
      %v1848 = vunpack.c.l.bf16 %v1832
      %v1849 = vunpack.c.l.bf16 %v1833
      %v1850 = vunpack.c.l.bf16 %v1834
      %v1851 = vunpack.c.l.bf16 %v1835
      %v1852 = vunpack.c.l.bf16 %v1836
      %v1853 = vunpack.c.l.bf16 %v1837
      %v1854 = vunpack.c.l.bf16 %v1838
      %v1855 = vunpack.c.l.bf16 %v1839
      %v1856 = vunpack.c.l.bf16 %v1840
      %v1857 = vld [vmem:[%s3 + $0x5] sm:$0x1]
      %v1858 = vlaneseq
      %v1859 = vshrl.u32 %v1858, 7
      %v1860 = vsub.s32 0, %v1859
      %v1861 = vrot.slane %v1857, %v1860
      %v1862 = vmul.f32 %v1861, %v1841
      %v1863 = vmul.f32 %v1861, %v1660
      %v1864 = vmul.f32 %v1861, %v1842
      %v1865 = vmul.f32 %v1861, %v1661
      %v1866 = vmul.f32 %v1861, %v1843
      %v1867 = vmul.f32 %v1861, %v1662
      %v1868 = vmul.f32 %v1861, %v1844
      %v1869 = vmul.f32 %v1861, %v1663
      %v1870 = vmul.f32 %v1861, %v1845
      %v1871 = vmul.f32 %v1861, %v1664
      %v1872 = vmul.f32 %v1861, %v1846
      %v1873 = vmul.f32 %v1861, %v1665
      %v1874 = vmul.f32 %v1861, %v1847
      %v1875 = vmul.f32 %v1861, %v1666
      %v1876 = vmul.f32 %v1861, %v1848
      %v1877 = vmul.f32 %v1861, %v1667
      %v1878 = vmul.f32 %v1861, %v1849
      %v1879 = vmul.f32 %v1861, %v1668
      %v1880 = vmul.f32 %v1861, %v1850
      %v1881 = vmul.f32 %v1861, %v1669
      %v1882 = vmul.f32 %v1861, %v1851
      %v1883 = vmul.f32 %v1861, %v1670
      %v1884 = vmul.f32 %v1861, %v1852
      %v1885 = vmul.f32 %v1861, %v1671
      %v1886 = vmul.f32 %v1861, %v1853
      %v1887 = vmul.f32 %v1861, %v1672
      %v1888 = vmul.f32 %v1861, %v1854
      %v1889 = vmul.f32 %v1861, %v1673
      %v1890 = vmul.f32 %v1861, %v1855
      %v1891 = vmul.f32 %v1861, %v1674
      %v1892 = vmul.f32 %v1861, %v1856
      %v1893 = vmul.f32 %v1861, %v1675
      %v1926 = vrot.slane %v1862, 2
      %v1927 = vrot.slane %v1863, 2
      %v1928 = vsel %vm1494, %v1926, %v1927
      %v1929 = vrot.slane %v1864, 2
      %v1930 = vrot.slane %v1865, 2
      %v1931 = vsel %vm1494, %v1929, %v1930
      %v1932 = vrot.slane %v1866, 2
      %v1933 = vrot.slane %v1867, 2
      %v1934 = vsel %vm1494, %v1932, %v1933
      %v1935 = vrot.slane %v1868, 2
      %v1936 = vrot.slane %v1869, 2
      %v1937 = vsel %vm1494, %v1935, %v1936
      %v1938 = vrot.slane %v1870, 2
      %v1939 = vrot.slane %v1871, 2
      %v1940 = vsel %vm1494, %v1938, %v1939
      %v1941 = vrot.slane %v1872, 2
      %v1942 = vrot.slane %v1873, 2
      %v1943 = vsel %vm1494, %v1941, %v1942
      %v1944 = vrot.slane %v1874, 2
      %v1945 = vrot.slane %v1875, 2
      %v1946 = vsel %vm1494, %v1944, %v1945
      %v1947 = vrot.slane %v1876, 2
      %v1948 = vrot.slane %v1877, 2
      %v1949 = vsel %vm1494, %v1947, %v1948
      %v1950 = vrot.slane %v1878, 2
      %v1951 = vrot.slane %v1879, 2
      %v1952 = vsel %vm1494, %v1950, %v1951
      %v1953 = vrot.slane %v1880, 2
      %v1954 = vrot.slane %v1881, 2
      %v1955 = vsel %vm1494, %v1953, %v1954
      %v1956 = vrot.slane %v1882, 2
      %v1957 = vrot.slane %v1883, 2
      %v1958 = vsel %vm1494, %v1956, %v1957
      %v1959 = vrot.slane %v1884, 2
      %v1960 = vrot.slane %v1885, 2
      %v1961 = vsel %vm1494, %v1959, %v1960
      %v1962 = vrot.slane %v1886, 2
      %v1963 = vrot.slane %v1887, 2
      %v1964 = vsel %vm1494, %v1962, %v1963
      %v1965 = vrot.slane %v1888, 2
      %v1966 = vrot.slane %v1889, 2
      %v1967 = vsel %vm1494, %v1965, %v1966
      %v1968 = vrot.slane %v1890, 2
      %v1969 = vrot.slane %v1891, 2
      %v1970 = vsel %vm1494, %v1968, %v1969
      %v1971 = vrot.slane %v1892, 2
      %v1972 = vrot.slane %v1893, 2
      %v1973 = vsel %vm1494, %v1971, %v1972
      %v1990 = vadd.f32 %v1809, %v1928
      %v1991 = vadd.f32 %v1810, %v1931
      %v1992 = vadd.f32 %v1811, %v1934
      %v1993 = vadd.f32 %v1812, %v1937
      %v1994 = vadd.f32 %v1813, %v1940
      %v1995 = vadd.f32 %v1814, %v1943
      %v1996 = vadd.f32 %v1815, %v1946
      %v1997 = vadd.f32 %v1816, %v1949
      %v1998 = vadd.f32 %v1817, %v1952
      %v1999 = vadd.f32 %v1818, %v1955
      %v2000 = vadd.f32 %v1819, %v1958
      %v2001 = vadd.f32 %v1820, %v1961
      %v2002 = vadd.f32 %v1821, %v1964
      %v2003 = vadd.f32 %v1822, %v1967
      %v2004 = vadd.f32 %v1823, %v1970
      %v2005 = vadd.f32 %v1824, %v1973
      %s2006 = scalar_lea.vmem [#allocation2], 16
      %v2007 = vld [vmem:[%s2006] sm:$0xf]
      %v2008 = vld [vmem:[%s2006 + $0x8] sm:$0xf]
      %v2009 = vld [vmem:[%s2006 + $0x10] sm:$0xf]
      %v2010 = vld [vmem:[%s2006 + $0x18] sm:$0xf]
      %v2011 = vld [vmem:[%s2006 + $0x20] sm:$0xf]
      %v2012 = vld [vmem:[%s2006 + $0x28] sm:$0xf]
      %v2013 = vld [vmem:[%s2006 + $0x30] sm:$0xf]
      %v2014 = vld [vmem:[%s2006 + $0x38] sm:$0xf]
      %v2015 = vld [vmem:[%s2006 + $0x50] sm:$0xf]
      %v2016 = vld [vmem:[%s2006 + $0x58] sm:$0xf]
      %v2017 = vld [vmem:[%s2006 + $0x60] sm:$0xf]
      %v2018 = vld [vmem:[%s2006 + $0x68] sm:$0xf]
      %v2019 = vld [vmem:[%s2006 + $0x70] sm:$0xf]
      %v2020 = vld [vmem:[%s2006 + $0x78] sm:$0xf]
      %v2021 = vld [vmem:[%s2006 + $0x80] sm:$0xf]
      %v2022 = vld [vmem:[%s2006 + $0x88] sm:$0xf]
      %v2023 = vunpack.c.l.bf16 %v2007
      %v2024 = vunpack.c.l.bf16 %v2008
      %v2025 = vunpack.c.l.bf16 %v2009
      %v2026 = vunpack.c.l.bf16 %v2010
      %v2027 = vunpack.c.l.bf16 %v2011
      %v2028 = vunpack.c.l.bf16 %v2012
      %v2029 = vunpack.c.l.bf16 %v2013
      %v2030 = vunpack.c.l.bf16 %v2014
      %v2031 = vunpack.c.l.bf16 %v2015
      %v2032 = vunpack.c.l.bf16 %v2016
      %v2033 = vunpack.c.l.bf16 %v2017
      %v2034 = vunpack.c.l.bf16 %v2018
      %v2035 = vunpack.c.l.bf16 %v2019
      %v2036 = vunpack.c.l.bf16 %v2020
      %v2037 = vunpack.c.l.bf16 %v2021
      %v2038 = vunpack.c.l.bf16 %v2022
      %v2039 = vld [vmem:[%s3 + $0x6] sm:$0x1]
      %v2040 = vlaneseq
      %v2041 = vshrl.u32 %v2040, 7
      %v2042 = vsub.s32 0, %v2041
      %v2043 = vrot.slane %v2039, %v2042
      %v2044 = vmul.f32 %v2043, %v2023
      %v2045 = vmul.f32 %v2043, %v2024
      %v2046 = vmul.f32 %v2043, %v2025
      %v2047 = vmul.f32 %v2043, %v2026
      %v2048 = vmul.f32 %v2043, %v2027
      %v2049 = vmul.f32 %v2043, %v2028
      %v2050 = vmul.f32 %v2043, %v2029
      %v2051 = vmul.f32 %v2043, %v2030
      %v2052 = vmul.f32 %v2043, %v2031
      %v2053 = vmul.f32 %v2043, %v2032
      %v2054 = vmul.f32 %v2043, %v2033
      %v2055 = vmul.f32 %v2043, %v2034
      %v2056 = vmul.f32 %v2043, %v2035
      %v2057 = vmul.f32 %v2043, %v2036
      %v2058 = vmul.f32 %v2043, %v2037
      %v2059 = vmul.f32 %v2043, %v2038
      %v2060 = vadd.f32 %v1990, %v2044
      %v2061 = vadd.f32 %v1991, %v2045
      %v2062 = vadd.f32 %v1992, %v2046
      %v2063 = vadd.f32 %v1993, %v2047
      %v2064 = vadd.f32 %v1994, %v2048
      %v2065 = vadd.f32 %v1995, %v2049
      %v2066 = vadd.f32 %v1996, %v2050
      %v2067 = vadd.f32 %v1997, %v2051
      %v2068 = vadd.f32 %v1998, %v2052
      %v2069 = vadd.f32 %v1999, %v2053
      %v2070 = vadd.f32 %v2000, %v2054
      %v2071 = vadd.f32 %v2001, %v2055
      %v2072 = vadd.f32 %v2002, %v2056
      %v2073 = vadd.f32 %v2003, %v2057
      %v2074 = vadd.f32 %v2004, %v2058
      %v2075 = vadd.f32 %v2005, %v2059
      %v2076 = vld [vmem:[%s2006 + $0x4] sm:$0x1]
      %v2077 = vld [vmem:[%s2006 + $0xc] sm:$0x1]
      %v2078 = vld [vmem:[%s2006 + $0x14] sm:$0x1]
      %v2079 = vld [vmem:[%s2006 + $0x1c] sm:$0x1]
      %v2080 = vld [vmem:[%s2006 + $0x24] sm:$0x1]
      %v2081 = vld [vmem:[%s2006 + $0x2c] sm:$0x1]
      %v2082 = vld [vmem:[%s2006 + $0x34] sm:$0x1]
      %v2083 = vld [vmem:[%s2006 + $0x3c] sm:$0x1]
      %v2084 = vld [vmem:[%s2006 + $0x54] sm:$0x1]
      %v2085 = vld [vmem:[%s2006 + $0x5c] sm:$0x1]
      %v2086 = vld [vmem:[%s2006 + $0x64] sm:$0x1]
      %v2087 = vld [vmem:[%s2006 + $0x6c] sm:$0x1]
      %v2088 = vld [vmem:[%s2006 + $0x74] sm:$0x1]
      %v2089 = vld [vmem:[%s2006 + $0x7c] sm:$0x1]
      %v2090 = vld [vmem:[%s2006 + $0x84] sm:$0x1]
      %v2091 = vld [vmem:[%s2006 + $0x8c] sm:$0x1]
      %v2092 = vunpack.c.l.bf16 %v2076
      %v2093 = vunpack.c.l.bf16 %v2077
      %v2094 = vunpack.c.l.bf16 %v2078
      %v2095 = vunpack.c.l.bf16 %v2079
      %v2096 = vunpack.c.l.bf16 %v2080
      %v2097 = vunpack.c.l.bf16 %v2081
      %v2098 = vunpack.c.l.bf16 %v2082
      %v2099 = vunpack.c.l.bf16 %v2083
      %v2100 = vunpack.c.l.bf16 %v2084
      %v2101 = vunpack.c.l.bf16 %v2085
      %v2102 = vunpack.c.l.bf16 %v2086
      %v2103 = vunpack.c.l.bf16 %v2087
      %v2104 = vunpack.c.l.bf16 %v2088
      %v2105 = vunpack.c.l.bf16 %v2089
      %v2106 = vunpack.c.l.bf16 %v2090
      %v2107 = vunpack.c.l.bf16 %v2091
      %v2108 = vld [vmem:[%s3 + $0x7] sm:$0x1]
      %v2109 = vlaneseq
      %v2110 = vshrl.u32 %v2109, 7
      %v2111 = vsub.s32 0, %v2110
      %v2112 = vrot.slane %v2108, %v2111
      %v2113 = vmul.f32 %v2112, %v2023
      %v2114 = vmul.f32 %v2112, %v2092
      %v2115 = vmul.f32 %v2112, %v2024
      %v2116 = vmul.f32 %v2112, %v2093
      %v2117 = vmul.f32 %v2112, %v2025
      %v2118 = vmul.f32 %v2112, %v2094
      %v2119 = vmul.f32 %v2112, %v2026
      %v2120 = vmul.f32 %v2112, %v2095
      %v2121 = vmul.f32 %v2112, %v2027
      %v2122 = vmul.f32 %v2112, %v2096
      %v2123 = vmul.f32 %v2112, %v2028
      %v2124 = vmul.f32 %v2112, %v2097
      %v2125 = vmul.f32 %v2112, %v2029
      %v2126 = vmul.f32 %v2112, %v2098
      %v2127 = vmul.f32 %v2112, %v2030
      %v2128 = vmul.f32 %v2112, %v2099
      %v2129 = vmul.f32 %v2112, %v2031
      %v2130 = vmul.f32 %v2112, %v2100
      %v2131 = vmul.f32 %v2112, %v2032
      %v2132 = vmul.f32 %v2112, %v2101
      %v2133 = vmul.f32 %v2112, %v2033
      %v2134 = vmul.f32 %v2112, %v2102
      %v2135 = vmul.f32 %v2112, %v2034
      %v2136 = vmul.f32 %v2112, %v2103
      %v2137 = vmul.f32 %v2112, %v2035
      %v2138 = vmul.f32 %v2112, %v2104
      %v2139 = vmul.f32 %v2112, %v2036
      %v2140 = vmul.f32 %v2112, %v2105
      %v2141 = vmul.f32 %v2112, %v2037
      %v2142 = vmul.f32 %v2112, %v2106
      %v2143 = vmul.f32 %v2112, %v2038
      %v2144 = vmul.f32 %v2112, %v2107
      %v2177 = vrot.slane %v2113, 1
      %v2178 = vrot.slane %v2114, 1
      %v2179 = vsel %vm1312, %v2177, %v2178
      %v2180 = vrot.slane %v2115, 1
      %v2181 = vrot.slane %v2116, 1
      %v2182 = vsel %vm1312, %v2180, %v2181
      %v2183 = vrot.slane %v2117, 1
      %v2184 = vrot.slane %v2118, 1
      %v2185 = vsel %vm1312, %v2183, %v2184
      %v2186 = vrot.slane %v2119, 1
      %v2187 = vrot.slane %v2120, 1
      %v2188 = vsel %vm1312, %v2186, %v2187
      %v2189 = vrot.slane %v2121, 1
      %v2190 = vrot.slane %v2122, 1
      %v2191 = vsel %vm1312, %v2189, %v2190
      %v2192 = vrot.slane %v2123, 1
      %v2193 = vrot.slane %v2124, 1
      %v2194 = vsel %vm1312, %v2192, %v2193
      %v2195 = vrot.slane %v2125, 1
      %v2196 = vrot.slane %v2126, 1
      %v2197 = vsel %vm1312, %v2195, %v2196
      %v2198 = vrot.slane %v2127, 1
      %v2199 = vrot.slane %v2128, 1
      %v2200 = vsel %vm1312, %v2198, %v2199
      %v2201 = vrot.slane %v2129, 1
      %v2202 = vrot.slane %v2130, 1
      %v2203 = vsel %vm1312, %v2201, %v2202
      %v2204 = vrot.slane %v2131, 1
      %v2205 = vrot.slane %v2132, 1
      %v2206 = vsel %vm1312, %v2204, %v2205
      %v2207 = vrot.slane %v2133, 1
      %v2208 = vrot.slane %v2134, 1
      %v2209 = vsel %vm1312, %v2207, %v2208
      %v2210 = vrot.slane %v2135, 1
      %v2211 = vrot.slane %v2136, 1
      %v2212 = vsel %vm1312, %v2210, %v2211
      %v2213 = vrot.slane %v2137, 1
      %v2214 = vrot.slane %v2138, 1
      %v2215 = vsel %vm1312, %v2213, %v2214
      %v2216 = vrot.slane %v2139, 1
      %v2217 = vrot.slane %v2140, 1
      %v2218 = vsel %vm1312, %v2216, %v2217
      %v2219 = vrot.slane %v2141, 1
      %v2220 = vrot.slane %v2142, 1
      %v2221 = vsel %vm1312, %v2219, %v2220
      %v2222 = vrot.slane %v2143, 1
      %v2223 = vrot.slane %v2144, 1
      %v2224 = vsel %vm1312, %v2222, %v2223
      %v2241 = vadd.f32 %v2060, %v2179
      %v2242 = vadd.f32 %v2061, %v2182
      %v2243 = vadd.f32 %v2062, %v2185
      %v2244 = vadd.f32 %v2063, %v2188
      %v2245 = vadd.f32 %v2064, %v2191
      %v2246 = vadd.f32 %v2065, %v2194
      %v2247 = vadd.f32 %v2066, %v2197
      %v2248 = vadd.f32 %v2067, %v2200
      %v2249 = vadd.f32 %v2068, %v2203
      %v2250 = vadd.f32 %v2069, %v2206
      %v2251 = vadd.f32 %v2070, %v2209
      %v2252 = vadd.f32 %v2071, %v2212
      %v2253 = vadd.f32 %v2072, %v2215
      %v2254 = vadd.f32 %v2073, %v2218
      %v2255 = vadd.f32 %v2074, %v2221
      %v2256 = vadd.f32 %v2075, %v2224
      %v2257 = vld [vmem:[%s2006] sm:$0xe]
      %v2258 = vld [vmem:[%s2006 + $0x8] sm:$0xe]
      %v2259 = vld [vmem:[%s2006 + $0x10] sm:$0xe]
      %v2260 = vld [vmem:[%s2006 + $0x18] sm:$0xe]
      %v2261 = vld [vmem:[%s2006 + $0x20] sm:$0xe]
      %v2262 = vld [vmem:[%s2006 + $0x28] sm:$0xe]
      %v2263 = vld [vmem:[%s2006 + $0x30] sm:$0xe]
      %v2264 = vld [vmem:[%s2006 + $0x38] sm:$0xe]
      %v2265 = vld [vmem:[%s2006 + $0x50] sm:$0xe]
      %v2266 = vld [vmem:[%s2006 + $0x58] sm:$0xe]
      %v2267 = vld [vmem:[%s2006 + $0x60] sm:$0xe]
      %v2268 = vld [vmem:[%s2006 + $0x68] sm:$0xe]
      %v2269 = vld [vmem:[%s2006 + $0x70] sm:$0xe]
      %v2270 = vld [vmem:[%s2006 + $0x78] sm:$0xe]
      %v2271 = vld [vmem:[%s2006 + $0x80] sm:$0xe]
      %v2272 = vld [vmem:[%s2006 + $0x88] sm:$0xe]
      %v2273 = vunpack.c.l.bf16 %v2257
      %v2274 = vunpack.c.l.bf16 %v2258
      %v2275 = vunpack.c.l.bf16 %v2259
      %v2276 = vunpack.c.l.bf16 %v2260
      %v2277 = vunpack.c.l.bf16 %v2261
      %v2278 = vunpack.c.l.bf16 %v2262
      %v2279 = vunpack.c.l.bf16 %v2263
      %v2280 = vunpack.c.l.bf16 %v2264
      %v2281 = vunpack.c.l.bf16 %v2265
      %v2282 = vunpack.c.l.bf16 %v2266
      %v2283 = vunpack.c.l.bf16 %v2267
      %v2284 = vunpack.c.l.bf16 %v2268
      %v2285 = vunpack.c.l.bf16 %v2269
      %v2286 = vunpack.c.l.bf16 %v2270
      %v2287 = vunpack.c.l.bf16 %v2271
      %v2288 = vunpack.c.l.bf16 %v2272
      %v2289 = vld [vmem:[%s3 + $0x8] sm:$0x1]
      %v2290 = vlaneseq
      %v2291 = vshrl.u32 %v2290, 7
      %v2292 = vsub.s32 0, %v2291
      %v2293 = vrot.slane %v2289, %v2292
      %v2294 = vmul.f32 %v2293, %v2273
      %v2295 = vmul.f32 %v2293, %v2092
      %v2296 = vmul.f32 %v2293, %v2274
      %v2297 = vmul.f32 %v2293, %v2093
      %v2298 = vmul.f32 %v2293, %v2275
      %v2299 = vmul.f32 %v2293, %v2094
      %v2300 = vmul.f32 %v2293, %v2276
      %v2301 = vmul.f32 %v2293, %v2095
      %v2302 = vmul.f32 %v2293, %v2277
      %v2303 = vmul.f32 %v2293, %v2096
      %v2304 = vmul.f32 %v2293, %v2278
      %v2305 = vmul.f32 %v2293, %v2097
      %v2306 = vmul.f32 %v2293, %v2279
      %v2307 = vmul.f32 %v2293, %v2098
      %v2308 = vmul.f32 %v2293, %v2280
      %v2309 = vmul.f32 %v2293, %v2099
      %v2310 = vmul.f32 %v2293, %v2281
      %v2311 = vmul.f32 %v2293, %v2100
      %v2312 = vmul.f32 %v2293, %v2282
      %v2313 = vmul.f32 %v2293, %v2101
      %v2314 = vmul.f32 %v2293, %v2283
      %v2315 = vmul.f32 %v2293, %v2102
      %v2316 = vmul.f32 %v2293, %v2284
      %v2317 = vmul.f32 %v2293, %v2103
      %v2318 = vmul.f32 %v2293, %v2285
      %v2319 = vmul.f32 %v2293, %v2104
      %v2320 = vmul.f32 %v2293, %v2286
      %v2321 = vmul.f32 %v2293, %v2105
      %v2322 = vmul.f32 %v2293, %v2287
      %v2323 = vmul.f32 %v2293, %v2106
      %v2324 = vmul.f32 %v2293, %v2288
      %v2325 = vmul.f32 %v2293, %v2107
      %v2358 = vrot.slane %v2294, 2
      %v2359 = vrot.slane %v2295, 2
      %v2360 = vsel %vm1494, %v2358, %v2359
      %v2361 = vrot.slane %v2296, 2
      %v2362 = vrot.slane %v2297, 2
      %v2363 = vsel %vm1494, %v2361, %v2362
      %v2364 = vrot.slane %v2298, 2
      %v2365 = vrot.slane %v2299, 2
      %v2366 = vsel %vm1494, %v2364, %v2365
      %v2367 = vrot.slane %v2300, 2
      %v2368 = vrot.slane %v2301, 2
      %v2369 = vsel %vm1494, %v2367, %v2368
      %v2370 = vrot.slane %v2302, 2
      %v2371 = vrot.slane %v2303, 2
      %v2372 = vsel %vm1494, %v2370, %v2371
      %v2373 = vrot.slane %v2304, 2
      %v2374 = vrot.slane %v2305, 2
      %v2375 = vsel %vm1494, %v2373, %v2374
      %v2376 = vrot.slane %v2306, 2
      %v2377 = vrot.slane %v2307, 2
      %v2378 = vsel %vm1494, %v2376, %v2377
      %v2379 = vrot.slane %v2308, 2
      %v2380 = vrot.slane %v2309, 2
      %v2381 = vsel %vm1494, %v2379, %v2380
      %v2382 = vrot.slane %v2310, 2
      %v2383 = vrot.slane %v2311, 2
      %v2384 = vsel %vm1494, %v2382, %v2383
      %v2385 = vrot.slane %v2312, 2
      %v2386 = vrot.slane %v2313, 2
      %v2387 = vsel %vm1494, %v2385, %v2386
      %v2388 = vrot.slane %v2314, 2
      %v2389 = vrot.slane %v2315, 2
      %v2390 = vsel %vm1494, %v2388, %v2389
      %v2391 = vrot.slane %v2316, 2
      %v2392 = vrot.slane %v2317, 2
      %v2393 = vsel %vm1494, %v2391, %v2392
      %v2394 = vrot.slane %v2318, 2
      %v2395 = vrot.slane %v2319, 2
      %v2396 = vsel %vm1494, %v2394, %v2395
      %v2397 = vrot.slane %v2320, 2
      %v2398 = vrot.slane %v2321, 2
      %v2399 = vsel %vm1494, %v2397, %v2398
      %v2400 = vrot.slane %v2322, 2
      %v2401 = vrot.slane %v2323, 2
      %v2402 = vsel %vm1494, %v2400, %v2401
      %v2403 = vrot.slane %v2324, 2
      %v2404 = vrot.slane %v2325, 2
      %v2405 = vsel %vm1494, %v2403, %v2404
      %v2422 = vadd.f32 %v2241, %v2360
      %v2423 = vadd.f32 %v2242, %v2363
      %v2424 = vadd.f32 %v2243, %v2366
      %v2425 = vadd.f32 %v2244, %v2369
      %v2426 = vadd.f32 %v2245, %v2372
      %v2427 = vadd.f32 %v2246, %v2375
      %v2428 = vadd.f32 %v2247, %v2378
      %v2429 = vadd.f32 %v2248, %v2381
      %v2430 = vadd.f32 %v2249, %v2384
      %v2431 = vadd.f32 %v2250, %v2387
      %v2432 = vadd.f32 %v2251, %v2390
      %v2433 = vadd.f32 %v2252, %v2393
      %v2434 = vadd.f32 %v2253, %v2396
      %v2435 = vadd.f32 %v2254, %v2399
      %v2436 = vadd.f32 %v2255, %v2402
      %v2437 = vadd.f32 %v2256, %v2405
      %2438 = vadd.xlane.f32.xlu0 %v2422
      %v2439 = vpop.xlane.xlu0 %2438
      %2440 = vadd.xlane.f32.xlu0 %v2423
      %v2441 = vpop.xlane.xlu0 %2440
      %2442 = vadd.xlane.f32.xlu0 %v2424
      %v2443 = vpop.xlane.xlu0 %2442
      %2444 = vadd.xlane.f32.xlu0 %v2425
      %v2445 = vpop.xlane.xlu0 %2444
      %2446 = vadd.xlane.f32.xlu0 %v2426
      %v2447 = vpop.xlane.xlu0 %2446
      %2448 = vadd.xlane.f32.xlu0 %v2427
      %v2449 = vpop.xlane.xlu0 %2448
      %2450 = vadd.xlane.f32.xlu0 %v2428
      %v2451 = vpop.xlane.xlu0 %2450
      %2452 = vadd.xlane.f32.xlu0 %v2429
      %v2453 = vpop.xlane.xlu0 %2452
      %2454 = vadd.xlane.f32.xlu0 %v2430
      %v2455 = vpop.xlane.xlu0 %2454
      %2456 = vadd.xlane.f32.xlu0 %v2431
      %v2457 = vpop.xlane.xlu0 %2456
      %2458 = vadd.xlane.f32.xlu0 %v2432
      %v2459 = vpop.xlane.xlu0 %2458
      %2460 = vadd.xlane.f32.xlu0 %v2433
      %v2461 = vpop.xlane.xlu0 %2460
      %2462 = vadd.xlane.f32.xlu0 %v2434
      %v2463 = vpop.xlane.xlu0 %2462
      %2464 = vadd.xlane.f32.xlu0 %v2435
      %v2465 = vpop.xlane.xlu0 %2464
      %2466 = vadd.xlane.f32.xlu0 %v2436
      %v2467 = vpop.xlane.xlu0 %2466
      %2468 = vadd.xlane.f32.xlu0 %v2437
      %v2469 = vpop.xlane.xlu0 %2468
      %v2470 = vmul.f32 %v2439, 0.03125
      %v2471 = vmul.f32 %v2441, 0.03125
      %v2472 = vmul.f32 %v2443, 0.03125
      %v2473 = vmul.f32 %v2445, 0.03125
      %v2474 = vmul.f32 %v2447, 0.03125
      %v2475 = vmul.f32 %v2449, 0.03125
      %v2476 = vmul.f32 %v2451, 0.03125
      %v2477 = vmul.f32 %v2453, 0.03125
      %v2478 = vmul.f32 %v2455, 0.03125
      %v2479 = vmul.f32 %v2457, 0.03125
      %v2480 = vmul.f32 %v2459, 0.03125
      %v2481 = vmul.f32 %v2461, 0.03125
      %v2482 = vmul.f32 %v2463, 0.03125
      %v2483 = vmul.f32 %v2465, 0.03125
      %v2484 = vmul.f32 %v2467, 0.03125
      %v2485 = vmul.f32 %v2469, 0.03125
      %v2486 = vsub.f32 %v2422, %v2470
      %v2487 = vsub.f32 %v2423, %v2471
      %v2488 = vsub.f32 %v2424, %v2472
      %v2489 = vsub.f32 %v2425, %v2473
      %v2490 = vsub.f32 %v2426, %v2474
      %v2491 = vsub.f32 %v2427, %v2475
      %v2492 = vsub.f32 %v2428, %v2476
      %v2493 = vsub.f32 %v2429, %v2477
      %v2494 = vsub.f32 %v2430, %v2478
      %v2495 = vsub.f32 %v2431, %v2479
      %v2496 = vsub.f32 %v2432, %v2480
      %v2497 = vsub.f32 %v2433, %v2481
      %v2498 = vsub.f32 %v2434, %v2482
      %v2499 = vsub.f32 %v2435, %v2483
      %v2500 = vsub.f32 %v2436, %v2484
      %v2501 = vsub.f32 %v2437, %v2485
      %v2502 = vlaneseq
      %v2503 = vand.u32 %v2502, 127
      %vm2504 = vcmp.lt.s32.totalorder %v2503, 32
      %v2505 = vsel %vm2504, 1, 0
      %vm2506 = vcmp.eq.s32.totalorder %v2505, 1
      %v2507 = vsel %vm2506, %v2486, 0.0
      %v2508 = vsel %vm2506, %v2487, 0.0
      %v2509 = vsel %vm2506, %v2488, 0.0
      %v2510 = vsel %vm2506, %v2489, 0.0
      %v2511 = vsel %vm2506, %v2490, 0.0
      %v2512 = vsel %vm2506, %v2491, 0.0
      %v2513 = vsel %vm2506, %v2492, 0.0
      %v2514 = vsel %vm2506, %v2493, 0.0
      %v2515 = vsel %vm2506, %v2494, 0.0
      %v2516 = vsel %vm2506, %v2495, 0.0
      %v2517 = vsel %vm2506, %v2496, 0.0
      %v2518 = vsel %vm2506, %v2497, 0.0
      %v2519 = vsel %vm2506, %v2498, 0.0
      %v2520 = vsel %vm2506, %v2499, 0.0
      %v2521 = vsel %vm2506, %v2500, 0.0
      %v2522 = vsel %vm2506, %v2501, 0.0
      %v2523 = vmul.f32 %v2507, %v2507
      %v2524 = vmul.f32 %v2508, %v2508
      %v2525 = vmul.f32 %v2509, %v2509
      %v2526 = vmul.f32 %v2510, %v2510
      %v2527 = vmul.f32 %v2511, %v2511
      %v2528 = vmul.f32 %v2512, %v2512
      %v2529 = vmul.f32 %v2513, %v2513
      %v2530 = vmul.f32 %v2514, %v2514
      %v2531 = vmul.f32 %v2515, %v2515
      %v2532 = vmul.f32 %v2516, %v2516
      %v2533 = vmul.f32 %v2517, %v2517
      %v2534 = vmul.f32 %v2518, %v2518
      %v2535 = vmul.f32 %v2519, %v2519
      %v2536 = vmul.f32 %v2520, %v2520
      %v2537 = vmul.f32 %v2521, %v2521
      %v2538 = vmul.f32 %v2522, %v2522
      %2539 = vadd.xlane.f32.xlu0 %v2523
      %v2540 = vpop.xlane.xlu0 %2539
      %2541 = vadd.xlane.f32.xlu0 %v2524
      %v2542 = vpop.xlane.xlu0 %2541
      %2543 = vadd.xlane.f32.xlu0 %v2525
      %v2544 = vpop.xlane.xlu0 %2543
      %2545 = vadd.xlane.f32.xlu0 %v2526
      %v2546 = vpop.xlane.xlu0 %2545
      %2547 = vadd.xlane.f32.xlu0 %v2527
      %v2548 = vpop.xlane.xlu0 %2547
      %2549 = vadd.xlane.f32.xlu0 %v2528
      %v2550 = vpop.xlane.xlu0 %2549
      %2551 = vadd.xlane.f32.xlu0 %v2529
      %v2552 = vpop.xlane.xlu0 %2551
      %2553 = vadd.xlane.f32.xlu0 %v2530
      %v2554 = vpop.xlane.xlu0 %2553
      %2555 = vadd.xlane.f32.xlu0 %v2531
      %v2556 = vpop.xlane.xlu0 %2555
      %2557 = vadd.xlane.f32.xlu0 %v2532
      %v2558 = vpop.xlane.xlu0 %2557
      %2559 = vadd.xlane.f32.xlu0 %v2533
      %v2560 = vpop.xlane.xlu0 %2559
      %2561 = vadd.xlane.f32.xlu0 %v2534
      %v2562 = vpop.xlane.xlu0 %2561
      %2563 = vadd.xlane.f32.xlu0 %v2535
      %v2564 = vpop.xlane.xlu0 %2563
      %2565 = vadd.xlane.f32.xlu0 %v2536
      %v2566 = vpop.xlane.xlu0 %2565
      %2567 = vadd.xlane.f32.xlu0 %v2537
      %v2568 = vpop.xlane.xlu0 %2567
      %2569 = vadd.xlane.f32.xlu0 %v2538
      %v2570 = vpop.xlane.xlu0 %2569
      %v2571 = vmul.f32 %v2540, 0.03125
      %v2572 = vmul.f32 %v2542, 0.03125
      %v2573 = vmul.f32 %v2544, 0.03125
      %v2574 = vmul.f32 %v2546, 0.03125
      %v2575 = vmul.f32 %v2548, 0.03125
      %v2576 = vmul.f32 %v2550, 0.03125
      %v2577 = vmul.f32 %v2552, 0.03125
      %v2578 = vmul.f32 %v2554, 0.03125
      %v2579 = vmul.f32 %v2556, 0.03125
      %v2580 = vmul.f32 %v2558, 0.03125
      %v2581 = vmul.f32 %v2560, 0.03125
      %v2582 = vmul.f32 %v2562, 0.03125
      %v2583 = vmul.f32 %v2564, 0.03125
      %v2584 = vmul.f32 %v2566, 0.03125
      %v2585 = vmul.f32 %v2568, 0.03125
      %v2586 = vmul.f32 %v2570, 0.03125
      %v2587 = vadd.f32 %v2571, 1e-05
      %v2588 = vadd.f32 %v2572, 1e-05
      %v2589 = vadd.f32 %v2573, 1e-05
      %v2590 = vadd.f32 %v2574, 1e-05
      %v2591 = vadd.f32 %v2575, 1e-05
      %v2592 = vadd.f32 %v2576, 1e-05
      %v2593 = vadd.f32 %v2577, 1e-05
      %v2594 = vadd.f32 %v2578, 1e-05
      %v2595 = vadd.f32 %v2579, 1e-05
      %v2596 = vadd.f32 %v2580, 1e-05
      %v2597 = vadd.f32 %v2581, 1e-05
      %v2598 = vadd.f32 %v2582, 1e-05
      %v2599 = vadd.f32 %v2583, 1e-05
      %v2600 = vadd.f32 %v2584, 1e-05
      %v2601 = vadd.f32 %v2585, 1e-05
      %v2602 = vadd.f32 %v2586, 1e-05
      %v2603 = vrsqrt.pop %v2587
      %v2604 = vrsqrt.pop %v2588
      %v2605 = vrsqrt.pop %v2589
      %v2606 = vrsqrt.pop %v2590
      %v2607 = vrsqrt.pop %v2591
      %v2608 = vrsqrt.pop %v2592
      %v2609 = vrsqrt.pop %v2593
      %v2610 = vrsqrt.pop %v2594
      %v2611 = vrsqrt.pop %v2595
      %v2612 = vrsqrt.pop %v2596
      %v2613 = vrsqrt.pop %v2597
      %v2614 = vrsqrt.pop %v2598
      %v2615 = vrsqrt.pop %v2599
      %v2616 = vrsqrt.pop %v2600
      %v2617 = vrsqrt.pop %v2601
      %v2618 = vrsqrt.pop %v2602
      %v2619 = vmul.f32 %v2507, %v2603
      %v2620 = vmul.f32 %v2508, %v2604
      %v2621 = vmul.f32 %v2509, %v2605
      %v2622 = vmul.f32 %v2510, %v2606
      %v2623 = vmul.f32 %v2511, %v2607
      %v2624 = vmul.f32 %v2512, %v2608
      %v2625 = vmul.f32 %v2513, %v2609
      %v2626 = vmul.f32 %v2514, %v2610
      %v2627 = vmul.f32 %v2515, %v2611
      %v2628 = vmul.f32 %v2516, %v2612
      %v2629 = vmul.f32 %v2517, %v2613
      %v2630 = vmul.f32 %v2518, %v2614
      %v2631 = vmul.f32 %v2519, %v2615
      %v2632 = vmul.f32 %v2520, %v2616
      %v2633 = vmul.f32 %v2521, %v2617
      %v2634 = vmul.f32 %v2522, %v2618
      %v2635 = vld [vmem:[%s5] sm:$0x1]
      %v2637 = vlaneseq
      %v2638 = vshrl.u32 %v2637, 7
      %v2639 = vsub.s32 0, %v2638
      %v2640 = vrot.slane %v2635, %v2639
      %v2642 = vmul.f32 %v2619, %v2640
      %v2643 = vmul.f32 %v2620, %v2640
      %v2644 = vmul.f32 %v2621, %v2640
      %v2645 = vmul.f32 %v2622, %v2640
      %v2646 = vmul.f32 %v2623, %v2640
      %v2647 = vmul.f32 %v2624, %v2640
      %v2648 = vmul.f32 %v2625, %v2640
      %v2649 = vmul.f32 %v2626, %v2640
      %v2650 = vmul.f32 %v2627, %v2640
      %v2651 = vmul.f32 %v2628, %v2640
      %v2652 = vmul.f32 %v2629, %v2640
      %v2653 = vmul.f32 %v2630, %v2640
      %v2654 = vmul.f32 %v2631, %v2640
      %v2655 = vmul.f32 %v2632, %v2640
      %v2656 = vmul.f32 %v2633, %v2640
      %v2657 = vmul.f32 %v2634, %v2640
      %v2658 = vld [vmem:[%s6] sm:$0x1]
      %v2660 = vlaneseq
      %v2661 = vshrl.u32 %v2660, 7
      %v2662 = vsub.s32 0, %v2661
      %v2663 = vrot.slane %v2658, %v2662
      %v2665 = vadd.f32 %v2642, %v2663
      %v2666 = vadd.f32 %v2643, %v2663
      %v2667 = vadd.f32 %v2644, %v2663
      %v2668 = vadd.f32 %v2645, %v2663
      %v2669 = vadd.f32 %v2646, %v2663
      %v2670 = vadd.f32 %v2647, %v2663
      %v2671 = vadd.f32 %v2648, %v2663
      %v2672 = vadd.f32 %v2649, %v2663
      %v2673 = vadd.f32 %v2650, %v2663
      %v2674 = vadd.f32 %v2651, %v2663
      %v2675 = vadd.f32 %v2652, %v2663
      %v2676 = vadd.f32 %v2653, %v2663
      %v2677 = vadd.f32 %v2654, %v2663
      %v2678 = vadd.f32 %v2655, %v2663
      %v2679 = vadd.f32 %v2656, %v2663
      %v2680 = vadd.f32 %v2657, %v2663
      %v2681 = vmul.f32 %v2665, 0.5
      %v2682 = vmul.f32 %v2666, 0.5
      %v2683 = vmul.f32 %v2667, 0.5
      %v2684 = vmul.f32 %v2668, 0.5
      %v2685 = vmul.f32 %v2669, 0.5
      %v2686 = vmul.f32 %v2670, 0.5
      %v2687 = vmul.f32 %v2671, 0.5
      %v2688 = vmul.f32 %v2672, 0.5
      %v2689 = vmul.f32 %v2673, 0.5
      %v2690 = vmul.f32 %v2674, 0.5
      %v2691 = vmul.f32 %v2675, 0.5
      %v2692 = vmul.f32 %v2676, 0.5
      %v2693 = vmul.f32 %v2677, 0.5
      %v2694 = vmul.f32 %v2678, 0.5
      %v2695 = vmul.f32 %v2679, 0.5
      %v2696 = vmul.f32 %v2680, 0.5
      %v2697 = vmul.f32 %v2665, 0.044715
      %v2698 = vmul.f32 %v2666, 0.044715
      %v2699 = vmul.f32 %v2667, 0.044715
      %v2700 = vmul.f32 %v2668, 0.044715
      %v2701 = vmul.f32 %v2669, 0.044715
      %v2702 = vmul.f32 %v2670, 0.044715
      %v2703 = vmul.f32 %v2671, 0.044715
      %v2704 = vmul.f32 %v2672, 0.044715
      %v2705 = vmul.f32 %v2673, 0.044715
      %v2706 = vmul.f32 %v2674, 0.044715
      %v2707 = vmul.f32 %v2675, 0.044715
      %v2708 = vmul.f32 %v2676, 0.044715
      %v2709 = vmul.f32 %v2677, 0.044715
      %v2710 = vmul.f32 %v2678, 0.044715
      %v2711 = vmul.f32 %v2679, 0.044715
      %v2712 = vmul.f32 %v2680, 0.044715
      %v2713 = vmul.f32 %v2697, %v2665
      %v2714 = vmul.f32 %v2698, %v2666
      %v2715 = vmul.f32 %v2699, %v2667
      %v2716 = vmul.f32 %v2700, %v2668
      %v2717 = vmul.f32 %v2701, %v2669
      %v2718 = vmul.f32 %v2702, %v2670
      %v2719 = vmul.f32 %v2703, %v2671
      %v2720 = vmul.f32 %v2704, %v2672
      %v2721 = vmul.f32 %v2705, %v2673
      %v2722 = vmul.f32 %v2706, %v2674
      %v2723 = vmul.f32 %v2707, %v2675
      %v2724 = vmul.f32 %v2708, %v2676
      %v2725 = vmul.f32 %v2709, %v2677
      %v2726 = vmul.f32 %v2710, %v2678
      %v2727 = vmul.f32 %v2711, %v2679
      %v2728 = vmul.f32 %v2712, %v2680
      %v2729 = vmul.f32 %v2713, %v2665
      %v2730 = vmul.f32 %v2714, %v2666
      %v2731 = vmul.f32 %v2715, %v2667
      %v2732 = vmul.f32 %v2716, %v2668
      %v2733 = vmul.f32 %v2717, %v2669
      %v2734 = vmul.f32 %v2718, %v2670
      %v2735 = vmul.f32 %v2719, %v2671
      %v2736 = vmul.f32 %v2720, %v2672
      %v2737 = vmul.f32 %v2721, %v2673
      %v2738 = vmul.f32 %v2722, %v2674
      %v2739 = vmul.f32 %v2723, %v2675
      %v2740 = vmul.f32 %v2724, %v2676
      %v2741 = vmul.f32 %v2725, %v2677
      %v2742 = vmul.f32 %v2726, %v2678
      %v2743 = vmul.f32 %v2727, %v2679
      %v2744 = vmul.f32 %v2728, %v2680
      %v2745 = vadd.f32 %v2665, %v2729
      %v2746 = vadd.f32 %v2666, %v2730
      %v2747 = vadd.f32 %v2667, %v2731
      %v2748 = vadd.f32 %v2668, %v2732
      %v2749 = vadd.f32 %v2669, %v2733
      %v2750 = vadd.f32 %v2670, %v2734
      %v2751 = vadd.f32 %v2671, %v2735
      %v2752 = vadd.f32 %v2672, %v2736
      %v2753 = vadd.f32 %v2673, %v2737
      %v2754 = vadd.f32 %v2674, %v2738
      %v2755 = vadd.f32 %v2675, %v2739
      %v2756 = vadd.f32 %v2676, %v2740
      %v2757 = vadd.f32 %v2677, %v2741
      %v2758 = vadd.f32 %v2678, %v2742
      %v2759 = vadd.f32 %v2679, %v2743
      %v2760 = vadd.f32 %v2680, %v2744
      %v2761 = vmul.f32 %v2745, 0.7978846
      %v2762 = vmul.f32 %v2746, 0.7978846
      %v2763 = vmul.f32 %v2747, 0.7978846
      %v2764 = vmul.f32 %v2748, 0.7978846
      %v2765 = vmul.f32 %v2749, 0.7978846
      %v2766 = vmul.f32 %v2750, 0.7978846
      %v2767 = vmul.f32 %v2751, 0.7978846
      %v2768 = vmul.f32 %v2752, 0.7978846
      %v2769 = vmul.f32 %v2753, 0.7978846
      %v2770 = vmul.f32 %v2754, 0.7978846
      %v2771 = vmul.f32 %v2755, 0.7978846
      %v2772 = vmul.f32 %v2756, 0.7978846
      %v2773 = vmul.f32 %v2757, 0.7978846
      %v2774 = vmul.f32 %v2758, 0.7978846
      %v2775 = vmul.f32 %v2759, 0.7978846
      %v2776 = vmul.f32 %v2760, 0.7978846
      %v2777 = vtanh.pop %v2761
      %v2778 = vtanh.pop %v2762
      %v2779 = vtanh.pop %v2763
      %v2780 = vtanh.pop %v2764
      %v2781 = vtanh.pop %v2765
      %v2782 = vtanh.pop %v2766
      %v2783 = vtanh.pop %v2767
      %v2784 = vtanh.pop %v2768
      %v2785 = vtanh.pop %v2769
      %v2786 = vtanh.pop %v2770
      %v2787 = vtanh.pop %v2771
      %v2788 = vtanh.pop %v2772
      %v2789 = vtanh.pop %v2773
      %v2790 = vtanh.pop %v2774
      %v2791 = vtanh.pop %v2775
      %v2792 = vtanh.pop %v2776
      %v2793 = vadd.f32 %v2777, 1.0
      %v2794 = vadd.f32 %v2778, 1.0
      %v2795 = vadd.f32 %v2779, 1.0
      %v2796 = vadd.f32 %v2780, 1.0
      %v2797 = vadd.f32 %v2781, 1.0
      %v2798 = vadd.f32 %v2782, 1.0
      %v2799 = vadd.f32 %v2783, 1.0
      %v2800 = vadd.f32 %v2784, 1.0
      %v2801 = vadd.f32 %v2785, 1.0
      %v2802 = vadd.f32 %v2786, 1.0
      %v2803 = vadd.f32 %v2787, 1.0
      %v2804 = vadd.f32 %v2788, 1.0
      %v2805 = vadd.f32 %v2789, 1.0
      %v2806 = vadd.f32 %v2790, 1.0
      %v2807 = vadd.f32 %v2791, 1.0
      %v2808 = vadd.f32 %v2792, 1.0
      %v2809 = vmul.f32 %v2681, %v2793
      %v2810 = vmul.f32 %v2682, %v2794
      %v2811 = vmul.f32 %v2683, %v2795
      %v2812 = vmul.f32 %v2684, %v2796
      %v2813 = vmul.f32 %v2685, %v2797
      %v2814 = vmul.f32 %v2686, %v2798
      %v2815 = vmul.f32 %v2687, %v2799
      %v2816 = vmul.f32 %v2688, %v2800
      %v2817 = vmul.f32 %v2689, %v2801
      %v2818 = vmul.f32 %v2690, %v2802
      %v2819 = vmul.f32 %v2691, %v2803
      %v2820 = vmul.f32 %v2692, %v2804
      %v2821 = vmul.f32 %v2693, %v2805
      %v2822 = vmul.f32 %v2694, %v2806
      %v2823 = vmul.f32 %v2695, %v2807
      %v2824 = vmul.f32 %v2696, %v2808
      %v2841 = vrot.slane %v2809, 7
      %v2842 = vrot.slane %v2810, 7
      %v2843 = vrot.slane %v2811, 7
      %v2844 = vrot.slane %v2812, 7
      %v2845 = vrot.slane %v2813, 7
      %v2846 = vrot.slane %v2814, 7
      %v2847 = vrot.slane %v2815, 7
      %v2848 = vrot.slane %v2816, 7
      %v2849 = vrot.slane %v2817, 7
      %v2850 = vrot.slane %v2818, 7
      %v2851 = vrot.slane %v2819, 7
      %v2852 = vrot.slane %v2820, 7
      %v2853 = vrot.slane %v2821, 7
      %v2854 = vrot.slane %v2822, 7
      %v2855 = vrot.slane %v2823, 7
      %v2856 = vrot.slane %v2824, 7
      %v2873 = vadd.f32 %v1591, %v2841
      %v2874 = vadd.f32 %v1660, %v2841
      %v2875 = vadd.f32 %v1592, %v2842
      %v2876 = vadd.f32 %v1661, %v2842
      %v2877 = vadd.f32 %v1593, %v2843
      %v2878 = vadd.f32 %v1662, %v2843
      %v2879 = vadd.f32 %v1594, %v2844
      %v2880 = vadd.f32 %v1663, %v2844
      %v2881 = vadd.f32 %v1595, %v2845
      %v2882 = vadd.f32 %v1664, %v2845
      %v2883 = vadd.f32 %v1596, %v2846
      %v2884 = vadd.f32 %v1665, %v2846
      %v2885 = vadd.f32 %v1597, %v2847
      %v2886 = vadd.f32 %v1666, %v2847
      %v2887 = vadd.f32 %v1598, %v2848
      %v2888 = vadd.f32 %v1667, %v2848
      %v2889 = vadd.f32 %v1599, %v2849
      %v2890 = vadd.f32 %v1668, %v2849
      %v2891 = vadd.f32 %v1600, %v2850
      %v2892 = vadd.f32 %v1669, %v2850
      %v2893 = vadd.f32 %v1601, %v2851
      %v2894 = vadd.f32 %v1670, %v2851
      %v2895 = vadd.f32 %v1602, %v2852
      %v2896 = vadd.f32 %v1671, %v2852
      %v2897 = vadd.f32 %v1603, %v2853
      %v2898 = vadd.f32 %v1672, %v2853
      %v2899 = vadd.f32 %v1604, %v2854
      %v2900 = vadd.f32 %v1673, %v2854
      %v2901 = vadd.f32 %v1605, %v2855
      %v2902 = vadd.f32 %v1674, %v2855
      %v2903 = vadd.f32 %v1606, %v2856
      %v2904 = vadd.f32 %v1675, %v2856
      %v2905 = vpack.c.bf16 %v2874, %v2873
      %v2906 = vpack.c.bf16 %v2876, %v2875
      %v2907 = vpack.c.bf16 %v2878, %v2877
      %v2908 = vpack.c.bf16 %v2880, %v2879
      %v2909 = vpack.c.bf16 %v2882, %v2881
      %v2910 = vpack.c.bf16 %v2884, %v2883
      %v2911 = vpack.c.bf16 %v2886, %v2885
      %v2912 = vpack.c.bf16 %v2888, %v2887
      %v2913 = vpack.c.bf16 %v2890, %v2889
      %v2914 = vpack.c.bf16 %v2892, %v2891
      %v2915 = vpack.c.bf16 %v2894, %v2893
      %v2916 = vpack.c.bf16 %v2896, %v2895
      %v2917 = vpack.c.bf16 %v2898, %v2897
      %v2918 = vpack.c.bf16 %v2900, %v2899
      %v2919 = vpack.c.bf16 %v2902, %v2901
      %v2920 = vpack.c.bf16 %v2904, %v2903
      %v2937 = vunpack.c.l.b16 %v2905
      %v2938 = vunpack.c.h.b16 %v2905
      %v2939 = vunpack.c.l.b16 %v2906
      %v2940 = vunpack.c.h.b16 %v2906
      %v2941 = vunpack.c.l.b16 %v2907
      %v2942 = vunpack.c.h.b16 %v2907
      %v2943 = vunpack.c.l.b16 %v2908
      %v2944 = vunpack.c.h.b16 %v2908
      %v2945 = vunpack.c.l.b16 %v2909
      %v2946 = vunpack.c.h.b16 %v2909
      %v2947 = vunpack.c.l.b16 %v2910
      %v2948 = vunpack.c.h.b16 %v2910
      %v2949 = vunpack.c.l.b16 %v2911
      %v2950 = vunpack.c.h.b16 %v2911
      %v2951 = vunpack.c.l.b16 %v2912
      %v2952 = vunpack.c.h.b16 %v2912
      %v2953 = vunpack.c.l.b16 %v2913
      %v2954 = vunpack.c.h.b16 %v2913
      %v2955 = vunpack.c.l.b16 %v2914
      %v2956 = vunpack.c.h.b16 %v2914
      %v2957 = vunpack.c.l.b16 %v2915
      %v2958 = vunpack.c.h.b16 %v2915
      %v2959 = vunpack.c.l.b16 %v2916
      %v2960 = vunpack.c.h.b16 %v2916
      %v2961 = vunpack.c.l.b16 %v2917
      %v2962 = vunpack.c.h.b16 %v2917
      %v2963 = vunpack.c.l.b16 %v2918
      %v2964 = vunpack.c.h.b16 %v2918
      %v2965 = vunpack.c.l.b16 %v2919
      %v2966 = vunpack.c.h.b16 %v2919
      %v2967 = vunpack.c.l.b16 %v2920
      %v2968 = vunpack.c.h.b16 %v2920
      %v2969 = vpack.c.b16 %v2937, %v2937
      %v2970 = vpack.c.b16 %v2938, %v2938
      %v2971 = vpack.c.b16 %v2939, %v2939
      %v2972 = vpack.c.b16 %v2940, %v2940
      %v2973 = vpack.c.b16 %v2941, %v2941
      %v2974 = vpack.c.b16 %v2942, %v2942
      %v2975 = vpack.c.b16 %v2943, %v2943
      %v2976 = vpack.c.b16 %v2944, %v2944
      %v2977 = vpack.c.b16 %v2945, %v2945
      %v2978 = vpack.c.b16 %v2946, %v2946
      %v2979 = vpack.c.b16 %v2947, %v2947
      %v2980 = vpack.c.b16 %v2948, %v2948
      %v2981 = vpack.c.b16 %v2949, %v2949
      %v2982 = vpack.c.b16 %v2950, %v2950
      %v2983 = vpack.c.b16 %v2951, %v2951
      %v2984 = vpack.c.b16 %v2952, %v2952
      %v2985 = vpack.c.b16 %v2953, %v2953
      %v2986 = vpack.c.b16 %v2954, %v2954
      %v2987 = vpack.c.b16 %v2955, %v2955
      %v2988 = vpack.c.b16 %v2956, %v2956
      %v2989 = vpack.c.b16 %v2957, %v2957
      %v2990 = vpack.c.b16 %v2958, %v2958
      %v2991 = vpack.c.b16 %v2959, %v2959
      %v2992 = vpack.c.b16 %v2960, %v2960
      %v2993 = vpack.c.b16 %v2961, %v2961
      %v2994 = vpack.c.b16 %v2962, %v2962
      %v2995 = vpack.c.b16 %v2963, %v2963
      %v2996 = vpack.c.b16 %v2964, %v2964
      %v2997 = vpack.c.b16 %v2965, %v2965
      %v2998 = vpack.c.b16 %v2966, %v2966
      %v2999 = vpack.c.b16 %v2967, %v2967
      %v3000 = vpack.c.b16 %v2968, %v2968
      %vm3001 = vsmask.f32 3328
      %vm3002 = vsmask.f32 7440
      %vm3003 = vmor %vm3001, %vm3002
      %v3005 = vshrl.u32 %v2969, 16
      %v3007 = vrot.slane %v3005, 4
      %v3008 = vshll.u32 %v2969, 16
      %v3010 = vrot.slane %v3008, 5
      %v3011 = vor.u32 %v3007, %v3010
      %v3012 = vrot.slane %v3011, 4
      %v3014 = vshll.u32 %v2970, 16
      %v3016 = vrot.slane %v3014, 5
      %v3017 = vsel %vm3003, %v3012, %v3016
      %v3019 = vshrl.u32 %v2971, 16
      %v3021 = vrot.slane %v3019, 4
      %v3022 = vshll.u32 %v2971, 16
      %v3024 = vrot.slane %v3022, 5
      %v3025 = vor.u32 %v3021, %v3024
      %v3026 = vrot.slane %v3025, 4
      %v3028 = vshll.u32 %v2972, 16
      %v3030 = vrot.slane %v3028, 5
      %v3031 = vsel %vm3003, %v3026, %v3030
      %v3033 = vshrl.u32 %v2973, 16
      %v3035 = vrot.slane %v3033, 4
      %v3036 = vshll.u32 %v2973, 16
      %v3038 = vrot.slane %v3036, 5
      %v3039 = vor.u32 %v3035, %v3038
      %v3040 = vrot.slane %v3039, 4
      %v3042 = vshll.u32 %v2974, 16
      %v3044 = vrot.slane %v3042, 5
      %v3045 = vsel %vm3003, %v3040, %v3044
      %v3047 = vshrl.u32 %v2975, 16
      %v3049 = vrot.slane %v3047, 4
      %v3050 = vshll.u32 %v2975, 16
      %v3052 = vrot.slane %v3050, 5
      %v3053 = vor.u32 %v3049, %v3052
      %v3054 = vrot.slane %v3053, 4
      %v3056 = vshll.u32 %v2976, 16
      %v3058 = vrot.slane %v3056, 5
      %v3059 = vsel %vm3003, %v3054, %v3058
      %v3061 = vshrl.u32 %v2977, 16
      %v3063 = vrot.slane %v3061, 4
      %v3064 = vshll.u32 %v2977, 16
      %v3066 = vrot.slane %v3064, 5
      %v3067 = vor.u32 %v3063, %v3066
      %v3068 = vrot.slane %v3067, 4
      %v3070 = vshll.u32 %v2978, 16
      %v3072 = vrot.slane %v3070, 5
      %v3073 = vsel %vm3003, %v3068, %v3072
      %v3075 = vshrl.u32 %v2979, 16
      %v3077 = vrot.slane %v3075, 4
      %v3078 = vshll.u32 %v2979, 16
      %v3080 = vrot.slane %v3078, 5
      %v3081 = vor.u32 %v3077, %v3080
      %v3082 = vrot.slane %v3081, 4
      %v3084 = vshll.u32 %v2980, 16
      %v3086 = vrot.slane %v3084, 5
      %v3087 = vsel %vm3003, %v3082, %v3086
      %v3089 = vshrl.u32 %v2981, 16
      %v3091 = vrot.slane %v3089, 4
      %v3092 = vshll.u32 %v2981, 16
      %v3094 = vrot.slane %v3092, 5
      %v3095 = vor.u32 %v3091, %v3094
      %v3096 = vrot.slane %v3095, 4
      %v3098 = vshll.u32 %v2982, 16
      %v3100 = vrot.slane %v3098, 5
      %v3101 = vsel %vm3003, %v3096, %v3100
      %v3103 = vshrl.u32 %v2983, 16
      %v3105 = vrot.slane %v3103, 4
      %v3106 = vshll.u32 %v2983, 16
      %v3108 = vrot.slane %v3106, 5
      %v3109 = vor.u32 %v3105, %v3108
      %v3110 = vrot.slane %v3109, 4
      %v3112 = vshll.u32 %v2984, 16
      %v3114 = vrot.slane %v3112, 5
      %v3115 = vsel %vm3003, %v3110, %v3114
      %v3117 = vshrl.u32 %v2985, 16
      %v3119 = vrot.slane %v3117, 4
      %v3120 = vshll.u32 %v2985, 16
      %v3122 = vrot.slane %v3120, 5
      %v3123 = vor.u32 %v3119, %v3122
      %v3124 = vrot.slane %v3123, 4
      %v3126 = vshll.u32 %v2986, 16
      %v3128 = vrot.slane %v3126, 5
      %v3129 = vsel %vm3003, %v3124, %v3128
      %v3131 = vshrl.u32 %v2987, 16
      %v3133 = vrot.slane %v3131, 4
      %v3134 = vshll.u32 %v2987, 16
      %v3136 = vrot.slane %v3134, 5
      %v3137 = vor.u32 %v3133, %v3136
      %v3138 = vrot.slane %v3137, 4
      %v3140 = vshll.u32 %v2988, 16
      %v3142 = vrot.slane %v3140, 5
      %v3143 = vsel %vm3003, %v3138, %v3142
      %v3145 = vshrl.u32 %v2989, 16
      %v3147 = vrot.slane %v3145, 4
      %v3148 = vshll.u32 %v2989, 16
      %v3150 = vrot.slane %v3148, 5
      %v3151 = vor.u32 %v3147, %v3150
      %v3152 = vrot.slane %v3151, 4
      %v3154 = vshll.u32 %v2990, 16
      %v3156 = vrot.slane %v3154, 5
      %v3157 = vsel %vm3003, %v3152, %v3156
      %v3159 = vshrl.u32 %v2991, 16
      %v3161 = vrot.slane %v3159, 4
      %v3162 = vshll.u32 %v2991, 16
      %v3164 = vrot.slane %v3162, 5
      %v3165 = vor.u32 %v3161, %v3164
      %v3166 = vrot.slane %v3165, 4
      %v3168 = vshll.u32 %v2992, 16
      %v3170 = vrot.slane %v3168, 5
      %v3171 = vsel %vm3003, %v3166, %v3170
      %v3173 = vshrl.u32 %v2993, 16
      %v3175 = vrot.slane %v3173, 4
      %v3176 = vshll.u32 %v2993, 16
      %v3178 = vrot.slane %v3176, 5
      %v3179 = vor.u32 %v3175, %v3178
      %v3180 = vrot.slane %v3179, 4
      %v3182 = vshll.u32 %v2994, 16
      %v3184 = vrot.slane %v3182, 5
      %v3185 = vsel %vm3003, %v3180, %v3184
      %v3187 = vshrl.u32 %v2995, 16
      %v3189 = vrot.slane %v3187, 4
      %v3190 = vshll.u32 %v2995, 16
      %v3192 = vrot.slane %v3190, 5
      %v3193 = vor.u32 %v3189, %v3192
      %v3194 = vrot.slane %v3193, 4
      %v3196 = vshll.u32 %v2996, 16
      %v3198 = vrot.slane %v3196, 5
      %v3199 = vsel %vm3003, %v3194, %v3198
      %v3201 = vshrl.u32 %v2997, 16
      %v3203 = vrot.slane %v3201, 4
      %v3204 = vshll.u32 %v2997, 16
      %v3206 = vrot.slane %v3204, 5
      %v3207 = vor.u32 %v3203, %v3206
      %v3208 = vrot.slane %v3207, 4
      %v3210 = vshll.u32 %v2998, 16
      %v3212 = vrot.slane %v3210, 5
      %v3213 = vsel %vm3003, %v3208, %v3212
      %v3215 = vshrl.u32 %v2999, 16
      %v3217 = vrot.slane %v3215, 4
      %v3218 = vshll.u32 %v2999, 16
      %v3220 = vrot.slane %v3218, 5
      %v3221 = vor.u32 %v3217, %v3220
      %v3222 = vrot.slane %v3221, 4
      %v3224 = vshll.u32 %v3000, 16
      %v3226 = vrot.slane %v3224, 5
      %v3227 = vsel %vm3003, %v3222, %v3226
      %v3228 = vld [vmem:[%s7] sm:$0xf]
      %v3229 = vld [vmem:[%s7 + $0x4] sm:$0xf]
      %v3230 = vld [vmem:[%s7 + $0x8] sm:$0xf]
      %v3231 = vld [vmem:[%s7 + $0xc] sm:$0xf]
      %v3232 = vld [vmem:[%s7 + $0x10] sm:$0xf]
      %v3233 = vld [vmem:[%s7 + $0x14] sm:$0xf]
      %v3234 = vld [vmem:[%s7 + $0x18] sm:$0xf]
      %v3235 = vld [vmem:[%s7 + $0x1c] sm:$0xf]
      %v3236 = vld [vmem:[%s7 + $0x20] sm:$0xf]
      %v3237 = vld [vmem:[%s7 + $0x24] sm:$0xf]
      %v3238 = vld [vmem:[%s7 + $0x28] sm:$0xf]
      %v3239 = vld [vmem:[%s7 + $0x2c] sm:$0xf]
      %v3240 = vld [vmem:[%s7 + $0x30] sm:$0xf]
      %v3241 = vld [vmem:[%s7 + $0x34] sm:$0xf]
      %v3242 = vld [vmem:[%s7 + $0x38] sm:$0xf]
      %v3243 = vld [vmem:[%s7 + $0x3c] sm:$0xf]
      %v3244 = vld [vmem:[%s8] sm:$0x1]
      %v3246 = vlaneseq
      %v3247 = vshrl.u32 %v3246, 7
      %v3248 = vsub.s32 0, %v3247
      %v3249 = vrot.slane %v3244, %v3248
      %v3251 = vunpack.c.l.b16 %v3017
      %v3252 = vunpack.c.l.b16 %v3031
      %v3253 = vunpack.c.l.b16 %v3045
      %v3254 = vunpack.c.l.b16 %v3059
      %v3255 = vunpack.c.l.b16 %v3073
      %v3256 = vunpack.c.l.b16 %v3087
      %v3257 = vunpack.c.l.b16 %v3101
      %v3258 = vunpack.c.l.b16 %v3115
      %v3259 = vunpack.c.l.b16 %v3129
      %v3260 = vunpack.c.l.b16 %v3143
      %v3261 = vunpack.c.l.b16 %v3157
      %v3262 = vunpack.c.l.b16 %v3171
      %v3263 = vunpack.c.l.b16 %v3185
      %v3264 = vunpack.c.l.b16 %v3199
      %v3265 = vunpack.c.l.b16 %v3213
      %v3266 = vunpack.c.l.b16 %v3227
      %v3267 = vpack.c.b16 %v3252, %v3251
      %v3268 = vpack.c.b16 %v3254, %v3253
      %v3269 = vpack.c.b16 %v3256, %v3255
      %v3270 = vpack.c.b16 %v3258, %v3257
      %v3271 = vpack.c.b16 %v3260, %v3259
      %v3272 = vpack.c.b16 %v3262, %v3261
      %v3273 = vpack.c.b16 %v3264, %v3263
      %v3274 = vpack.c.b16 %v3266, %v3265
      %v3299 = vunpack.c.l.b16 %v3228
      %v3300 = vunpack.c.l.b16 %v3229
      %v3301 = vunpack.c.l.b16 %v3230
      %v3302 = vunpack.c.l.b16 %v3231
      %v3303 = vunpack.c.l.b16 %v3232
      %v3304 = vunpack.c.l.b16 %v3233
      %v3305 = vunpack.c.l.b16 %v3234
      %v3306 = vunpack.c.l.b16 %v3235
      %v3307 = vunpack.c.l.b16 %v3236
      %v3308 = vunpack.c.l.b16 %v3237
      %v3309 = vunpack.c.l.b16 %v3238
      %v3310 = vunpack.c.l.b16 %v3239
      %v3311 = vunpack.c.l.b16 %v3240
      %v3312 = vunpack.c.l.b16 %v3241
      %v3313 = vunpack.c.l.b16 %v3242
      %v3314 = vunpack.c.l.b16 %v3243
      %v3315 = vpack.c.b16 %v3300, %v3299
      %v3316 = vpack.c.b16 %v3302, %v3301
      %v3317 = vpack.c.b16 %v3304, %v3303
      %v3318 = vpack.c.b16 %v3306, %v3305
      %v3319 = vpack.c.b16 %v3308, %v3307
      %v3320 = vpack.c.b16 %v3310, %v3309
      %v3321 = vpack.c.b16 %v3312, %v3311
      %v3322 = vpack.c.b16 %v3314, %v3313
      %3331 = vmatprep.subr.bf16.mxu0 0
      %3332 = vmatpush1.bf16.msra.mxu0 %v3322
      %3333 = vmatprep.subr.bf16.mxu0 0
      %3334 = vmatpush1.bf16.msra.mxu0 %v3321
      %3335 = vmatprep.subr.bf16.mxu0 0
      %3336 = vmatpush1.bf16.msra.mxu0 %v3320
      %3337 = vmatprep.subr.bf16.mxu0 0
      %3338 = vmatpush1.bf16.msra.mxu0 %v3319
      %3339 = vmatprep.subr.bf16.mxu0 0
      %3340 = vmatpush1.bf16.msra.mxu0 %v3318
      %3341 = vmatprep.subr.bf16.mxu0 0
      %3342 = vmatpush1.bf16.msra.mxu0 %v3317
      %3343 = vmatprep.subr.bf16.mxu0 0
      %3344 = vmatpush1.bf16.msra.mxu0 %v3316
      %3345 = vmatprep.subr.bf16.mxu0 0
      %3346 = vmatpush1.bf16.msra.mxu0 %v3315
      %3347 = vmatprep.subr.bf16.mxu0 0
      %3348 = vmatpush2.bf16.msra.mxu0 0
      %3349 = vmatprep.subr.bf16.mxu0 0
      %3350 = vmatpush2.bf16.msra.mxu0 0
      %3351 = vmatprep.subr.bf16.mxu0 0
      %3352 = vmatpush2.bf16.msra.mxu0 0
      %3353 = vmatprep.subr.bf16.mxu0 0
      %3354 = vmatpush2.bf16.msra.mxu0 0
      %3355 = vmatprep.subr.bf16.mxu0 0
      %3356 = vmatpush2.bf16.msra.mxu0 0
      %3357 = vmatprep.subr.bf16.mxu0 0
      %3358 = vmatpush2.bf16.msra.mxu0 0
      %3359 = vmatprep.subr.bf16.mxu0 0
      %3360 = vmatpush2.bf16.msra.mxu0 0
      %3361 = vmatprep.subr.bf16.mxu0 0
      %3362 = vmatpush2.bf16.msra.mxu0 0
      %3363 = vmatprep.mubr.bf16.mxu0 0
      %3364 = vmatmul.mubr.bf16.gmra.mxu0 %v3267
      %v3365 = vpop.f32.mrf.mxu0
      %v3366 = vadd.f32 %v3249, %v3365
      %v3367 = vpop.f32.mrf.mxu0
      %v3368 = vpop.f32.mrf.mxu0
      %v3369 = vadd.f32 %v3249, %v3368
      %v3370 = vpop.f32.mrf.mxu0
      %3371 = vmatprep.mubr.bf16.mxu0 0
      %3372 = vmatmul.mubr.bf16.gmra.mxu0 %v3268
      %v3373 = vpop.f32.mrf.mxu0
      %v3374 = vadd.f32 %v3249, %v3373
      %v3375 = vpop.f32.mrf.mxu0
      %v3376 = vpop.f32.mrf.mxu0
      %v3377 = vadd.f32 %v3249, %v3376
      %v3378 = vpop.f32.mrf.mxu0
      %3379 = vmatprep.mubr.bf16.mxu0 0
      %3380 = vmatmul.mubr.bf16.gmra.mxu0 %v3269
      %v3381 = vpop.f32.mrf.mxu0
      %v3382 = vadd.f32 %v3249, %v3381
      %v3383 = vpop.f32.mrf.mxu0
      %v3384 = vpop.f32.mrf.mxu0
      %v3385 = vadd.f32 %v3249, %v3384
      %v3386 = vpop.f32.mrf.mxu0
      %3387 = vmatprep.mubr.bf16.mxu0 0
      %3388 = vmatmul.mubr.bf16.gmra.mxu0 %v3270
      %v3389 = vpop.f32.mrf.mxu0
      %v3390 = vadd.f32 %v3249, %v3389
      %v3391 = vpop.f32.mrf.mxu0
      %v3392 = vpop.f32.mrf.mxu0
      %v3393 = vadd.f32 %v3249, %v3392
      %v3394 = vpop.f32.mrf.mxu0
      %3395 = vmatprep.mubr.bf16.mxu0 0
      %3396 = vmatmul.mubr.bf16.gmra.mxu0 %v3271
      %v3397 = vpop.f32.mrf.mxu0
      %v3398 = vadd.f32 %v3249, %v3397
      %v3399 = vpop.f32.mrf.mxu0
      %v3400 = vpop.f32.mrf.mxu0
      %v3401 = vadd.f32 %v3249, %v3400
      %v3402 = vpop.f32.mrf.mxu0
      %3403 = vmatprep.mubr.bf16.mxu0 0
      %3404 = vmatmul.mubr.bf16.gmra.mxu0 %v3272
      %v3405 = vpop.f32.mrf.mxu0
      %v3406 = vadd.f32 %v3249, %v3405
      %v3407 = vpop.f32.mrf.mxu0
      %v3408 = vpop.f32.mrf.mxu0
      %v3409 = vadd.f32 %v3249, %v3408
      %v3410 = vpop.f32.mrf.mxu0
      %3411 = vmatprep.mubr.bf16.mxu0 0
      %3412 = vmatmul.mubr.bf16.gmra.mxu0 %v3273
      %v3413 = vpop.f32.mrf.mxu0
      %v3414 = vadd.f32 %v3249, %v3413
      %v3415 = vpop.f32.mrf.mxu0
      %v3416 = vpop.f32.mrf.mxu0
      %v3417 = vadd.f32 %v3249, %v3416
      %v3418 = vpop.f32.mrf.mxu0
      %3419 = vmatprep.mubr.bf16.mxu0 0
      %3420 = vmatmul.mubr.bf16.gmra.mxu0 %v3274
      %v3421 = vpop.f32.mrf.mxu0
      %v3422 = vadd.f32 %v3249, %v3421
      %v3423 = vpop.f32.mrf.mxu0
      %v3424 = vpop.f32.mrf.mxu0
      %v3425 = vadd.f32 %v3249, %v3424
      %v3426 = vpop.f32.mrf.mxu0
      %3427 = vdwg.mxu0
      %3428 = vst.msk [vmem:[%s339] sm:$0xff] %vm413, %v3366
      %3429 = vst.msk [vmem:[%s339 + $0x8] sm:$0xff] %vm413, %v3369
      %3430 = vst.msk [vmem:[%s339 + $0x10] sm:$0xff] %vm413, %v3374
      %3431 = vst.msk [vmem:[%s339 + $0x18] sm:$0xff] %vm413, %v3377
      %3432 = vst.msk [vmem:[%s339 + $0x20] sm:$0xff] %vm413, %v3382
      %3433 = vst.msk [vmem:[%s339 + $0x28] sm:$0xff] %vm413, %v3385
      %3434 = vst.msk [vmem:[%s339 + $0x30] sm:$0xff] %vm413, %v3390
      %3435 = vst.msk [vmem:[%s339 + $0x38] sm:$0xff] %vm413, %v3393
      %3436 = vst.msk [vmem:[%s339 + $0x40] sm:$0xff] %vm413, %v3398
      %3437 = vst.msk [vmem:[%s339 + $0x48] sm:$0xff] %vm413, %v3401
      %3438 = vst.msk [vmem:[%s339 + $0x50] sm:$0xff] %vm413, %v3406
      %3439 = vst.msk [vmem:[%s339 + $0x58] sm:$0xff] %vm413, %v3409
      %3440 = vst.msk [vmem:[%s339 + $0x60] sm:$0xff] %vm413, %v3414
      %3441 = vst.msk [vmem:[%s339 + $0x68] sm:$0xff] %vm413, %v3417
      %3442 = vst.msk [vmem:[%s339 + $0x70] sm:$0xff] %vm413, %v3422
      %3443 = vst.msk [vmem:[%s339 + $0x78] sm:$0xff] %vm413, %v3425
      %s3444 = smul.u32 2, %s20
      %p3445 = scmp.lt.s32.totalorder %s3444, 3
      %s3446 = scalar_select %p3445, %s3444, 3
      %s3447 = smul.addr %s3446, 8
      %s3448 = smul.addr %s3447, 8
      %s3449 = scalar_lea.vmem %s9, %s3448
      // Predicated region
      $region57: #{tpu_custom_call.1} parent=55 // pred_check
        %p3450 = pneg %p232
      $region58: #{tpu_custom_call.1} parent=55 // pred_check_branch
        %3452 = sbr.rel (%p3450) target = $region60
      $region59: #{tpu_custom_call.1} parent=55 // pred_region
        %s3453 = smul.u32 2, %s20
      $region60: #{tpu_custom_call.1} parent=55 // pred_fallthru
        _
    $region56: #{tpu_custom_call.1} parent=5 // pred_fallthru
      _
    %p3454 = scmp.le.s32.totalorder 2, %s15
    // Predicated region
    $region61: #{tpu_custom_call.1} parent=5 // pred_check
      %p3455 = pneg %p3454
    $region62: #{tpu_custom_call.1} parent=5 // pred_check_branch
      %3457 = sbr.rel (%p3455) target = $region64
    $region63: #{tpu_custom_call.1} parent=5 // pred_region
      %s3458 = ssub.s32 %s15, 2
      // Predicated region
      $region65: #{tpu_custom_call.1} parent=63 // pred_check
        %p3459 = pneg %p238
      $region66: #{tpu_custom_call.1} parent=63 // pred_check_branch
        %3461 = sbr.rel (%p3459) target = $region68
      $region67: #{tpu_custom_call.1} parent=63 // pred_region
        %s3462 = smul.u32 2, %s21
        %p3463 = scmp.lt.s32.totalorder %s3462, 3
        %s3464 = scalar_select %p3463, %s3462, 3
        %s3465 = smul.addr %s3464, 8
        %s3466 = smul.addr %s3465, 8
        %s3467 = scalar_lea.vmem %s9, %s3466
      $region68: #{tpu_custom_call.1} parent=63 // pred_fallthru
        _
    $region64: #{tpu_custom_call.1} parent=5 // pred_fallthru
      _
  $region6: #{tpu_custom_call.1} parent=0 // loop_footer
    %s19 = sadd.s32 1, %s15
  $region7: #{tpu_custom_call.1} parent=0 // loop_footer_branch
    %14 = sbr.rel target = $region3
  $region8: #{tpu_custom_call.1} parent=0 // loop_exit
    _

</llo_original>
